<compile_context>
chip_gen: v7x
topology: tpu7x:2x2x1
jax: 0.10.0
libtpu: 0.0.40
codegen_flags: <defaults>
</compile_context>

<pallas_src>
import functools
import math

import numpy as np
import jax
import jax.numpy as jnp
from jax.experimental import pallas as pl
from jax.experimental.pallas import tpu as pltpu


def _mha_kernel(q_ref, k_ref, v_ref,
                wq_ref, bq_ref, wk_ref, bk_ref, wv_ref, bv_ref,
                wo_ref, bo_ref, g_ref, beta_ref,
                out_ref, *maybe_pattn,
                n_heads, d_k, tb, tq, nk, return_attn):
    """Fused MHA forward for one (batch-tile, query-tile) grid step."""
    pattn_ref = maybe_pattn[0] if return_attn else None
    H, dk = n_heads, d_k
    D = q_ref.shape[-1]
    Nq = tb * tq
    Nk = tb * nk

    # Flatten the batch tile for the projections (taller MXU M dim); keep an
    # f32 copy of q for the residual/LayerNorm path.
    q_f32 = q_ref[...].reshape(Nq, D)                     # f32
    q_bf = q_f32.astype(jnp.bfloat16)
    k_bf = k_ref[...].reshape(Nk, D)                      # bf16 (cast in wrapper)
    v_bf = v_ref[...].reshape(Nk, D)

    # Full-width projections: (rows, D) @ (D, D), bf16 operands, f32 accumulate.
    # 1/sqrt(dk) is already folded into wq/bq.
    Q = jnp.dot(q_bf, wq_ref[...], preferred_element_type=jnp.float32) + bq_ref[...]
    K = jnp.dot(k_bf, wk_ref[...], preferred_element_type=jnp.float32) + bk_ref[...]
    V = jnp.dot(v_bf, wv_ref[...], preferred_element_type=jnp.float32) + bv_ref[...]

    def split_heads(x, rows):
        # (tb*rows, D) -> (tb*H, rows, dk): heads become part of the batch dim.
        xb = x.reshape(tb, rows, D)
        xh = jnp.stack([xb[:, :, h * dk:(h + 1) * dk] for h in range(H)], axis=1)
        return xh.reshape(tb * H, rows, dk).astype(jnp.bfloat16)

    Qh = split_heads(Q, tq)    # (tb*H, tq, dk)
    Kh = split_heads(K, nk)    # (tb*H, nk, dk)
    Vh = split_heads(V, nk)    # (tb*H, nk, dk)

    # Attention core: single batched einsum over the merged (tb*H) batch dim.
    scores = jnp.einsum("bqe,bke->bqk", Qh, Kh,
                        preferred_element_type=jnp.float32)        # (tb*H, tq, nk)
    m = jnp.max(scores, axis=-1, keepdims=True)
    e = jnp.exp(scores - m)
    p = e / jnp.sum(e, axis=-1, keepdims=True)   # exact: p_attn is user-visible
    if return_attn:
        pattn_ref[...] = p.reshape(tb, H, tq, nk).astype(pattn_ref.dtype)

    ctx = jnp.einsum("bqk,bke->bqe", p.astype(jnp.bfloat16), Vh,
                     preferred_element_type=jnp.float32)           # (tb*H, tq, dk)

    # Merge heads (one lane concat) and run a single full-K output projection.
    ctx4 = ctx.reshape(tb, H, tq, dk)
    ctx_cat = jnp.concatenate([ctx4[:, h] for h in range(H)], axis=-1)   # (tb, tq, D)
    ctx2d = ctx_cat.reshape(Nq, D).astype(jnp.bfloat16)
    o = jnp.dot(ctx2d, wo_ref[...], preferred_element_type=jnp.float32) + bo_ref[...]

    # dropout (identity in eval) + residual + LayerNorm, all f32.
    y = q_f32 + o
    mean = jnp.mean(y, axis=-1, keepdims=True)
    var = jnp.mean(jnp.square(y - mean), axis=-1, keepdims=True)
    y = (y - mean) * jax.lax.rsqrt(var + 1e-5)
    y = y * g_ref[...] + beta_ref[...]
    out_ref[...] = y.reshape(tb, tq, D).astype(out_ref.dtype)      # one full-slab store


def _tpu_vmem_capacity_bytes():
    try:
        return int(pltpu.get_tpu_info().vmem_capacity_bytes)
    except Exception:
        return 128 * 1024 * 1024   # v5e/v6e default


def _pick_q_tile(nq, cap=256):
    """Largest divisor of nq that is a multiple of 16 and <= cap (full nq if none)."""
    if nq <= cap:
        return nq
    best = None
    for t in range(16, cap + 1, 16):
        if nq % t == 0:
            best = t
    return best if best is not None else nq


def _estimate_vmem_bytes(tb, tq, nk, D, H, return_attn):
    """Rough per-grid-step VMEM working set (pipeline blocks + live intermediates)."""
    blk = tb * tq * D * 4            # q block (f32)
    blk += 2 * tb * nk * D * 2       # k, v blocks (bf16)
    blk += tb * tq * D * 4           # out block (f32)
    if return_attn:
        blk += tb * H * tq * nk * 2  # p_attn block (bf16)
    total = 2 * blk                  # double-buffered pipeline blocks
    total += 4 * D * D * 2 + 6 * D * 4           # weights (bf16) + biases/ln (f32)
    total += 3 * tb * H * tq * nk * 4            # scores / exp / p (f32)
    total += 3 * tb * max(tq, nk) * D * (4 + 2)  # Q/K/V f32 + bf16 head copies
    return total


def _pick_batch_tile(B, nq, nk, tq, D, H, return_attn, budget, prefer_multi_step):
    feasible = [t for t in range(1, B + 1)
                if B % t == 0 and _estimate_vmem_bytes(t, tq, nk, D, H, return_attn) <= budget]
    if not feasible:
        return 1
    tb = max(feasible)
    if prefer_multi_step and (B // tb) * (nq // tq) < 2:
        smaller = [t for t in feasible if B // t >= 2]
        if smaller:
            tb = max(smaller)
    return tb


def multi_head_attention(queries, keys, values, params, *, n_heads,
                         return_attn=True, batch_tile=None, q_tile=None,
                         attn_dtype=jnp.bfloat16):
    """queries/keys/values: (B, seq, D). Weights stored as x @ W; biases (1, D)."""
    B, nq, D = queries.shape
    nk = keys.shape[1]
    assert D % n_heads == 0
    H = n_heads
    dk = D // H

    vmem_cap = _tpu_vmem_capacity_bytes()
    # ~48 MiB budget on v7x (64 MiB VMEM), ~96 MiB on v5e/v6e (128 MiB VMEM).
    vmem_limit = min(vmem_cap * 3 // 4, 96 * 1024 * 1024)
    # Only 64-MiB-VMEM (v7x-class) parts have 2 TensorCores per chip; only there is
    # it worth shrinking the batch tile to keep the grid extent >= 2.
    prefer_multi_step = vmem_cap <= 64 * 1024 * 1024

    tq = q_tile if q_tile is not None else _pick_q_tile(nq)
    assert nq % tq == 0, "query tile must divide nq"
    tb = batch_tile if batch_tile is not None else _pick_batch_tile(
        B, nq, nk, tq, D, H, return_attn, vmem_limit, prefer_multi_step)
    assert B % tb == 0, "batch tile must divide batch"

    inv_sqrt_dk = 1.0 / math.sqrt(dk)
    # Weights shipped in bf16; 1/sqrt(dk) folded into the query projection.
    wq = (params["wq"] * inv_sqrt_dk).astype(jnp.bfloat16)
    bq = (params["bq"] * inv_sqrt_dk).astype(jnp.float32)
    wk = params["wk"].astype(jnp.bfloat16)
    bk = params["bk"].astype(jnp.float32)
    wv = params["wv"].astype(jnp.bfloat16)
    bv = params["bv"].astype(jnp.float32)
    wo = params["wo"].astype(jnp.bfloat16)
    bo = params["bo"].astype(jnp.float32)
    gamma = params["gamma"].astype(jnp.float32)
    beta = params["beta"].astype(jnp.float32)

    # k/v activations go in as bf16 (halves their HBM read traffic); queries stay
    # f32 for the residual / LayerNorm path.
    keys_bf = keys.astype(jnp.bfloat16)
    values_bf = values.astype(jnp.bfloat16)

    kernel = functools.partial(_mha_kernel, n_heads=H, d_k=dk, tb=tb, tq=tq,
                               nk=nk, return_attn=return_attn)

    grid = (B // tb, nq // tq)

    if return_attn:
        out_shape = (jax.ShapeDtypeStruct((B, nq, D), queries.dtype),
                     jax.ShapeDtypeStruct((B, H, nq, nk), attn_dtype))
    else:
        out_shape = jax.ShapeDtypeStruct((B, nq, D), queries.dtype)

    def build(single_buffer_consts):
        def const_spec(shape):
            idx = lambda i, j: (0,) * len(shape)
            if single_buffer_consts:
                # Constant-index blocks never change across the grid: single-buffer
                # them to save VMEM (matters most under v7x's 64 MiB budget).
                return pl.BlockSpec(shape, idx, pipeline_mode=pl.Buffered(1))
            return pl.BlockSpec(shape, idx)

        w_spec = const_spec((D, D))
        b_spec = const_spec((1, D))
        in_specs = [
            pl.BlockSpec((tb, tq, D), lambda i, j: (i, j, 0)),   # queries
            pl.BlockSpec((tb, nk, D), lambda i, j: (i, 0, 0)),   # keys
            pl.BlockSpec((tb, nk, D), lambda i, j: (i, 0, 0)),   # values
            w_spec, b_spec,      # Wq, bq (1/sqrt(dk) folded in)
            w_spec, b_spec,      # Wk, bk
            w_spec, b_spec,      # Wv, bv
            w_spec, b_spec,      # Wo, bo
            b_spec, b_spec,      # gamma, beta
        ]
        if return_attn:
            out_specs = [pl.BlockSpec((tb, tq, D), lambda i, j: (i, j, 0)),
                         pl.BlockSpec((tb, H, tq, nk), lambda i, j: (i, 0, j, 0))]
        else:
            out_specs = pl.BlockSpec((tb, tq, D), lambda i, j: (i, j, 0))
        return pl.pallas_call(
            kernel,
            out_shape=out_shape,
            grid_spec=pltpu.PrefetchScalarGridSpec(
                num_scalar_prefetch=0,
                grid=grid,
                in_specs=in_specs,
                out_specs=out_specs),
            compiler_params=pltpu.CompilerParams(
                dimension_semantics=("parallel", "parallel"),
                vmem_limit_bytes=vmem_limit),
        )

    args = (queries, keys_bf, values_bf, wq, bq, wk, bk, wv, bv, wo, bo, gamma, beta)
    try:
        res = jax.block_until_ready(build(True)(*args))
    except Exception:
        # pipeline_mode=pl.Buffered(1) unsupported -> fall back to default buffering.
        res = jax.block_until_ready(build(False)(*args))

    if return_attn:
        return res[0], res[1]
    return res, None


def _xavier_uniform(key, fan_in, fan_out, dtype=jnp.float32):
    bound = np.sqrt(6.0 / (fan_in + fan_out))
    return jax.random.uniform(key, (fan_in, fan_out), dtype, -bound, bound)


def init_mha_params(key, d_model):
    # Mirrors init_params: Linear weights xavier_uniform, biases 0;
    # LayerNorm keeps PyTorch defaults (gamma=1, beta=0).
    ks = jax.random.split(key, 4)
    z = jnp.zeros((1, d_model), jnp.float32)
    return {
        "wq": _xavier_uniform(ks[0], d_model, d_model), "bq": z,
        "wk": _xavier_uniform(ks[1], d_model, d_model), "bk": z,
        "wv": _xavier_uniform(ks[2], d_model, d_model), "bv": z,
        "wo": _xavier_uniform(ks[3], d_model, d_model), "bo": z,
        "gamma": jnp.ones((1, d_model), jnp.float32),
        "beta": jnp.zeros((1, d_model), jnp.float32),
    }


def _reference(queries, keys, values, params, n_heads, *, matmul_dtype=jnp.float32):
    """Pure-JAX reference. float32 reproduces the PyTorch module's math;
    bfloat16 mirrors the kernel's mixed precision (bf16 MXU, f32 accumulate)."""
    B, nq, D = queries.shape
    nk = keys.shape[1]
    dk = D // n_heads
    mm = matmul_dtype

    def proj(x, w, b):
        return jnp.einsum("bnd,de->bne", x.astype(mm), w.astype(mm),
                          preferred_element_type=jnp.float32) + b

    Q = proj(queries, params["wq"], params["bq"])
    K = proj(keys, params["wk"], params["bk"])
    V = proj(values, params["wv"], params["bv"])
    Qh = Q.reshape(B, nq, n_heads, dk).transpose(0, 2, 1, 3)
    Kh = K.reshape(B, nk, n_heads, dk).transpose(0, 2, 1, 3)
    Vh = V.reshape(B, nk, n_heads, dk).transpose(0, 2, 1, 3)
    scores = jnp.einsum("bhqd,bhkd->bhqk", Qh.astype(mm), Kh.astype(mm),
                        preferred_element_type=jnp.float32) / np.sqrt(dk)
    p = jax.nn.softmax(scores, axis=-1)
    ctx = jnp.einsum("bhqk,bhkd->bhqd", p.astype(mm), Vh.astype(mm),
                     preferred_element_type=jnp.float32)
    ctx = ctx.transpose(0, 2, 1, 3).reshape(B, nq, D)
    o = jnp.einsum("bnd,de->bne", ctx.astype(mm), params["wo"].astype(mm),
                   preferred_element_type=jnp.float32) + params["bo"]
    y = queries + o
    mean = y.mean(-1, keepdims=True)
    var = ((y - mean) ** 2).mean(-1, keepdims=True)
    out = (y - mean) / jnp.sqrt(var + 1e-5) * params["gamma"] + params["beta"]
    return out, p


def _run_case(d_model, n_heads, B, nq, nk, key, **kw):
    kq, kk, kv, kp = jax.random.split(key, 4)
    queries = jax.random.normal(kq, (B, nq, d_model), jnp.float32)
    keys = jax.random.normal(kk, (B, nk, d_model), jnp.float32)
    values = jax.random.normal(kv, (B, nk, d_model), jnp.float32)
    params = init_mha_params(kp, d_model)

    out, p_attn = multi_head_attention(queries, keys, values, params,
                                       n_heads=n_heads, **kw)
    jax.block_until_ready(out)
    jax.block_until_ready(p_attn)

    # variant without the attention-map HBM writeback
    out_na, _ = multi_head_attention(queries, keys, values, params,
                                     n_heads=n_heads, return_attn=False, **kw)
    jax.block_until_ready(out_na)

    p32 = p_attn.astype(jnp.float32)

    # tight check vs. a precision-matched reference (bf16 matmuls, f32 accumulate)
    out_bref, p_bref = _reference(queries, keys, values, params, n_heads,
                                  matmul_dtype=jnp.bfloat16)
    assert jnp.allclose(out, out_bref, atol=1e-2, rtol=1e-2), "output mismatch (bf16 ref)"
    assert jnp.allclose(p32, p_bref, atol=1e-2), "p_attn mismatch (bf16 ref)"
    assert jnp.allclose(out_na, out_bref, atol=1e-2, rtol=1e-2), "return_attn=False mismatch"

    # sanity check vs. the full-f32 module semantics (bf16 MXU rounding only)
    out_f32, p_f32 = _reference(queries, keys, values, params, n_heads,
                                matmul_dtype=jnp.float32)
    assert jnp.allclose(out, out_f32, atol=1e-1, rtol=1e-1), "output drifted from f32 ref"
    assert jnp.allclose(p32, p_f32, atol=5e-2), "p_attn drifted from f32 ref"


if __name__ == "__main__":
    key = jax.random.PRNGKey(0)
    k1, k2 = jax.random.split(key)
    # small default shapes (tile picking fully automatic)
    _run_case(d_model=32, n_heads=4, B=4, nq=8, nk=8, key=k1)
    # explicitly exercise the 2-D (batch-tile, query-tile) grid
    _run_case(d_model=32, n_heads=4, B=2, nq=32, nk=16, key=k2,
              batch_tile=1, q_tile=16)
    print("KERNEL_OK")
</pallas_src>

<mosaic_0001>
module attributes {stable_mosaic.version = 11 : i64} {
  func.func @_mha_kernel(%arg0: i32, %arg1: i32, %arg2: memref<4x8x32xf32, #tpu.memory_space<vmem>>, %arg3: memref<4x8x32xbf16, #tpu.memory_space<vmem>>, %arg4: memref<4x8x32xbf16, #tpu.memory_space<vmem>>, %arg5: memref<32x32xbf16, #tpu.memory_space<vmem>>, %arg6: memref<1x32xf32, #tpu.memory_space<vmem>>, %arg7: memref<32x32xbf16, #tpu.memory_space<vmem>>, %arg8: memref<1x32xf32, #tpu.memory_space<vmem>>, %arg9: memref<32x32xbf16, #tpu.memory_space<vmem>>, %arg10: memref<1x32xf32, #tpu.memory_space<vmem>>, %arg11: memref<32x32xbf16, #tpu.memory_space<vmem>>, %arg12: memref<1x32xf32, #tpu.memory_space<vmem>>, %arg13: memref<1x32xf32, #tpu.memory_space<vmem>>, %arg14: memref<1x32xf32, #tpu.memory_space<vmem>>, %arg15: memref<4x8x32xf32, #tpu.memory_space<vmem>>, %arg16: memref<4x4x8x8xbf16, #tpu.memory_space<vmem>>) attributes {dimension_semantics = [#tpu.dimension_semantics<parallel>, #tpu.dimension_semantics<parallel>], iteration_bounds = array<i64: 1, 1>, scalar_prefetch = 0 : i64, scratch_operands = 0 : i64, tpu.core_type = #tpu.core_type<tc>, window_params = [{transform_indices = @transform_0, window_bounds = array<i64: 4, 8, 32>}, {transform_indices = @transform_1, window_bounds = array<i64: 4, 8, 32>}, {transform_indices = @transform_2, window_bounds = array<i64: 4, 8, 32>}, {pipeline_mode = #tpu.pipeline_mode<synchronous>, transform_indices = @transform_3, window_bounds = array<i64: 32, 32>}, {pipeline_mode = #tpu.pipeline_mode<synchronous>, transform_indices = @transform_4, window_bounds = array<i64: 1, 32>}, {pipeline_mode = #tpu.pipeline_mode<synchronous>, transform_indices = @transform_5, window_bounds = array<i64: 32, 32>}, {pipeline_mode = #tpu.pipeline_mode<synchronous>, transform_indices = @transform_6, window_bounds = array<i64: 1, 32>}, {pipeline_mode = #tpu.pipeline_mode<synchronous>, transform_indices = @transform_7, window_bounds = array<i64: 32, 32>}, {pipeline_mode = #tpu.pipeline_mode<synchronous>, transform_indices = @transform_8, window_bounds = array<i64: 1, 32>}, {pipeline_mode = #tpu.pipeline_mode<synchronous>, transform_indices = @transform_9, window_bounds = array<i64: 32, 32>}, {pipeline_mode = #tpu.pipeline_mode<synchronous>, transform_indices = @transform_10, window_bounds = array<i64: 1, 32>}, {pipeline_mode = #tpu.pipeline_mode<synchronous>, transform_indices = @transform_11, window_bounds = array<i64: 1, 32>}, {pipeline_mode = #tpu.pipeline_mode<synchronous>, transform_indices = @transform_12, window_bounds = array<i64: 1, 32>}, {transform_indices = @transform_13, window_bounds = array<i64: 4, 8, 32>}, {transform_indices = @transform_14, window_bounds = array<i64: 4, 4, 8, 8>}]} {
    %c0 = arith.constant 0 : index
    %c0_0 = arith.constant 0 : index
    %c0_1 = arith.constant 0 : index
    %0 = vector.load %arg2[%c0, %c0_0, %c0_1] : memref<4x8x32xf32, #tpu.memory_space<vmem>>, vector<4x8x32xf32>
    %1 = vector.shape_cast %0 : vector<4x8x32xf32> to vector<32x32xf32>
    %2 = arith.truncf %1 : vector<32x32xf32> to vector<32x32xbf16>
    %c0_2 = arith.constant 0 : index
    %c0_3 = arith.constant 0 : index
    %c0_4 = arith.constant 0 : index
    %3 = vector.load %arg3[%c0_2, %c0_3, %c0_4] : memref<4x8x32xbf16, #tpu.memory_space<vmem>>, vector<4x8x32xbf16>
    %4 = vector.shape_cast %3 : vector<4x8x32xbf16> to vector<32x32xbf16>
    %c0_5 = arith.constant 0 : index
    %c0_6 = arith.constant 0 : index
    %c0_7 = arith.constant 0 : index
    %5 = vector.load %arg4[%c0_5, %c0_6, %c0_7] : memref<4x8x32xbf16, #tpu.memory_space<vmem>>, vector<4x8x32xbf16>
    %6 = vector.shape_cast %5 : vector<4x8x32xbf16> to vector<32x32xbf16>
    %c0_8 = arith.constant 0 : index
    %c0_9 = arith.constant 0 : index
    %7 = vector.load %arg5[%c0_8, %c0_9] : memref<32x32xbf16, #tpu.memory_space<vmem>>, vector<32x32xbf16>
    %cst = arith.constant dense<0.000000e+00> : vector<32x32xf32>
    %8 = tpu.matmul %2, %7, %cst {dimension_numbers = #tpu.dot_dimension_numbers<[1], [0], [0], [1], [0, 0, 1, 1], [], []>} : vector<32x32xbf16>, vector<32x32xbf16>, vector<32x32xf32> -> vector<32x32xf32>
    %c0_10 = arith.constant 0 : index
    %c0_11 = arith.constant 0 : index
    %9 = vector.load %arg6[%c0_10, %c0_11] : memref<1x32xf32, #tpu.memory_space<vmem>>, vector<1x32xf32>
    %10 = vector.broadcast %9 : vector<1x32xf32> to vector<32x32xf32>
    %11 = arith.addf %8, %10 : vector<32x32xf32>
    %c0_12 = arith.constant 0 : index
    %c0_13 = arith.constant 0 : index
    %12 = vector.load %arg7[%c0_12, %c0_13] : memref<32x32xbf16, #tpu.memory_space<vmem>>, vector<32x32xbf16>
    %cst_14 = arith.constant dense<0.000000e+00> : vector<32x32xf32>
    %13 = tpu.matmul %4, %12, %cst_14 {dimension_numbers = #tpu.dot_dimension_numbers<[1], [0], [0], [1], [0, 0, 1, 1], [], []>} : vector<32x32xbf16>, vector<32x32xbf16>, vector<32x32xf32> -> vector<32x32xf32>
    %c0_15 = arith.constant 0 : index
    %c0_16 = arith.constant 0 : index
    %14 = vector.load %arg8[%c0_15, %c0_16] : memref<1x32xf32, #tpu.memory_space<vmem>>, vector<1x32xf32>
    %15 = vector.broadcast %14 : vector<1x32xf32> to vector<32x32xf32>
    %16 = arith.addf %13, %15 : vector<32x32xf32>
    %c0_17 = arith.constant 0 : index
    %c0_18 = arith.constant 0 : index
    %17 = vector.load %arg9[%c0_17, %c0_18] : memref<32x32xbf16, #tpu.memory_space<vmem>>, vector<32x32xbf16>
    %cst_19 = arith.constant dense<0.000000e+00> : vector<32x32xf32>
    %18 = tpu.matmul %6, %17, %cst_19 {dimension_numbers = #tpu.dot_dimension_numbers<[1], [0], [0], [1], [0, 0, 1, 1], [], []>} : vector<32x32xbf16>, vector<32x32xbf16>, vector<32x32xf32> -> vector<32x32xf32>
    %c0_20 = arith.constant 0 : index
    %c0_21 = arith.constant 0 : index
    %19 = vector.load %arg10[%c0_20, %c0_21] : memref<1x32xf32, #tpu.memory_space<vmem>>, vector<1x32xf32>
    %20 = vector.broadcast %19 : vector<1x32xf32> to vector<32x32xf32>
    %21 = arith.addf %18, %20 : vector<32x32xf32>
    %22 = vector.shape_cast %11 : vector<32x32xf32> to vector<4x8x32xf32>
    %23 = vector.extract_strided_slice %22 {offsets = [0, 0, 0], sizes = [4, 8, 8], strides = [1, 1, 1]} : vector<4x8x32xf32> to vector<4x8x8xf32>
    %24 = vector.extract_strided_slice %22 {offsets = [0, 0, 8], sizes = [4, 8, 8], strides = [1, 1, 1]} : vector<4x8x32xf32> to vector<4x8x8xf32>
    %25 = vector.extract_strided_slice %22 {offsets = [0, 0, 16], sizes = [4, 8, 8], strides = [1, 1, 1]} : vector<4x8x32xf32> to vector<4x8x8xf32>
    %26 = vector.extract_strided_slice %22 {offsets = [0, 0, 24], sizes = [4, 8, 8], strides = [1, 1, 1]} : vector<4x8x32xf32> to vector<4x8x8xf32>
    %27 = vector.shape_cast %23 : vector<4x8x8xf32> to vector<4x1x8x8xf32>
    %28 = vector.shape_cast %24 : vector<4x8x8xf32> to vector<4x1x8x8xf32>
    %29 = vector.shape_cast %25 : vector<4x8x8xf32> to vector<4x1x8x8xf32>
    %30 = vector.shape_cast %26 : vector<4x8x8xf32> to vector<4x1x8x8xf32>
    %31 = tpu.concatenate %27, %28, %29, %30 in 1 : vector<4x1x8x8xf32>, vector<4x1x8x8xf32>, vector<4x1x8x8xf32>, vector<4x1x8x8xf32> -> vector<4x4x8x8xf32>
    %32 = vector.shape_cast %31 : vector<4x4x8x8xf32> to vector<16x8x8xf32>
    %33 = arith.truncf %32 : vector<16x8x8xf32> to vector<16x8x8xbf16>
    %34 = vector.shape_cast %16 : vector<32x32xf32> to vector<4x8x32xf32>
    %35 = vector.extract_strided_slice %34 {offsets = [0, 0, 0], sizes = [4, 8, 8], strides = [1, 1, 1]} : vector<4x8x32xf32> to vector<4x8x8xf32>
    %36 = vector.extract_strided_slice %34 {offsets = [0, 0, 8], sizes = [4, 8, 8], strides = [1, 1, 1]} : vector<4x8x32xf32> to vector<4x8x8xf32>
    %37 = vector.extract_strided_slice %34 {offsets = [0, 0, 16], sizes = [4, 8, 8], strides = [1, 1, 1]} : vector<4x8x32xf32> to vector<4x8x8xf32>
    %38 = vector.extract_strided_slice %34 {offsets = [0, 0, 24], sizes = [4, 8, 8], strides = [1, 1, 1]} : vector<4x8x32xf32> to vector<4x8x8xf32>
    %39 = vector.shape_cast %35 : vector<4x8x8xf32> to vector<4x1x8x8xf32>
    %40 = vector.shape_cast %36 : vector<4x8x8xf32> to vector<4x1x8x8xf32>
    %41 = vector.shape_cast %37 : vector<4x8x8xf32> to vector<4x1x8x8xf32>
    %42 = vector.shape_cast %38 : vector<4x8x8xf32> to vector<4x1x8x8xf32>
    %43 = tpu.concatenate %39, %40, %41, %42 in 1 : vector<4x1x8x8xf32>, vector<4x1x8x8xf32>, vector<4x1x8x8xf32>, vector<4x1x8x8xf32> -> vector<4x4x8x8xf32>
    %44 = vector.shape_cast %43 : vector<4x4x8x8xf32> to vector<16x8x8xf32>
    %45 = arith.truncf %44 : vector<16x8x8xf32> to vector<16x8x8xbf16>
    %46 = vector.shape_cast %21 : vector<32x32xf32> to vector<4x8x32xf32>
    %47 = vector.extract_strided_slice %46 {offsets = [0, 0, 0], sizes = [4, 8, 8], strides = [1, 1, 1]} : vector<4x8x32xf32> to vector<4x8x8xf32>
    %48 = vector.extract_strided_slice %46 {offsets = [0, 0, 8], sizes = [4, 8, 8], strides = [1, 1, 1]} : vector<4x8x32xf32> to vector<4x8x8xf32>
    %49 = vector.extract_strided_slice %46 {offsets = [0, 0, 16], sizes = [4, 8, 8], strides = [1, 1, 1]} : vector<4x8x32xf32> to vector<4x8x8xf32>
    %50 = vector.extract_strided_slice %46 {offsets = [0, 0, 24], sizes = [4, 8, 8], strides = [1, 1, 1]} : vector<4x8x32xf32> to vector<4x8x8xf32>
    %51 = vector.shape_cast %47 : vector<4x8x8xf32> to vector<4x1x8x8xf32>
    %52 = vector.shape_cast %48 : vector<4x8x8xf32> to vector<4x1x8x8xf32>
    %53 = vector.shape_cast %49 : vector<4x8x8xf32> to vector<4x1x8x8xf32>
    %54 = vector.shape_cast %50 : vector<4x8x8xf32> to vector<4x1x8x8xf32>
    %55 = tpu.concatenate %51, %52, %53, %54 in 1 : vector<4x1x8x8xf32>, vector<4x1x8x8xf32>, vector<4x1x8x8xf32>, vector<4x1x8x8xf32> -> vector<4x4x8x8xf32>
    %56 = vector.shape_cast %55 : vector<4x4x8x8xf32> to vector<16x8x8xf32>
    %57 = arith.truncf %56 : vector<16x8x8xf32> to vector<16x8x8xbf16>
    "tpu.trace_start"() <{level = 10 : i32, message = "bqe,bke->bqk"}> : () -> ()
    %cst_22 = arith.constant dense<0.000000e+00> : vector<16x8x8xf32>
    %58 = tpu.matmul %33, %45, %cst_22 {dimension_numbers = #tpu.dot_dimension_numbers<[2], [2], [1], [1], [0, 0, 0, 1, 1, 1], [0], [0]>} : vector<16x8x8xbf16>, vector<16x8x8xbf16>, vector<16x8x8xf32> -> vector<16x8x8xf32>
    "tpu.trace_stop"() : () -> ()
    %cst_23 = arith.constant dense<0xFF800000> : vector<16x8xf32>
    %59 = vector.multi_reduction <maximumf>, %58, %cst_23 [2] : vector<16x8x8xf32> to vector<16x8xf32>
    %60 = vector.shape_cast %59 : vector<16x8xf32> to vector<16x8x1xf32>
    %61 = vector.broadcast %60 : vector<16x8x1xf32> to vector<16x8x8xf32>
    %62 = arith.subf %58, %61 : vector<16x8x8xf32>
    %63 = math.exp %62 : vector<16x8x8xf32>
    %cst_24 = arith.constant dense<0.000000e+00> : vector<16x8xf32>
    %64 = vector.multi_reduction <add>, %63, %cst_24 [2] : vector<16x8x8xf32> to vector<16x8xf32>
    %65 = vector.shape_cast %64 : vector<16x8xf32> to vector<16x8x1xf32>
    %66 = vector.broadcast %65 : vector<16x8x1xf32> to vector<16x8x8xf32>
    %67 = arith.divf %63, %66 : vector<16x8x8xf32>
    %68 = vector.shape_cast %67 : vector<16x8x8xf32> to vector<4x4x8x8xf32>
    %69 = arith.truncf %68 : vector<4x4x8x8xf32> to vector<4x4x8x8xbf16>
    %c0_25 = arith.constant 0 : index
    %c0_26 = arith.constant 0 : index
    %c0_27 = arith.constant 0 : index
    %c0_28 = arith.constant 0 : index
    %70 = vector.load %arg16[%c0_25, %c0_26, %c0_27, %c0_28] : memref<4x4x8x8xbf16, #tpu.memory_space<vmem>>, vector<4x4x8x8xbf16>
    tpu.vector_store %arg16[%c0_25, %c0_26, %c0_27, %c0_28], %69 {strides = array<i32>} : memref<4x4x8x8xbf16, #tpu.memory_space<vmem>>, vector<4x4x8x8xbf16>,
    %71 = arith.truncf %67 : vector<16x8x8xf32> to vector<16x8x8xbf16>
    "tpu.trace_start"() <{level = 10 : i32, message = "bqk,bke->bqe"}> : () -> ()
    %cst_29 = arith.constant dense<0.000000e+00> : vector<16x8x8xf32>
    %72 = tpu.matmul %71, %57, %cst_29 {dimension_numbers = #tpu.dot_dimension_numbers<[2], [1], [1], [2], [0, 0, 0, 1, 1, 2], [0], [0]>} : vector<16x8x8xbf16>, vector<16x8x8xbf16>, vector<16x8x8xf32> -> vector<16x8x8xf32>
    "tpu.trace_stop"() : () -> ()
    %73 = vector.shape_cast %72 : vector<16x8x8xf32> to vector<4x4x8x8xf32>
    %74 = vector.extract_strided_slice %73 {offsets = [0, 0, 0, 0], sizes = [4, 1, 8, 8], strides = [1, 1, 1, 1]} : vector<4x4x8x8xf32> to vector<4x1x8x8xf32>
    %75 = vector.shape_cast %74 : vector<4x1x8x8xf32> to vector<4x8x8xf32>
    %76 = vector.extract_strided_slice %73 {offsets = [0, 1, 0, 0], sizes = [4, 1, 8, 8], strides = [1, 1, 1, 1]} : vector<4x4x8x8xf32> to vector<4x1x8x8xf32>
    %77 = vector.shape_cast %76 : vector<4x1x8x8xf32> to vector<4x8x8xf32>
    %78 = vector.extract_strided_slice %73 {offsets = [0, 2, 0, 0], sizes = [4, 1, 8, 8], strides = [1, 1, 1, 1]} : vector<4x4x8x8xf32> to vector<4x1x8x8xf32>
    %79 = vector.shape_cast %78 : vector<4x1x8x8xf32> to vector<4x8x8xf32>
    %80 = vector.extract_strided_slice %73 {offsets = [0, 3, 0, 0], sizes = [4, 1, 8, 8], strides = [1, 1, 1, 1]} : vector<4x4x8x8xf32> to vector<4x1x8x8xf32>
    %81 = vector.shape_cast %80 : vector<4x1x8x8xf32> to vector<4x8x8xf32>
    %82 = tpu.concatenate %75, %77, %79, %81 in 2 : vector<4x8x8xf32>, vector<4x8x8xf32>, vector<4x8x8xf32>, vector<4x8x8xf32> -> vector<4x8x32xf32>
    %83 = vector.shape_cast %82 : vector<4x8x32xf32> to vector<32x32xf32>
    %84 = arith.truncf %83 : vector<32x32xf32> to vector<32x32xbf16>
    %c0_30 = arith.constant 0 : index
    %c0_31 = arith.constant 0 : index
    %85 = vector.load %arg11[%c0_30, %c0_31] : memref<32x32xbf16, #tpu.memory_space<vmem>>, vector<32x32xbf16>
    %cst_32 = arith.constant dense<0.000000e+00> : vector<32x32xf32>
    %86 = tpu.matmul %84, %85, %cst_32 {dimension_numbers = #tpu.dot_dimension_numbers<[1], [0], [0], [1], [0, 0, 1, 1], [], []>} : vector<32x32xbf16>, vector<32x32xbf16>, vector<32x32xf32> -> vector<32x32xf32>
    %c0_33 = arith.constant 0 : index
    %c0_34 = arith.constant 0 : index
    %87 = vector.load %arg12[%c0_33, %c0_34] : memref<1x32xf32, #tpu.memory_space<vmem>>, vector<1x32xf32>
    %88 = vector.broadcast %87 : vector<1x32xf32> to vector<32x32xf32>
    %89 = arith.addf %86, %88 : vector<32x32xf32>
    %90 = arith.addf %1, %89 : vector<32x32xf32>
    %cst_35 = arith.constant dense<0.000000e+00> : vector<32xf32>
    %91 = vector.multi_reduction <add>, %90, %cst_35 [1] : vector<32x32xf32> to vector<32xf32>
    %92 = vector.shape_cast %91 : vector<32xf32> to vector<32x1xf32>
    %cst_36 = arith.constant 3.200000e+01 : f32
    %93 = vector.broadcast %cst_36 : f32 to vector<32x1xf32>
    %94 = arith.divf %92, %93 : vector<32x1xf32>
    %95 = vector.broadcast %94 : vector<32x1xf32> to vector<32x32xf32>
    %96 = arith.subf %90, %95 : vector<32x32xf32>
    %97 = arith.mulf %96, %96 : vector<32x32xf32>
    %cst_37 = arith.constant dense<0.000000e+00> : vector<32xf32>
    %98 = vector.multi_reduction <add>, %97, %cst_37 [1] : vector<32x32xf32> to vector<32xf32>
    %99 = vector.shape_cast %98 : vector<32xf32> to vector<32x1xf32>
    %cst_38 = arith.constant 3.200000e+01 : f32
    %100 = vector.broadcast %cst_38 : f32 to vector<32x1xf32>
    %101 = arith.divf %99, %100 : vector<32x1xf32>
    %102 = vector.broadcast %94 : vector<32x1xf32> to vector<32x32xf32>
    %103 = arith.subf %90, %102 : vector<32x32xf32>
    %cst_39 = arith.constant 9.99999974E-6 : f32
    %104 = vector.broadcast %cst_39 : f32 to vector<32x1xf32>
    %105 = arith.addf %101, %104 : vector<32x1xf32>
    %106 = math.rsqrt %105 : vector<32x1xf32>
    %107 = vector.broadcast %106 : vector<32x1xf32> to vector<32x32xf32>
    %108 = arith.mulf %103, %107 : vector<32x32xf32>
    %c0_40 = arith.constant 0 : index
    %c0_41 = arith.constant 0 : index
    %109 = vector.load %arg13[%c0_40, %c0_41] : memref<1x32xf32, #tpu.memory_space<vmem>>, vector<1x32xf32>
    %110 = vector.broadcast %109 : vector<1x32xf32> to vector<32x32xf32>
    %111 = arith.mulf %108, %110 : vector<32x32xf32>
    %c0_42 = arith.constant 0 : index
    %c0_43 = arith.constant 0 : index
    %112 = vector.load %arg14[%c0_42, %c0_43] : memref<1x32xf32, #tpu.memory_space<vmem>>, vector<1x32xf32>
    %113 = vector.broadcast %112 : vector<1x32xf32> to vector<32x32xf32>
    %114 = arith.addf %111, %113 : vector<32x32xf32>
    %115 = vector.shape_cast %114 : vector<32x32xf32> to vector<4x8x32xf32>
    %c0_44 = arith.constant 0 : index
    %c0_45 = arith.constant 0 : index
    %c0_46 = arith.constant 0 : index
    %116 = vector.load %arg15[%c0_44, %c0_45, %c0_46] : memref<4x8x32xf32, #tpu.memory_space<vmem>>, vector<4x8x32xf32>
    tpu.vector_store %arg15[%c0_44, %c0_45, %c0_46], %115 {strides = array<i32>} : memref<4x8x32xf32, #tpu.memory_space<vmem>>, vector<4x8x32xf32>,
    return
  }
  func.func @transform_0(%arg0: i32, %arg1: i32) -> (i32, i32, i32) {
    %c0_i32 = arith.constant 0 : i32
    %c0_i32_0 = arith.constant 0 : i32
    return %arg0, %arg1, %c0_i32 : i32, i32, i32
  }
  func.func @transform_1(%arg0: i32, %arg1: i32) -> (i32, i32, i32) {
    %c0_i32 = arith.constant 0 : i32
    %c0_i32_0 = arith.constant 0 : i32
    %c0_i32_1 = arith.constant 0 : i32
    return %arg0, %c0_i32, %c0_i32_0 : i32, i32, i32
  }
  func.func @transform_2(%arg0: i32, %arg1: i32) -> (i32, i32, i32) {
    %c0_i32 = arith.constant 0 : i32
    %c0_i32_0 = arith.constant 0 : i32
    %c0_i32_1 = arith.constant 0 : i32
    return %arg0, %c0_i32, %c0_i32_0 : i32, i32, i32
  }
  func.func @transform_3(%arg0: i32, %arg1: i32) -> (i32, i32) {
    %c0_i32 = arith.constant 0 : i32
    %c0_i32_0 = arith.constant 0 : i32
    %c0_i32_1 = arith.constant 0 : i32
    return %c0_i32, %c0_i32_0 : i32, i32
  }
  func.func @transform_4(%arg0: i32, %arg1: i32) -> (i32, i32) {
    %c0_i32 = arith.constant 0 : i32
    %c0_i32_0 = arith.constant 0 : i32
    %c0_i32_1 = arith.constant 0 : i32
    return %c0_i32, %c0_i32_0 : i32, i32
  }
  func.func @transform_5(%arg0: i32, %arg1: i32) -> (i32, i32) {
    %c0_i32 = arith.constant 0 : i32
    %c0_i32_0 = arith.constant 0 : i32
    %c0_i32_1 = arith.constant 0 : i32
    return %c0_i32, %c0_i32_0 : i32, i32
  }
  func.func @transform_6(%arg0: i32, %arg1: i32) -> (i32, i32) {
    %c0_i32 = arith.constant 0 : i32
    %c0_i32_0 = arith.constant 0 : i32
    %c0_i32_1 = arith.constant 0 : i32
    return %c0_i32, %c0_i32_0 : i32, i32
  }
  func.func @transform_7(%arg0: i32, %arg1: i32) -> (i32, i32) {
    %c0_i32 = arith.constant 0 : i32
    %c0_i32_0 = arith.constant 0 : i32
    %c0_i32_1 = arith.constant 0 : i32
    return %c0_i32, %c0_i32_0 : i32, i32
  }
  func.func @transform_8(%arg0: i32, %arg1: i32) -> (i32, i32) {
    %c0_i32 = arith.constant 0 : i32
    %c0_i32_0 = arith.constant 0 : i32
    %c0_i32_1 = arith.constant 0 : i32
    return %c0_i32, %c0_i32_0 : i32, i32
  }
  func.func @transform_9(%arg0: i32, %arg1: i32) -> (i32, i32) {
    %c0_i32 = arith.constant 0 : i32
    %c0_i32_0 = arith.constant 0 : i32
    %c0_i32_1 = arith.constant 0 : i32
    return %c0_i32, %c0_i32_0 : i32, i32
  }
  func.func @transform_10(%arg0: i32, %arg1: i32) -> (i32, i32) {
    %c0_i32 = arith.constant 0 : i32
    %c0_i32_0 = arith.constant 0 : i32
    %c0_i32_1 = arith.constant 0 : i32
    return %c0_i32, %c0_i32_0 : i32, i32
  }
  func.func @transform_11(%arg0: i32, %arg1: i32) -> (i32, i32) {
    %c0_i32 = arith.constant 0 : i32
    %c0_i32_0 = arith.constant 0 : i32
    %c0_i32_1 = arith.constant 0 : i32
    return %c0_i32, %c0_i32_0 : i32, i32
  }
  func.func @transform_12(%arg0: i32, %arg1: i32) -> (i32, i32) {
    %c0_i32 = arith.constant 0 : i32
    %c0_i32_0 = arith.constant 0 : i32
    %c0_i32_1 = arith.constant 0 : i32
    return %c0_i32, %c0_i32_0 : i32, i32
  }
  func.func @transform_13(%arg0: i32, %arg1: i32) -> (i32, i32, i32) {
    %c0_i32 = arith.constant 0 : i32
    %c0_i32_0 = arith.constant 0 : i32
    return %arg0, %arg1, %c0_i32 : i32, i32, i32
  }
  func.func @transform_14(%arg0: i32, %arg1: i32) -> (i32, i32, i32, i32) {
    %c0_i32 = arith.constant 0 : i32
    %c0_i32_0 = arith.constant 0 : i32
    %c0_i32_1 = arith.constant 0 : i32
    return %arg0, %c0_i32, %arg1, %c0_i32_0 : i32, i32, i32, i32
  }
}

module attributes {stable_mosaic.version = 11 : i64} {
  func.func @_mha_kernel(%arg0: i32, %arg1: i32, %arg2: memref<4x8x32xf32, #tpu.memory_space<vmem>>, %arg3: memref<4x8x32xbf16, #tpu.memory_space<vmem>>, %arg4: memref<4x8x32xbf16, #tpu.memory_space<vmem>>, %arg5: memref<32x32xbf16, #tpu.memory_space<vmem>>, %arg6: memref<1x32xf32, #tpu.memory_space<vmem>>, %arg7: memref<32x32xbf16, #tpu.memory_space<vmem>>, %arg8: memref<1x32xf32, #tpu.memory_space<vmem>>, %arg9: memref<32x32xbf16, #tpu.memory_space<vmem>>, %arg10: memref<1x32xf32, #tpu.memory_space<vmem>>, %arg11: memref<32x32xbf16, #tpu.memory_space<vmem>>, %arg12: memref<1x32xf32, #tpu.memory_space<vmem>>, %arg13: memref<1x32xf32, #tpu.memory_space<vmem>>, %arg14: memref<1x32xf32, #tpu.memory_space<vmem>>, %arg15: memref<4x8x32xf32, #tpu.memory_space<vmem>>, %arg16: memref<4x4x8x8xbf16, #tpu.memory_space<vmem>>) attributes {dimension_semantics = [#tpu.dimension_semantics<parallel>, #tpu.dimension_semantics<parallel>], iteration_bounds = array<i64: 1, 1>, scalar_prefetch = 0 : i64, scratch_operands = 0 : i64, tpu.core_type = #tpu.core_type<tc>, window_params = [{transform_indices = @transform_0, window_bounds = array<i64: 4, 8, 32>}, {transform_indices = @transform_1, window_bounds = array<i64: 4, 8, 32>}, {transform_indices = @transform_2, window_bounds = array<i64: 4, 8, 32>}, {pipeline_mode = #tpu.pipeline_mode<synchronous>, transform_indices = @transform_3, window_bounds = array<i64: 32, 32>}, {pipeline_mode = #tpu.pipeline_mode<synchronous>, transform_indices = @transform_4, window_bounds = array<i64: 1, 32>}, {pipeline_mode = #tpu.pipeline_mode<synchronous>, transform_indices = @transform_5, window_bounds = array<i64: 32, 32>}, {pipeline_mode = #tpu.pipeline_mode<synchronous>, transform_indices = @transform_6, window_bounds = array<i64: 1, 32>}, {pipeline_mode = #tpu.pipeline_mode<synchronous>, transform_indices = @transform_7, window_bounds = array<i64: 32, 32>}, {pipeline_mode = #tpu.pipeline_mode<synchronous>, transform_indices = @transform_8, window_bounds = array<i64: 1, 32>}, {pipeline_mode = #tpu.pipeline_mode<synchronous>, transform_indices = @transform_9, window_bounds = array<i64: 32, 32>}, {pipeline_mode = #tpu.pipeline_mode<synchronous>, transform_indices = @transform_10, window_bounds = array<i64: 1, 32>}, {pipeline_mode = #tpu.pipeline_mode<synchronous>, transform_indices = @transform_11, window_bounds = array<i64: 1, 32>}, {pipeline_mode = #tpu.pipeline_mode<synchronous>, transform_indices = @transform_12, window_bounds = array<i64: 1, 32>}, {transform_indices = @transform_13, window_bounds = array<i64: 4, 8, 32>}, {transform_indices = @transform_14, window_bounds = array<i64: 4, 4, 8, 8>}]} {
    %c0 = arith.constant 0 : index
    %c0_0 = arith.constant 0 : index
    %c0_1 = arith.constant 0 : index
    %0 = vector.load %arg2[%c0, %c0_0, %c0_1] : memref<4x8x32xf32, #tpu.memory_space<vmem>>, vector<4x8x32xf32>
    %1 = vector.shape_cast %0 : vector<4x8x32xf32> to vector<32x32xf32>
    %2 = arith.truncf %1 : vector<32x32xf32> to vector<32x32xbf16>
    %c0_2 = arith.constant 0 : index
    %c0_3 = arith.constant 0 : index
    %c0_4 = arith.constant 0 : index
    %3 = vector.load %arg3[%c0_2, %c0_3, %c0_4] : memref<4x8x32xbf16, #tpu.memory_space<vmem>>, vector<4x8x32xbf16>
    %4 = vector.shape_cast %3 : vector<4x8x32xbf16> to vector<32x32xbf16>
    %c0_5 = arith.constant 0 : index
    %c0_6 = arith.constant 0 : index
    %c0_7 = arith.constant 0 : index
    %5 = vector.load %arg4[%c0_5, %c0_6, %c0_7] : memref<4x8x32xbf16, #tpu.memory_space<vmem>>, vector<4x8x32xbf16>
    %6 = vector.shape_cast %5 : vector<4x8x32xbf16> to vector<32x32xbf16>
    %c0_8 = arith.constant 0 : index
    %c0_9 = arith.constant 0 : index
    %7 = vector.load %arg5[%c0_8, %c0_9] : memref<32x32xbf16, #tpu.memory_space<vmem>>, vector<32x32xbf16>
    %cst = arith.constant dense<0.000000e+00> : vector<32x32xf32>
    %8 = tpu.matmul %2, %7, %cst {dimension_numbers = #tpu.dot_dimension_numbers<[1], [0], [0], [1], [0, 0, 1, 1], [], []>} : vector<32x32xbf16>, vector<32x32xbf16>, vector<32x32xf32> -> vector<32x32xf32>
    %c0_10 = arith.constant 0 : index
    %c0_11 = arith.constant 0 : index
    %9 = vector.load %arg6[%c0_10, %c0_11] : memref<1x32xf32, #tpu.memory_space<vmem>>, vector<1x32xf32>
    %10 = vector.broadcast %9 : vector<1x32xf32> to vector<32x32xf32>
    %11 = arith.addf %8, %10 : vector<32x32xf32>
    %c0_12 = arith.constant 0 : index
    %c0_13 = arith.constant 0 : index
    %12 = vector.load %arg7[%c0_12, %c0_13] : memref<32x32xbf16, #tpu.memory_space<vmem>>, vector<32x32xbf16>
    %cst_14 = arith.constant dense<0.000000e+00> : vector<32x32xf32>
    %13 = tpu.matmul %4, %12, %cst_14 {dimension_numbers = #tpu.dot_dimension_numbers<[1], [0], [0], [1], [0, 0, 1, 1], [], []>} : vector<32x32xbf16>, vector<32x32xbf16>, vector<32x32xf32> -> vector<32x32xf32>
    %c0_15 = arith.constant 0 : index
    %c0_16 = arith.constant 0 : index
    %14 = vector.load %arg8[%c0_15, %c0_16] : memref<1x32xf32, #tpu.memory_space<vmem>>, vector<1x32xf32>
    %15 = vector.broadcast %14 : vector<1x32xf32> to vector<32x32xf32>
    %16 = arith.addf %13, %15 : vector<32x32xf32>
    %c0_17 = arith.constant 0 : index
    %c0_18 = arith.constant 0 : index
    %17 = vector.load %arg9[%c0_17, %c0_18] : memref<32x32xbf16, #tpu.memory_space<vmem>>, vector<32x32xbf16>
    %cst_19 = arith.constant dense<0.000000e+00> : vector<32x32xf32>
    %18 = tpu.matmul %6, %17, %cst_19 {dimension_numbers = #tpu.dot_dimension_numbers<[1], [0], [0], [1], [0, 0, 1, 1], [], []>} : vector<32x32xbf16>, vector<32x32xbf16>, vector<32x32xf32> -> vector<32x32xf32>
    %c0_20 = arith.constant 0 : index
    %c0_21 = arith.constant 0 : index
    %19 = vector.load %arg10[%c0_20, %c0_21] : memref<1x32xf32, #tpu.memory_space<vmem>>, vector<1x32xf32>
    %20 = vector.broadcast %19 : vector<1x32xf32> to vector<32x32xf32>
    %21 = arith.addf %18, %20 : vector<32x32xf32>
    %22 = vector.shape_cast %11 : vector<32x32xf32> to vector<4x8x32xf32>
    %23 = vector.extract_strided_slice %22 {offsets = [0, 0, 0], sizes = [4, 8, 8], strides = [1, 1, 1]} : vector<4x8x32xf32> to vector<4x8x8xf32>
    %24 = vector.extract_strided_slice %22 {offsets = [0, 0, 8], sizes = [4, 8, 8], strides = [1, 1, 1]} : vector<4x8x32xf32> to vector<4x8x8xf32>
    %25 = vector.extract_strided_slice %22 {offsets = [0, 0, 16], sizes = [4, 8, 8], strides = [1, 1, 1]} : vector<4x8x32xf32> to vector<4x8x8xf32>
    %26 = vector.extract_strided_slice %22 {offsets = [0, 0, 24], sizes = [4, 8, 8], strides = [1, 1, 1]} : vector<4x8x32xf32> to vector<4x8x8xf32>
    %27 = vector.shape_cast %23 : vector<4x8x8xf32> to vector<4x1x8x8xf32>
    %28 = vector.shape_cast %24 : vector<4x8x8xf32> to vector<4x1x8x8xf32>
    %29 = vector.shape_cast %25 : vector<4x8x8xf32> to vector<4x1x8x8xf32>
    %30 = vector.shape_cast %26 : vector<4x8x8xf32> to vector<4x1x8x8xf32>
    %31 = tpu.concatenate %27, %28, %29, %30 in 1 : vector<4x1x8x8xf32>, vector<4x1x8x8xf32>, vector<4x1x8x8xf32>, vector<4x1x8x8xf32> -> vector<4x4x8x8xf32>
    %32 = vector.shape_cast %31 : vector<4x4x8x8xf32> to vector<16x8x8xf32>
    %33 = arith.truncf %32 : vector<16x8x8xf32> to vector<16x8x8xbf16>
    %34 = vector.shape_cast %16 : vector<32x32xf32> to vector<4x8x32xf32>
    %35 = vector.extract_strided_slice %34 {offsets = [0, 0, 0], sizes = [4, 8, 8], strides = [1, 1, 1]} : vector<4x8x32xf32> to vector<4x8x8xf32>
    %36 = vector.extract_strided_slice %34 {offsets = [0, 0, 8], sizes = [4, 8, 8], strides = [1, 1, 1]} : vector<4x8x32xf32> to vector<4x8x8xf32>
    %37 = vector.extract_strided_slice %34 {offsets = [0, 0, 16], sizes = [4, 8, 8], strides = [1, 1, 1]} : vector<4x8x32xf32> to vector<4x8x8xf32>
    %38 = vector.extract_strided_slice %34 {offsets = [0, 0, 24], sizes = [4, 8, 8], strides = [1, 1, 1]} : vector<4x8x32xf32> to vector<4x8x8xf32>
    %39 = vector.shape_cast %35 : vector<4x8x8xf32> to vector<4x1x8x8xf32>
    %40 = vector.shape_cast %36 : vector<4x8x8xf32> to vector<4x1x8x8xf32>
    %41 = vector.shape_cast %37 : vector<4x8x8xf32> to vector<4x1x8x8xf32>
    %42 = vector.shape_cast %38 : vector<4x8x8xf32> to vector<4x1x8x8xf32>
    %43 = tpu.concatenate %39, %40, %41, %42 in 1 : vector<4x1x8x8xf32>, vector<4x1x8x8xf32>, vector<4x1x8x8xf32>, vector<4x1x8x8xf32> -> vector<4x4x8x8xf32>
    %44 = vector.shape_cast %43 : vector<4x4x8x8xf32> to vector<16x8x8xf32>
    %45 = arith.truncf %44 : vector<16x8x8xf32> to vector<16x8x8xbf16>
    %46 = vector.shape_cast %21 : vector<32x32xf32> to vector<4x8x32xf32>
    %47 = vector.extract_strided_slice %46 {offsets = [0, 0, 0], sizes = [4, 8, 8], strides = [1, 1, 1]} : vector<4x8x32xf32> to vector<4x8x8xf32>
    %48 = vector.extract_strided_slice %46 {offsets = [0, 0, 8], sizes = [4, 8, 8], strides = [1, 1, 1]} : vector<4x8x32xf32> to vector<4x8x8xf32>
    %49 = vector.extract_strided_slice %46 {offsets = [0, 0, 16], sizes = [4, 8, 8], strides = [1, 1, 1]} : vector<4x8x32xf32> to vector<4x8x8xf32>
    %50 = vector.extract_strided_slice %46 {offsets = [0, 0, 24], sizes = [4, 8, 8], strides = [1, 1, 1]} : vector<4x8x32xf32> to vector<4x8x8xf32>
    %51 = vector.shape_cast %47 : vector<4x8x8xf32> to vector<4x1x8x8xf32>
    %52 = vector.shape_cast %48 : vector<4x8x8xf32> to vector<4x1x8x8xf32>
    %53 = vector.shape_cast %49 : vector<4x8x8xf32> to vector<4x1x8x8xf32>
    %54 = vector.shape_cast %50 : vector<4x8x8xf32> to vector<4x1x8x8xf32>
    %55 = tpu.concatenate %51, %52, %53, %54 in 1 : vector<4x1x8x8xf32>, vector<4x1x8x8xf32>, vector<4x1x8x8xf32>, vector<4x1x8x8xf32> -> vector<4x4x8x8xf32>
    %56 = vector.shape_cast %55 : vector<4x4x8x8xf32> to vector<16x8x8xf32>
    %57 = arith.truncf %56 : vector<16x8x8xf32> to vector<16x8x8xbf16>
    "tpu.trace_start"() <{level = 10 : i32, message = "bqe,bke->bqk"}> : () -> ()
    %cst_22 = arith.constant dense<0.000000e+00> : vector<16x8x8xf32>
    %58 = tpu.matmul %33, %45, %cst_22 {dimension_numbers = #tpu.dot_dimension_numbers<[2], [2], [1], [1], [0, 0, 0, 1, 1, 1], [0], [0]>} : vector<16x8x8xbf16>, vector<16x8x8xbf16>, vector<16x8x8xf32> -> vector<16x8x8xf32>
    "tpu.trace_stop"() : () -> ()
    %cst_23 = arith.constant dense<0xFF800000> : vector<16x8xf32>
    %59 = vector.multi_reduction <maximumf>, %58, %cst_23 [2] : vector<16x8x8xf32> to vector<16x8xf32>
    %60 = vector.shape_cast %59 : vector<16x8xf32> to vector<16x8x1xf32>
    %61 = vector.broadcast %60 : vector<16x8x1xf32> to vector<16x8x8xf32>
    %62 = arith.subf %58, %61 : vector<16x8x8xf32>
    %63 = math.exp %62 : vector<16x8x8xf32>
    %cst_24 = arith.constant dense<0.000000e+00> : vector<16x8xf32>
    %64 = vector.multi_reduction <add>, %63, %cst_24 [2] : vector<16x8x8xf32> to vector<16x8xf32>
    %65 = vector.shape_cast %64 : vector<16x8xf32> to vector<16x8x1xf32>
    %66 = vector.broadcast %65 : vector<16x8x1xf32> to vector<16x8x8xf32>
    %67 = arith.divf %63, %66 : vector<16x8x8xf32>
    %68 = vector.shape_cast %67 : vector<16x8x8xf32> to vector<4x4x8x8xf32>
    %69 = arith.truncf %68 : vector<4x4x8x8xf32> to vector<4x4x8x8xbf16>
    %c0_25 = arith.constant 0 : index
    %c0_26 = arith.constant 0 : index
    %c0_27 = arith.constant 0 : index
    %c0_28 = arith.constant 0 : index
    %70 = vector.load %arg16[%c0_25, %c0_26, %c0_27, %c0_28] : memref<4x4x8x8xbf16, #tpu.memory_space<vmem>>, vector<4x4x8x8xbf16>
    tpu.vector_store %arg16[%c0_25, %c0_26, %c0_27, %c0_28], %69 {strides = array<i32>} : memref<4x4x8x8xbf16, #tpu.memory_space<vmem>>, vector<4x4x8x8xbf16>,
    %71 = arith.truncf %67 : vector<16x8x8xf32> to vector<16x8x8xbf16>
    "tpu.trace_start"() <{level = 10 : i32, message = "bqk,bke->bqe"}> : () -> ()
    %cst_29 = arith.constant dense<0.000000e+00> : vector<16x8x8xf32>
    %72 = tpu.matmul %71, %57, %cst_29 {dimension_numbers = #tpu.dot_dimension_numbers<[2], [1], [1], [2], [0, 0, 0, 1, 1, 2], [0], [0]>} : vector<16x8x8xbf16>, vector<16x8x8xbf16>, vector<16x8x8xf32> -> vector<16x8x8xf32>
    "tpu.trace_stop"() : () -> ()
    %73 = vector.shape_cast %72 : vector<16x8x8xf32> to vector<4x4x8x8xf32>
    %74 = vector.extract_strided_slice %73 {offsets = [0, 0, 0, 0], sizes = [4, 1, 8, 8], strides = [1, 1, 1, 1]} : vector<4x4x8x8xf32> to vector<4x1x8x8xf32>
    %75 = vector.shape_cast %74 : vector<4x1x8x8xf32> to vector<4x8x8xf32>
    %76 = vector.extract_strided_slice %73 {offsets = [0, 1, 0, 0], sizes = [4, 1, 8, 8], strides = [1, 1, 1, 1]} : vector<4x4x8x8xf32> to vector<4x1x8x8xf32>
    %77 = vector.shape_cast %76 : vector<4x1x8x8xf32> to vector<4x8x8xf32>
    %78 = vector.extract_strided_slice %73 {offsets = [0, 2, 0, 0], sizes = [4, 1, 8, 8], strides = [1, 1, 1, 1]} : vector<4x4x8x8xf32> to vector<4x1x8x8xf32>
    %79 = vector.shape_cast %78 : vector<4x1x8x8xf32> to vector<4x8x8xf32>
    %80 = vector.extract_strided_slice %73 {offsets = [0, 3, 0, 0], sizes = [4, 1, 8, 8], strides = [1, 1, 1, 1]} : vector<4x4x8x8xf32> to vector<4x1x8x8xf32>
    %81 = vector.shape_cast %80 : vector<4x1x8x8xf32> to vector<4x8x8xf32>
    %82 = tpu.concatenate %75, %77, %79, %81 in 2 : vector<4x8x8xf32>, vector<4x8x8xf32>, vector<4x8x8xf32>, vector<4x8x8xf32> -> vector<4x8x32xf32>
    %83 = vector.shape_cast %82 : vector<4x8x32xf32> to vector<32x32xf32>
    %84 = arith.truncf %83 : vector<32x32xf32> to vector<32x32xbf16>
    %c0_30 = arith.constant 0 : index
    %c0_31 = arith.constant 0 : index
    %85 = vector.load %arg11[%c0_30, %c0_31] : memref<32x32xbf16, #tpu.memory_space<vmem>>, vector<32x32xbf16>
    %cst_32 = arith.constant dense<0.000000e+00> : vector<32x32xf32>
    %86 = tpu.matmul %84, %85, %cst_32 {dimension_numbers = #tpu.dot_dimension_numbers<[1], [0], [0], [1], [0, 0, 1, 1], [], []>} : vector<32x32xbf16>, vector<32x32xbf16>, vector<32x32xf32> -> vector<32x32xf32>
    %c0_33 = arith.constant 0 : index
    %c0_34 = arith.constant 0 : index
    %87 = vector.load %arg12[%c0_33, %c0_34] : memref<1x32xf32, #tpu.memory_space<vmem>>, vector<1x32xf32>
    %88 = vector.broadcast %87 : vector<1x32xf32> to vector<32x32xf32>
    %89 = arith.addf %86, %88 : vector<32x32xf32>
    %90 = arith.addf %1, %89 : vector<32x32xf32>
    %cst_35 = arith.constant dense<0.000000e+00> : vector<32xf32>
    %91 = vector.multi_reduction <add>, %90, %cst_35 [1] : vector<32x32xf32> to vector<32xf32>
    %92 = vector.shape_cast %91 : vector<32xf32> to vector<32x1xf32>
    %cst_36 = arith.constant 3.200000e+01 : f32
    %93 = vector.broadcast %cst_36 : f32 to vector<32x1xf32>
    %94 = arith.divf %92, %93 : vector<32x1xf32>
    %95 = vector.broadcast %94 : vector<32x1xf32> to vector<32x32xf32>
    %96 = arith.subf %90, %95 : vector<32x32xf32>
    %97 = arith.mulf %96, %96 : vector<32x32xf32>
    %cst_37 = arith.constant dense<0.000000e+00> : vector<32xf32>
    %98 = vector.multi_reduction <add>, %97, %cst_37 [1] : vector<32x32xf32> to vector<32xf32>
    %99 = vector.shape_cast %98 : vector<32xf32> to vector<32x1xf32>
    %cst_38 = arith.constant 3.200000e+01 : f32
    %100 = vector.broadcast %cst_38 : f32 to vector<32x1xf32>
    %101 = arith.divf %99, %100 : vector<32x1xf32>
    %102 = vector.broadcast %94 : vector<32x1xf32> to vector<32x32xf32>
    %103 = arith.subf %90, %102 : vector<32x32xf32>
    %cst_39 = arith.constant 9.99999974E-6 : f32
    %104 = vector.broadcast %cst_39 : f32 to vector<32x1xf32>
    %105 = arith.addf %101, %104 : vector<32x1xf32>
    %106 = math.rsqrt %105 : vector<32x1xf32>
    %107 = vector.broadcast %106 : vector<32x1xf32> to vector<32x32xf32>
    %108 = arith.mulf %103, %107 : vector<32x32xf32>
    %c0_40 = arith.constant 0 : index
    %c0_41 = arith.constant 0 : index
    %109 = vector.load %arg13[%c0_40, %c0_41] : memref<1x32xf32, #tpu.memory_space<vmem>>, vector<1x32xf32>
    %110 = vector.broadcast %109 : vector<1x32xf32> to vector<32x32xf32>
    %111 = arith.mulf %108, %110 : vector<32x32xf32>
    %c0_42 = arith.constant 0 : index
    %c0_43 = arith.constant 0 : index
    %112 = vector.load %arg14[%c0_42, %c0_43] : memref<1x32xf32, #tpu.memory_space<vmem>>, vector<1x32xf32>
    %113 = vector.broadcast %112 : vector<1x32xf32> to vector<32x32xf32>
    %114 = arith.addf %111, %113 : vector<32x32xf32>
    %115 = vector.shape_cast %114 : vector<32x32xf32> to vector<4x8x32xf32>
    %c0_44 = arith.constant 0 : index
    %c0_45 = arith.constant 0 : index
    %c0_46 = arith.constant 0 : index
    %116 = vector.load %arg15[%c0_44, %c0_45, %c0_46] : memref<4x8x32xf32, #tpu.memory_space<vmem>>, vector<4x8x32xf32>
    tpu.vector_store %arg15[%c0_44, %c0_45, %c0_46], %115 {strides = array<i32>} : memref<4x8x32xf32, #tpu.memory_space<vmem>>, vector<4x8x32xf32>,
    return
  }
  func.func @transform_0(%arg0: i32, %arg1: i32) -> (i32, i32, i32) {
    %c0_i32 = arith.constant 0 : i32
    %c0_i32_0 = arith.constant 0 : i32
    return %arg0, %arg1, %c0_i32 : i32, i32, i32
  }
  func.func @transform_1(%arg0: i32, %arg1: i32) -> (i32, i32, i32) {
    %c0_i32 = arith.constant 0 : i32
    %c0_i32_0 = arith.constant 0 : i32
    %c0_i32_1 = arith.constant 0 : i32
    return %arg0, %c0_i32, %c0_i32_0 : i32, i32, i32
  }
  func.func @transform_2(%arg0: i32, %arg1: i32) -> (i32, i32, i32) {
    %c0_i32 = arith.constant 0 : i32
    %c0_i32_0 = arith.constant 0 : i32
    %c0_i32_1 = arith.constant 0 : i32
    return %arg0, %c0_i32, %c0_i32_0 : i32, i32, i32
  }
  func.func @transform_3(%arg0: i32, %arg1: i32) -> (i32, i32) {
    %c0_i32 = arith.constant 0 : i32
    %c0_i32_0 = arith.constant 0 : i32
    %c0_i32_1 = arith.constant 0 : i32
    return %c0_i32, %c0_i32_0 : i32, i32
  }
  func.func @transform_4(%arg0: i32, %arg1: i32) -> (i32, i32) {
    %c0_i32 = arith.constant 0 : i32
    %c0_i32_0 = arith.constant 0 : i32
    %c0_i32_1 = arith.constant 0 : i32
    return %c0_i32, %c0_i32_0 : i32, i32
  }
  func.func @transform_5(%arg0: i32, %arg1: i32) -> (i32, i32) {
    %c0_i32 = arith.constant 0 : i32
    %c0_i32_0 = arith.constant 0 : i32
    %c0_i32_1 = arith.constant 0 : i32
    return %c0_i32, %c0_i32_0 : i32, i32
  }
  func.func @transform_6(%arg0: i32, %arg1: i32) -> (i32, i32) {
    %c0_i32 = arith.constant 0 : i32
    %c0_i32_0 = arith.constant 0 : i32
    %c0_i32_1 = arith.constant 0 : i32
    return %c0_i32, %c0_i32_0 : i32, i32
  }
  func.func @transform_7(%arg0: i32, %arg1: i32) -> (i32, i32) {
    %c0_i32 = arith.constant 0 : i32
    %c0_i32_0 = arith.constant 0 : i32
    %c0_i32_1 = arith.constant 0 : i32
    return %c0_i32, %c0_i32_0 : i32, i32
  }
  func.func @transform_8(%arg0: i32, %arg1: i32) -> (i32, i32) {
    %c0_i32 = arith.constant 0 : i32
    %c0_i32_0 = arith.constant 0 : i32
    %c0_i32_1 = arith.constant 0 : i32
    return %c0_i32, %c0_i32_0 : i32, i32
  }
  func.func @transform_9(%arg0: i32, %arg1: i32) -> (i32, i32) {
    %c0_i32 = arith.constant 0 : i32
    %c0_i32_0 = arith.constant 0 : i32
    %c0_i32_1 = arith.constant 0 : i32
    return %c0_i32, %c0_i32_0 : i32, i32
  }
  func.func @transform_10(%arg0: i32, %arg1: i32) -> (i32, i32) {
    %c0_i32 = arith.constant 0 : i32
    %c0_i32_0 = arith.constant 0 : i32
    %c0_i32_1 = arith.constant 0 : i32
    return %c0_i32, %c0_i32_0 : i32, i32
  }
  func.func @transform_11(%arg0: i32, %arg1: i32) -> (i32, i32) {
    %c0_i32 = arith.constant 0 : i32
    %c0_i32_0 = arith.constant 0 : i32
    %c0_i32_1 = arith.constant 0 : i32
    return %c0_i32, %c0_i32_0 : i32, i32
  }
  func.func @transform_12(%arg0: i32, %arg1: i32) -> (i32, i32) {
    %c0_i32 = arith.constant 0 : i32
    %c0_i32_0 = arith.constant 0 : i32
    %c0_i32_1 = arith.constant 0 : i32
    return %c0_i32, %c0_i32_0 : i32, i32
  }
  func.func @transform_13(%arg0: i32, %arg1: i32) -> (i32, i32, i32) {
    %c0_i32 = arith.constant 0 : i32
    %c0_i32_0 = arith.constant 0 : i32
    return %arg0, %arg1, %c0_i32 : i32, i32, i32
  }
  func.func @transform_14(%arg0: i32, %arg1: i32) -> (i32, i32, i32, i32) {
    %c0_i32 = arith.constant 0 : i32
    %c0_i32_0 = arith.constant 0 : i32
    %c0_i32_1 = arith.constant 0 : i32
    return %arg0, %c0_i32, %arg1, %c0_i32_0 : i32, i32, i32, i32
  }
}

</mosaic_0001>

<llo_original>
// kernel: tpu_custom_call.1
$region0: #{tpu_custom_call.1}
  #allocation0 [shape = 'u32[]', space=smem, size = 0x4, offset = 0x4, fixed_abs, tag = 'smem constant byte address 0x4 - core index']
  #allocation1 [shape = 'u32[144,128]{1,0:T(1,128)}', space=vmem, size = 0x12000, scoped, tag = 'internal scratch']
  %s0 = inlined_call_operand.hbm [shape: f32[4,8,32], index: 0, kind: input, shape index: {}]
  %s1 = inlined_call_operand.hbm [shape: bf16[4,8,32], index: 1, kind: input, shape index: {}]
  %s2 = inlined_call_operand.hbm [shape: bf16[4,8,32], index: 2, kind: input, shape index: {}]
  %s3 = inlined_call_operand.hbm [shape: bf16[32,32], index: 3, kind: input, shape index: {}]
  %s4 = inlined_call_operand.hbm [shape: f32[1,32], index: 4, kind: input, shape index: {}]
  %s5 = inlined_call_operand.hbm [shape: bf16[32,32], index: 5, kind: input, shape index: {}]
  %s6 = inlined_call_operand.hbm [shape: f32[1,32], index: 6, kind: input, shape index: {}]
  %s7 = inlined_call_operand.hbm [shape: bf16[32,32], index: 7, kind: input, shape index: {}]
  %s8 = inlined_call_operand.hbm [shape: f32[1,32], index: 8, kind: input, shape index: {}]
  %s9 = inlined_call_operand.hbm [shape: bf16[32,32], index: 9, kind: input, shape index: {}]
  %s10 = inlined_call_operand.hbm [shape: f32[1,32], index: 10, kind: input, shape index: {}]
  %s11 = inlined_call_operand.hbm [shape: f32[1,32], index: 11, kind: input, shape index: {}]
  %s12 = inlined_call_operand.hbm [shape: f32[1,32], index: 12, kind: input, shape index: {}]
  %s13 = inlined_call_operand.hbm [shape: f32[4,8,32], index: 13, kind: output, shape index: {0}]
  %s14 = inlined_call_operand.hbm [shape: bf16[4,4,8,8], index: 14, kind: output, shape index: {1}]
  %15 = xla_tuple %s13, %s14
  %s16 = sld [smem:[#allocation0]]
  $region122: #{tpu_custom_call.1} parent=0
    _
  %s18 = ssub.s32 1, %s16
  %s19 = scalar_select 0, %s18, %s16
  $region1: #{tpu_custom_call.1} parent=0
    #allocation2 [shape = 'u8[16384]{0}', space=vmem, size = 0x4000, scoped, tag = 'input window, operand 0, single buffered']
    #allocation3 [shape = 's32[1]{0}', space=sflag, size = 0x4, scoped, tag = 'scoped memory for tpu_custom_call.1']
    #allocation4 [shape = 's32[1]{0}', space=sflag, size = 0x4, scoped, tag = 'scoped memory for tpu_custom_call.1']
    #allocation5 [shape = 'u8[8192]{0}', space=vmem, size = 0x2000, scoped, tag = 'input window, operand 1, single buffered']
    #allocation6 [shape = 's32[1]{0}', space=sflag, size = 0x4, scoped, tag = 'scoped memory for tpu_custom_call.1']
    #allocation7 [shape = 'u8[8192]{0}', space=vmem, size = 0x2000, scoped, tag = 'input window, operand 2, single buffered']
    #allocation8 [shape = 'u8[8192]{0}', space=vmem, size = 0x2000, scoped, tag = 'input window, operand 3, single buffered']
    #allocation9 [shape = 's32[1]{0}', space=sflag, size = 0x4, scoped, tag = 'scoped memory for tpu_custom_call.1']
    #allocation10 [shape = 'u8[512]{0}', space=vmem, size = 0x400, scoped, tag = 'input window, operand 4, single buffered']
    #allocation11 [shape = 'u8[8192]{0}', space=vmem, size = 0x2000, scoped, tag = 'input window, operand 5, single buffered']
    #allocation12 [shape = 's32[1]{0}', space=sflag, size = 0x4, scoped, tag = 'scoped memory for tpu_custom_call.1']
    #allocation13 [shape = 'u8[512]{0}', space=vmem, size = 0x400, scoped, tag = 'input window, operand 6, single buffered']
    #allocation14 [shape = 'u8[8192]{0}', space=vmem, size = 0x2000, scoped, tag = 'input window, operand 7, single buffered']
    #allocation15 [shape = 's32[1]{0}', space=sflag, size = 0x4, scoped, tag = 'scoped memory for tpu_custom_call.1']
    #allocation16 [shape = 'u8[512]{0}', space=vmem, size = 0x400, scoped, tag = 'input window, operand 8, single buffered']
    #allocation17 [shape = 'u8[8192]{0}', space=vmem, size = 0x2000, scoped, tag = 'input window, operand 9, single buffered']
    #allocation18 [shape = 's32[1]{0}', space=sflag, size = 0x4, scoped, tag = 'scoped memory for tpu_custom_call.1']
    #allocation19 [shape = 'u8[512]{0}', space=vmem, size = 0x400, scoped, tag = 'input window, operand 10, single buffered']
    #allocation20 [shape = 'u8[512]{0}', space=vmem, size = 0x400, scoped, tag = 'input window, operand 11, single buffered']
    #allocation21 [shape = 's32[1]{0}', space=sflag, size = 0x4, scoped, tag = 'scoped memory for tpu_custom_call.1']
    #allocation22 [shape = 'u8[512]{0}', space=vmem, size = 0x400, scoped, tag = 'input window, operand 12, single buffered']
    #allocation23 [shape = 'u8[16384]{0}', space=vmem, size = 0x4000, scoped, tag = 'output window, operand 0, single buffered']
    #allocation24 [shape = 'u8[32768]{0}', space=vmem, size = 0x8000, scoped, tag = 'output window, operand 1, single buffered']
    #allocation25 [shape = 's32[1]{0}', space=sflag, size = 0x4, scoped, tag = 'scoped memory for tpu_custom_call.1']
    %20 = vsyncpa [#allocation3], 0
    %21 = vsyncpa [#allocation6], 0
    %22 = vsyncpa [#allocation9], 0
    %23 = vsyncpa [#allocation12], 0
    %24 = vsyncpa [#allocation15], 0
    %25 = vsyncpa [#allocation18], 0
    %26 = vsyncpa [#allocation21], 0
    %27 = vsyncpa [#allocation4], 0
    %28 = vsyncpa [#allocation25], 0
    // Predicated region
    $region2: #{tpu_custom_call.1} parent=1 // pred_check
      _
    $region3: #{tpu_custom_call.1} parent=1 // pred_check_branch
      %30 = sbr.rel (0) target = $region5
    $region4: #{tpu_custom_call.1} parent=1 // pred_region
      %s32 = ssub.s32 512, 512
      %33 = vsyncadd [#allocation3], %s32
      %s34 = sshll.u32 [#allocation2], 4
      %s35 = int_to_ptr.vmem [resolvable:$true] %s34
      %40 = dma.hbm_to_vmem [thread:$0]  %s0, 512, %s35, [#allocation3], 128, 128, 8
    $region5: #{tpu_custom_call.1} parent=1 // pred_fallthru
      _
    // Predicated region
    $region6: #{tpu_custom_call.1} parent=1 // pred_check
      _
    $region7: #{tpu_custom_call.1} parent=1 // pred_check_branch
      %42 = sbr.rel (0) target = $region9
    $region8: #{tpu_custom_call.1} parent=1 // pred_region
      %s44 = ssub.s32 256, 256
      %45 = vsyncadd [#allocation6], %s44
      %s46 = sshll.u32 [#allocation5], 4
      %s47 = int_to_ptr.vmem [resolvable:$true] %s46
      %52 = dma.hbm_to_vmem [thread:$0]  %s1, 256, %s47, [#allocation6], 64, 64, 4
    $region9: #{tpu_custom_call.1} parent=1 // pred_fallthru
      _
    // Predicated region
    $region10: #{tpu_custom_call.1} parent=1 // pred_check
      _
    $region11: #{tpu_custom_call.1} parent=1 // pred_check_branch
      %54 = sbr.rel (0) target = $region13
    $region12: #{tpu_custom_call.1} parent=1 // pred_region
      %s56 = ssub.s32 256, 256
      %57 = vsyncadd [#allocation6], %s56
      %s58 = sshll.u32 [#allocation7], 4
      %s59 = int_to_ptr.vmem [resolvable:$true] %s58
      %64 = dma.hbm_to_vmem [thread:$0]  %s2, 256, %s59, [#allocation6], 64, 64, 4
    $region13: #{tpu_custom_call.1} parent=1 // pred_fallthru
      _
    // Predicated region
    $region14: #{tpu_custom_call.1} parent=1 // pred_check
      _
    $region15: #{tpu_custom_call.1} parent=1 // pred_check_branch
      %66 = sbr.rel (0) target = $region17
    $region16: #{tpu_custom_call.1} parent=1 // pred_region
      %s68 = ssub.s32 256, 256
      %69 = vsyncadd [#allocation9], %s68
      %s70 = sshll.u32 [#allocation8], 4
      %s71 = int_to_ptr.vmem [resolvable:$true] %s70
      %76 = dma.hbm_to_vmem [thread:$0]  %s3, 256, %s71, [#allocation9], 64, 64, 4
    $region17: #{tpu_custom_call.1} parent=1 // pred_fallthru
      _
    // Predicated region
    $region18: #{tpu_custom_call.1} parent=1 // pred_check
      _
    $region19: #{tpu_custom_call.1} parent=1 // pred_check_branch
      %78 = sbr.rel (0) target = $region21
    $region20: #{tpu_custom_call.1} parent=1 // pred_region
      %s80 = ssub.s32 16, 16
      %81 = vsyncadd [#allocation9], %s80
      %s83 = sshll.u32 [#allocation10], 4
      %s84 = int_to_ptr.vmem [resolvable:$true] %s83
      %86 = dma.hbm_to_vmem [thread:$0]  %s4, 16, %s84, [#allocation9]
    $region21: #{tpu_custom_call.1} parent=1 // pred_fallthru
      _
    // Predicated region
    $region22: #{tpu_custom_call.1} parent=1 // pred_check
      _
    $region23: #{tpu_custom_call.1} parent=1 // pred_check_branch
      %88 = sbr.rel (0) target = $region25
    $region24: #{tpu_custom_call.1} parent=1 // pred_region
      %s90 = ssub.s32 256, 256
      %91 = vsyncadd [#allocation12], %s90
      %s92 = sshll.u32 [#allocation11], 4
      %s93 = int_to_ptr.vmem [resolvable:$true] %s92
      %98 = dma.hbm_to_vmem [thread:$0]  %s5, 256, %s93, [#allocation12], 64, 64, 4
    $region25: #{tpu_custom_call.1} parent=1 // pred_fallthru
      _
    // Predicated region
    $region26: #{tpu_custom_call.1} parent=1 // pred_check
      _
    $region27: #{tpu_custom_call.1} parent=1 // pred_check_branch
      %100 = sbr.rel (0) target = $region29
    $region28: #{tpu_custom_call.1} parent=1 // pred_region
      %s102 = ssub.s32 16, 16
      %103 = vsyncadd [#allocation12], %s102
      %s105 = sshll.u32 [#allocation13], 4
      %s106 = int_to_ptr.vmem [resolvable:$true] %s105
      %108 = dma.hbm_to_vmem [thread:$0]  %s6, 16, %s106, [#allocation12]
    $region29: #{tpu_custom_call.1} parent=1 // pred_fallthru
      _
    // Predicated region
    $region30: #{tpu_custom_call.1} parent=1 // pred_check
      _
    $region31: #{tpu_custom_call.1} parent=1 // pred_check_branch
      %110 = sbr.rel (0) target = $region33
    $region32: #{tpu_custom_call.1} parent=1 // pred_region
      %s112 = ssub.s32 256, 256
      %113 = vsyncadd [#allocation15], %s112
      %s114 = sshll.u32 [#allocation14], 4
      %s115 = int_to_ptr.vmem [resolvable:$true] %s114
      %120 = dma.hbm_to_vmem [thread:$0]  %s7, 256, %s115, [#allocation15], 64, 64, 4
    $region33: #{tpu_custom_call.1} parent=1 // pred_fallthru
      _
    // Predicated region
    $region34: #{tpu_custom_call.1} parent=1 // pred_check
      _
    $region35: #{tpu_custom_call.1} parent=1 // pred_check_branch
      %122 = sbr.rel (0) target = $region37
    $region36: #{tpu_custom_call.1} parent=1 // pred_region
      %s124 = ssub.s32 16, 16
      %125 = vsyncadd [#allocation15], %s124
      %s127 = sshll.u32 [#allocation16], 4
      %s128 = int_to_ptr.vmem [resolvable:$true] %s127
      %130 = dma.hbm_to_vmem [thread:$0]  %s8, 16, %s128, [#allocation15]
    $region37: #{tpu_custom_call.1} parent=1 // pred_fallthru
      _
    // Predicated region
    $region38: #{tpu_custom_call.1} parent=1 // pred_check
      _
    $region39: #{tpu_custom_call.1} parent=1 // pred_check_branch
      %132 = sbr.rel (0) target = $region41
    $region40: #{tpu_custom_call.1} parent=1 // pred_region
      %s134 = ssub.s32 256, 256
      %135 = vsyncadd [#allocation18], %s134
      %s136 = sshll.u32 [#allocation17], 4
      %s137 = int_to_ptr.vmem [resolvable:$true] %s136
      %142 = dma.hbm_to_vmem [thread:$0]  %s9, 256, %s137, [#allocation18], 64, 64, 4
    $region41: #{tpu_custom_call.1} parent=1 // pred_fallthru
      _
    // Predicated region
    $region42: #{tpu_custom_call.1} parent=1 // pred_check
      _
    $region43: #{tpu_custom_call.1} parent=1 // pred_check_branch
      %144 = sbr.rel (0) target = $region45
    $region44: #{tpu_custom_call.1} parent=1 // pred_region
      %s146 = ssub.s32 16, 16
      %147 = vsyncadd [#allocation18], %s146
      %s149 = sshll.u32 [#allocation19], 4
      %s150 = int_to_ptr.vmem [resolvable:$true] %s149
      %152 = dma.hbm_to_vmem [thread:$0]  %s10, 16, %s150, [#allocation18]
    $region45: #{tpu_custom_call.1} parent=1 // pred_fallthru
      _
    // Predicated region
    $region46: #{tpu_custom_call.1} parent=1 // pred_check
      _
    $region47: #{tpu_custom_call.1} parent=1 // pred_check_branch
      %154 = sbr.rel (0) target = $region49
    $region48: #{tpu_custom_call.1} parent=1 // pred_region
      %s156 = ssub.s32 16, 16
      %157 = vsyncadd [#allocation21], %s156
      %s159 = sshll.u32 [#allocation20], 4
      %s160 = int_to_ptr.vmem [resolvable:$true] %s159
      %162 = dma.hbm_to_vmem [thread:$0]  %s11, 16, %s160, [#allocation21]
    $region49: #{tpu_custom_call.1} parent=1 // pred_fallthru
      _
    // Predicated region
    $region50: #{tpu_custom_call.1} parent=1 // pred_check
      _
    $region51: #{tpu_custom_call.1} parent=1 // pred_check_branch
      %164 = sbr.rel (0) target = $region53
    $region52: #{tpu_custom_call.1} parent=1 // pred_region
      %s166 = ssub.s32 16, 16
      %167 = vsyncadd [#allocation21], %s166
      %s169 = sshll.u32 [#allocation22], 4
      %s170 = int_to_ptr.vmem [resolvable:$true] %s169
      %172 = dma.hbm_to_vmem [thread:$0]  %s12, 16, %s170, [#allocation21]
    $region53: #{tpu_custom_call.1} parent=1 // pred_fallthru
      _
    // Predicated region
    $region54: #{tpu_custom_call.1} parent=1 // pred_check
      _
    $region55: #{tpu_custom_call.1} parent=1 // pred_check_branch
      %174 = sbr.rel (0) target = $region57
    $region56: #{tpu_custom_call.1} parent=1 // pred_region
      %175 = dma.done [#allocation3], 512
    $region57: #{tpu_custom_call.1} parent=1 // pred_fallthru
      _
    // Predicated region
    $region58: #{tpu_custom_call.1} parent=1 // pred_check
      _
    $region59: #{tpu_custom_call.1} parent=1 // pred_check_branch
      %177 = sbr.rel (0) target = $region61
    $region60: #{tpu_custom_call.1} parent=1 // pred_region
      %178 = dma.done [#allocation6], 256
    $region61: #{tpu_custom_call.1} parent=1 // pred_fallthru
      _
    // Predicated region
    $region62: #{tpu_custom_call.1} parent=1 // pred_check
      _
    $region63: #{tpu_custom_call.1} parent=1 // pred_check_branch
      %180 = sbr.rel (0) target = $region65
    $region64: #{tpu_custom_call.1} parent=1 // pred_region
      %181 = dma.done [#allocation6], 256
    $region65: #{tpu_custom_call.1} parent=1 // pred_fallthru
      _
    // Predicated region
    $region66: #{tpu_custom_call.1} parent=1 // pred_check
      _
    $region67: #{tpu_custom_call.1} parent=1 // pred_check_branch
      %183 = sbr.rel (0) target = $region69
    $region68: #{tpu_custom_call.1} parent=1 // pred_region
      %184 = dma.done [#allocation9], 256
    $region69: #{tpu_custom_call.1} parent=1 // pred_fallthru
      _
    // Predicated region
    $region70: #{tpu_custom_call.1} parent=1 // pred_check
      _
    $region71: #{tpu_custom_call.1} parent=1 // pred_check_branch
      %186 = sbr.rel (0) target = $region73
    $region72: #{tpu_custom_call.1} parent=1 // pred_region
      %187 = dma.done [#allocation9], 16
    $region73: #{tpu_custom_call.1} parent=1 // pred_fallthru
      _
    // Predicated region
    $region74: #{tpu_custom_call.1} parent=1 // pred_check
      _
    $region75: #{tpu_custom_call.1} parent=1 // pred_check_branch
      %189 = sbr.rel (0) target = $region77
    $region76: #{tpu_custom_call.1} parent=1 // pred_region
      %190 = dma.done [#allocation12], 256
    $region77: #{tpu_custom_call.1} parent=1 // pred_fallthru
      _
    // Predicated region
    $region78: #{tpu_custom_call.1} parent=1 // pred_check
      _
    $region79: #{tpu_custom_call.1} parent=1 // pred_check_branch
      %192 = sbr.rel (0) target = $region81
    $region80: #{tpu_custom_call.1} parent=1 // pred_region
      %193 = dma.done [#allocation12], 16
    $region81: #{tpu_custom_call.1} parent=1 // pred_fallthru
      _
    // Predicated region
    $region82: #{tpu_custom_call.1} parent=1 // pred_check
      _
    $region83: #{tpu_custom_call.1} parent=1 // pred_check_branch
      %195 = sbr.rel (0) target = $region85
    $region84: #{tpu_custom_call.1} parent=1 // pred_region
      %196 = dma.done [#allocation15], 256
    $region85: #{tpu_custom_call.1} parent=1 // pred_fallthru
      _
    // Predicated region
    $region86: #{tpu_custom_call.1} parent=1 // pred_check
      _
    $region87: #{tpu_custom_call.1} parent=1 // pred_check_branch
      %198 = sbr.rel (0) target = $region89
    $region88: #{tpu_custom_call.1} parent=1 // pred_region
      %199 = dma.done [#allocation15], 16
    $region89: #{tpu_custom_call.1} parent=1 // pred_fallthru
      _
    // Predicated region
    $region90: #{tpu_custom_call.1} parent=1 // pred_check
      _
    $region91: #{tpu_custom_call.1} parent=1 // pred_check_branch
      %201 = sbr.rel (0) target = $region93
    $region92: #{tpu_custom_call.1} parent=1 // pred_region
      %202 = dma.done [#allocation18], 256
    $region93: #{tpu_custom_call.1} parent=1 // pred_fallthru
      _
    // Predicated region
    $region94: #{tpu_custom_call.1} parent=1 // pred_check
      _
    $region95: #{tpu_custom_call.1} parent=1 // pred_check_branch
      %204 = sbr.rel (0) target = $region97
    $region96: #{tpu_custom_call.1} parent=1 // pred_region
      %205 = dma.done [#allocation18], 16
    $region97: #{tpu_custom_call.1} parent=1 // pred_fallthru
      _
    // Predicated region
    $region98: #{tpu_custom_call.1} parent=1 // pred_check
      _
    $region99: #{tpu_custom_call.1} parent=1 // pred_check_branch
      %207 = sbr.rel (0) target = $region101
    $region100: #{tpu_custom_call.1} parent=1 // pred_region
      %208 = dma.done [#allocation21], 16
    $region101: #{tpu_custom_call.1} parent=1 // pred_fallthru
      _
    // Predicated region
    $region102: #{tpu_custom_call.1} parent=1 // pred_check
      _
    $region103: #{tpu_custom_call.1} parent=1 // pred_check_branch
      %210 = sbr.rel (0) target = $region105
    $region104: #{tpu_custom_call.1} parent=1 // pred_region
      %211 = dma.done [#allocation21], 16
    $region105: #{tpu_custom_call.1} parent=1 // pred_fallthru
      _
    %v213 = vld [vmem:[#allocation2] sm:$0xff]
    %v214 = vld [vmem:[#allocation2 + $0x8] sm:$0xff]
    %v215 = vld [vmem:[#allocation2 + $0x10] sm:$0xff]
    %v216 = vld [vmem:[#allocation2 + $0x18] sm:$0xff]
    %v217 = vpack.c.bf16 %v214, %v213
    %v218 = vpack.c.bf16 %v216, %v215
    %v219 = vld [vmem:[#allocation5] sm:$0xf]
    %v220 = vld [vmem:[#allocation5 + $0x4] sm:$0xf]
    %v221 = vld [vmem:[#allocation5 + $0x8] sm:$0xf]
    %v222 = vld [vmem:[#allocation5 + $0xc] sm:$0xf]
    %v223 = vld [vmem:[#allocation7] sm:$0xf]
    %v224 = vld [vmem:[#allocation7 + $0x4] sm:$0xf]
    %v225 = vld [vmem:[#allocation7 + $0x8] sm:$0xf]
    %v226 = vld [vmem:[#allocation7 + $0xc] sm:$0xf]
    %v227 = vld [vmem:[#allocation8] sm:$0xf]
    %v228 = vld [vmem:[#allocation8 + $0x4] sm:$0xf]
    %v229 = vld [vmem:[#allocation8 + $0x8] sm:$0xf]
    %v230 = vld [vmem:[#allocation8 + $0xc] sm:$0xf]
    %v231 = vld [vmem:[#allocation10] sm:$0x1]
    %v233 = vlaneseq
    %v234 = vshrl.u32 %v233, 7
    %v235 = vsub.s32 0, %v234
    %v236 = vrot.slane %v231, %v235
    %v242 = vunpack.c.l.b16 %v227
    %v243 = vunpack.c.l.b16 %v228
    %v244 = vunpack.c.l.b16 %v229
    %v245 = vunpack.c.l.b16 %v230
    %v246 = vpack.c.b16 %v243, %v242
    %v247 = vpack.c.b16 %v245, %v244
    %vm250 = vcmask 261120
    %v252 = vsel %vm250, %v217, 0
    %v255 = vsel %vm250, %v218, 0
    %257 = vmatprep.subr.bf16.mxu0 0
    %258 = vmatpush1.bf16.msra.mxu0 %v246
    %259 = vmatprep.subr.bf16.mxu0 0
    %260 = vmatpush1.bf16.msra.mxu0 %v247
    %261 = vmatprep.subr.bf16.mxu0 0
    %262 = vmatpush1.bf16.msra.mxu0 0
    %263 = vmatprep.subr.bf16.mxu0 0
    %264 = vmatpush1.bf16.msra.mxu0 0
    %265 = vmatprep.subr.bf16.mxu0 0
    %266 = vmatpush1.bf16.msra.mxu0 0
    %267 = vmatprep.subr.bf16.mxu0 0
    %268 = vmatpush1.bf16.msra.mxu0 0
    %269 = vmatprep.subr.bf16.mxu0 0
    %270 = vmatpush1.bf16.msra.mxu0 0
    %271 = vmatprep.subr.bf16.mxu0 0
    %272 = vmatpush1.bf16.msra.mxu0 0
    %273 = vmatprep.subr.bf16.mxu0 0
    %274 = vmatpush1.bf16.msra.mxu0 0
    %275 = vmatprep.subr.bf16.mxu0 0
    %276 = vmatpush1.bf16.msra.mxu0 0
    %277 = vmatprep.subr.bf16.mxu0 0
    %278 = vmatpush1.bf16.msra.mxu0 0
    %279 = vmatprep.subr.bf16.mxu0 0
    %280 = vmatpush1.bf16.msra.mxu0 0
    %281 = vmatprep.subr.bf16.mxu0 0
    %282 = vmatpush1.bf16.msra.mxu0 0
    %283 = vmatprep.subr.bf16.mxu0 0
    %284 = vmatpush1.bf16.msra.mxu0 0
    %285 = vmatprep.subr.bf16.mxu0 0
    %286 = vmatpush1.bf16.msra.mxu0 0
    %287 = vmatprep.subr.bf16.mxu0 0
    %288 = vmatpush1.bf16.msra.mxu0 0
    %289 = vmatprep.mubr.bf16.mxu0 0
    %290 = vmatmul.mubr.bf16.gmra.mrb[0].mxu0 %v252
    %v291 = vpop.f32.mrb[0].mxu0
    %v292 = vadd.f32 %v236, %v291
    %v293 = vpop.f32.mrb[0].mxu0
    %v294 = vpop.f32.mrb[0].mxu0
    %v295 = vadd.f32 %v236, %v294
    %v296 = vpop.f32.mrb[0].mxu0
    %297 = vmatprep.mubr.bf16.mxu0 0
    %298 = vmatmul.mubr.bf16.gmra.mrb[0].mxu0 %v255
    %v299 = vpop.f32.mrb[0].mxu0
    %v300 = vadd.f32 %v236, %v299
    %v301 = vpop.f32.mrb[0].mxu0
    %v302 = vpop.f32.mrb[0].mxu0
    %v303 = vadd.f32 %v236, %v302
    %v304 = vpop.f32.mrb[0].mxu0
    %305 = vdwg.mxu0
    %v306 = vld [vmem:[#allocation11] sm:$0xf]
    %v307 = vld [vmem:[#allocation11 + $0x4] sm:$0xf]
    %v308 = vld [vmem:[#allocation11 + $0x8] sm:$0xf]
    %v309 = vld [vmem:[#allocation11 + $0xc] sm:$0xf]
    %v310 = vld [vmem:[#allocation13] sm:$0x1]
    %v312 = vlaneseq
    %v313 = vshrl.u32 %v312, 7
    %v314 = vsub.s32 0, %v313
    %v315 = vrot.slane %v310, %v314
    %v321 = vunpack.c.l.b16 %v219
    %v322 = vunpack.c.l.b16 %v220
    %v323 = vunpack.c.l.b16 %v221
    %v324 = vunpack.c.l.b16 %v222
    %v325 = vpack.c.b16 %v322, %v321
    %v326 = vpack.c.b16 %v324, %v323
    %v331 = vunpack.c.l.b16 %v306
    %v332 = vunpack.c.l.b16 %v307
    %v333 = vunpack.c.l.b16 %v308
    %v334 = vunpack.c.l.b16 %v309
    %v335 = vpack.c.b16 %v332, %v331
    %v336 = vpack.c.b16 %v334, %v333
    %v340 = vsel %vm250, %v325, 0
    %v343 = vsel %vm250, %v326, 0
    %345 = vmatprep.subr.bf16.mxu0 0
    %346 = vmatpush1.bf16.msra.mxu0 %v335
    %347 = vmatprep.subr.bf16.mxu0 0
    %348 = vmatpush1.bf16.msra.mxu0 %v336
    %349 = vmatprep.subr.bf16.mxu0 0
    %350 = vmatpush1.bf16.msra.mxu0 0
    %351 = vmatprep.subr.bf16.mxu0 0
    %352 = vmatpush1.bf16.msra.mxu0 0
    %353 = vmatprep.subr.bf16.mxu0 0
    %354 = vmatpush1.bf16.msra.mxu0 0
    %355 = vmatprep.subr.bf16.mxu0 0
    %356 = vmatpush1.bf16.msra.mxu0 0
    %357 = vmatprep.subr.bf16.mxu0 0
    %358 = vmatpush1.bf16.msra.mxu0 0
    %359 = vmatprep.subr.bf16.mxu0 0
    %360 = vmatpush1.bf16.msra.mxu0 0
    %361 = vmatprep.subr.bf16.mxu0 0
    %362 = vmatpush1.bf16.msra.mxu0 0
    %363 = vmatprep.subr.bf16.mxu0 0
    %364 = vmatpush1.bf16.msra.mxu0 0
    %365 = vmatprep.subr.bf16.mxu0 0
    %366 = vmatpush1.bf16.msra.mxu0 0
    %367 = vmatprep.subr.bf16.mxu0 0
    %368 = vmatpush1.bf16.msra.mxu0 0
    %369 = vmatprep.subr.bf16.mxu0 0
    %370 = vmatpush1.bf16.msra.mxu0 0
    %371 = vmatprep.subr.bf16.mxu0 0
    %372 = vmatpush1.bf16.msra.mxu0 0
    %373 = vmatprep.subr.bf16.mxu0 0
    %374 = vmatpush1.bf16.msra.mxu0 0
    %375 = vmatprep.subr.bf16.mxu0 0
    %376 = vmatpush1.bf16.msra.mxu0 0
    %377 = vmatprep.mubr.bf16.mxu0 0
    %378 = vmatmul.mubr.bf16.gmra.mrb[0].mxu0 %v340
    %v379 = vpop.f32.mrb[0].mxu0
    %v380 = vadd.f32 %v315, %v379
    %v381 = vpop.f32.mrb[0].mxu0
    %v382 = vpop.f32.mrb[0].mxu0
    %v383 = vadd.f32 %v315, %v382
    %v384 = vpop.f32.mrb[0].mxu0
    %385 = vmatprep.mubr.bf16.mxu0 0
    %386 = vmatmul.mubr.bf16.gmra.mrb[0].mxu0 %v343
    %v387 = vpop.f32.mrb[0].mxu0
    %v388 = vadd.f32 %v315, %v387
    %v389 = vpop.f32.mrb[0].mxu0
    %v390 = vpop.f32.mrb[0].mxu0
    %v391 = vadd.f32 %v315, %v390
    %v392 = vpop.f32.mrb[0].mxu0
    %393 = vdwg.mxu0
    %v394 = vld [vmem:[#allocation14] sm:$0xf]
    %v395 = vld [vmem:[#allocation14 + $0x4] sm:$0xf]
    %v396 = vld [vmem:[#allocation14 + $0x8] sm:$0xf]
    %v397 = vld [vmem:[#allocation14 + $0xc] sm:$0xf]
    %v398 = vld [vmem:[#allocation16] sm:$0x1]
    %v400 = vlaneseq
    %v401 = vshrl.u32 %v400, 7
    %v402 = vsub.s32 0, %v401
    %v403 = vrot.slane %v398, %v402
    %v409 = vunpack.c.l.b16 %v223
    %v410 = vunpack.c.l.b16 %v224
    %v411 = vunpack.c.l.b16 %v225
    %v412 = vunpack.c.l.b16 %v226
    %v413 = vpack.c.b16 %v410, %v409
    %v414 = vpack.c.b16 %v412, %v411
    %v419 = vunpack.c.l.b16 %v394
    %v420 = vunpack.c.l.b16 %v395
    %v421 = vunpack.c.l.b16 %v396
    %v422 = vunpack.c.l.b16 %v397
    %v423 = vpack.c.b16 %v420, %v419
    %v424 = vpack.c.b16 %v422, %v421
    %v428 = vsel %vm250, %v413, 0
    %v431 = vsel %vm250, %v414, 0
    %433 = vmatprep.subr.bf16.mxu0 0
    %434 = vmatpush1.bf16.msra.mxu0 %v423
    %435 = vmatprep.subr.bf16.mxu0 0
    %436 = vmatpush1.bf16.msra.mxu0 %v424
    %437 = vmatprep.subr.bf16.mxu0 0
    %438 = vmatpush1.bf16.msra.mxu0 0
    %439 = vmatprep.subr.bf16.mxu0 0
    %440 = vmatpush1.bf16.msra.mxu0 0
    %441 = vmatprep.subr.bf16.mxu0 0
    %442 = vmatpush1.bf16.msra.mxu0 0
    %443 = vmatprep.subr.bf16.mxu0 0
    %444 = vmatpush1.bf16.msra.mxu0 0
    %445 = vmatprep.subr.bf16.mxu0 0
    %446 = vmatpush1.bf16.msra.mxu0 0
    %447 = vmatprep.subr.bf16.mxu0 0
    %448 = vmatpush1.bf16.msra.mxu0 0
    %449 = vmatprep.subr.bf16.mxu0 0
    %450 = vmatpush1.bf16.msra.mxu0 0
    %451 = vmatprep.subr.bf16.mxu0 0
    %452 = vmatpush1.bf16.msra.mxu0 0
    %453 = vmatprep.subr.bf16.mxu0 0
    %454 = vmatpush1.bf16.msra.mxu0 0
    %455 = vmatprep.subr.bf16.mxu0 0
    %456 = vmatpush1.bf16.msra.mxu0 0
    %457 = vmatprep.subr.bf16.mxu0 0
    %458 = vmatpush1.bf16.msra.mxu0 0
    %459 = vmatprep.subr.bf16.mxu0 0
    %460 = vmatpush1.bf16.msra.mxu0 0
    %461 = vmatprep.subr.bf16.mxu0 0
    %462 = vmatpush1.bf16.msra.mxu0 0
    %463 = vmatprep.subr.bf16.mxu0 0
    %464 = vmatpush1.bf16.msra.mxu0 0
    %465 = vmatprep.mubr.bf16.mxu0 0
    %466 = vmatmul.mubr.bf16.gmra.mrb[0].mxu0 %v428
    %v467 = vpop.f32.mrb[0].mxu0
    %v468 = vadd.f32 %v403, %v467
    %v469 = vpop.f32.mrb[0].mxu0
    %v470 = vpop.f32.mrb[0].mxu0
    %v471 = vadd.f32 %v403, %v470
    %v472 = vpop.f32.mrb[0].mxu0
    %473 = vmatprep.mubr.bf16.mxu0 0
    %474 = vmatmul.mubr.bf16.gmra.mrb[0].mxu0 %v431
    %v475 = vpop.f32.mrb[0].mxu0
    %v476 = vadd.f32 %v403, %v475
    %v477 = vpop.f32.mrb[0].mxu0
    %v478 = vpop.f32.mrb[0].mxu0
    %v479 = vadd.f32 %v403, %v478
    %v480 = vpop.f32.mrb[0].mxu0
    %481 = vdwg.mxu0
    %486 = vrot.lane.b32.xlu0 %v292, 120
    %v487 = vpop.permute.xlu0 %486
    %488 = vrot.lane.b32.xlu0 %v295, 120
    %v489 = vpop.permute.xlu0 %488
    %490 = vrot.lane.b32.xlu0 %v300, 120
    %v491 = vpop.permute.xlu0 %490
    %492 = vrot.lane.b32.xlu0 %v303, 120
    %v493 = vpop.permute.xlu0 %492
    %498 = vrot.lane.b32.xlu0 %v292, 112
    %v499 = vpop.permute.xlu0 %498
    %500 = vrot.lane.b32.xlu0 %v295, 112
    %v501 = vpop.permute.xlu0 %500
    %502 = vrot.lane.b32.xlu0 %v300, 112
    %v503 = vpop.permute.xlu0 %502
    %504 = vrot.lane.b32.xlu0 %v303, 112
    %v505 = vpop.permute.xlu0 %504
    %510 = vrot.lane.b32.xlu0 %v292, 104
    %v511 = vpop.permute.xlu0 %510
    %512 = vrot.lane.b32.xlu0 %v295, 104
    %v513 = vpop.permute.xlu0 %512
    %514 = vrot.lane.b32.xlu0 %v300, 104
    %v515 = vpop.permute.xlu0 %514
    %516 = vrot.lane.b32.xlu0 %v303, 104
    %v517 = vpop.permute.xlu0 %516
    %v522 = vpack.c.bf16 %v292, %v292
    %v523 = vpack.c.bf16 %v487, %v487
    %v524 = vpack.c.bf16 %v499, %v499
    %v525 = vpack.c.bf16 %v511, %v511
    %v526 = vpack.c.bf16 %v295, %v295
    %v527 = vpack.c.bf16 %v489, %v489
    %v528 = vpack.c.bf16 %v501, %v501
    %v529 = vpack.c.bf16 %v513, %v513
    %v530 = vpack.c.bf16 %v300, %v300
    %v531 = vpack.c.bf16 %v491, %v491
    %v532 = vpack.c.bf16 %v503, %v503
    %v533 = vpack.c.bf16 %v515, %v515
    %v534 = vpack.c.bf16 %v303, %v303
    %v535 = vpack.c.bf16 %v493, %v493
    %v536 = vpack.c.bf16 %v505, %v505
    %v537 = vpack.c.bf16 %v517, %v517
    %542 = vrot.lane.b32.xlu0 %v380, 120
    %v543 = vpop.permute.xlu0 %542
    %544 = vrot.lane.b32.xlu0 %v383, 120
    %v545 = vpop.permute.xlu0 %544
    %546 = vrot.lane.b32.xlu0 %v388, 120
    %v547 = vpop.permute.xlu0 %546
    %548 = vrot.lane.b32.xlu0 %v391, 120
    %v549 = vpop.permute.xlu0 %548
    %554 = vrot.lane.b32.xlu0 %v380, 112
    %v555 = vpop.permute.xlu0 %554
    %556 = vrot.lane.b32.xlu0 %v383, 112
    %v557 = vpop.permute.xlu0 %556
    %558 = vrot.lane.b32.xlu0 %v388, 112
    %v559 = vpop.permute.xlu0 %558
    %560 = vrot.lane.b32.xlu0 %v391, 112
    %v561 = vpop.permute.xlu0 %560
    %566 = vrot.lane.b32.xlu0 %v380, 104
    %v567 = vpop.permute.xlu0 %566
    %568 = vrot.lane.b32.xlu0 %v383, 104
    %v569 = vpop.permute.xlu0 %568
    %570 = vrot.lane.b32.xlu0 %v388, 104
    %v571 = vpop.permute.xlu0 %570
    %572 = vrot.lane.b32.xlu0 %v391, 104
    %v573 = vpop.permute.xlu0 %572
    %v578 = vpack.c.bf16 %v380, %v380
    %v579 = vpack.c.bf16 %v543, %v543
    %v580 = vpack.c.bf16 %v555, %v555
    %v581 = vpack.c.bf16 %v567, %v567
    %v582 = vpack.c.bf16 %v383, %v383
    %v583 = vpack.c.bf16 %v545, %v545
    %v584 = vpack.c.bf16 %v557, %v557
    %v585 = vpack.c.bf16 %v569, %v569
    %v586 = vpack.c.bf16 %v388, %v388
    %v587 = vpack.c.bf16 %v547, %v547
    %v588 = vpack.c.bf16 %v559, %v559
    %v589 = vpack.c.bf16 %v571, %v571
    %v590 = vpack.c.bf16 %v391, %v391
    %v591 = vpack.c.bf16 %v549, %v549
    %v592 = vpack.c.bf16 %v561, %v561
    %v593 = vpack.c.bf16 %v573, %v573
    %598 = vrot.lane.b32.xlu0 %v468, 120
    %v599 = vpop.permute.xlu0 %598
    %600 = vrot.lane.b32.xlu0 %v471, 120
    %v601 = vpop.permute.xlu0 %600
    %602 = vrot.lane.b32.xlu0 %v476, 120
    %v603 = vpop.permute.xlu0 %602
    %604 = vrot.lane.b32.xlu0 %v479, 120
    %v605 = vpop.permute.xlu0 %604
    %610 = vrot.lane.b32.xlu0 %v468, 112
    %v611 = vpop.permute.xlu0 %610
    %612 = vrot.lane.b32.xlu0 %v471, 112
    %v613 = vpop.permute.xlu0 %612
    %614 = vrot.lane.b32.xlu0 %v476, 112
    %v615 = vpop.permute.xlu0 %614
    %616 = vrot.lane.b32.xlu0 %v479, 112
    %v617 = vpop.permute.xlu0 %616
    %622 = vrot.lane.b32.xlu0 %v468, 104
    %v623 = vpop.permute.xlu0 %622
    %624 = vrot.lane.b32.xlu0 %v471, 104
    %v625 = vpop.permute.xlu0 %624
    %626 = vrot.lane.b32.xlu0 %v476, 104
    %v627 = vpop.permute.xlu0 %626
    %628 = vrot.lane.b32.xlu0 %v479, 104
    %v629 = vpop.permute.xlu0 %628
    %v634 = vpack.c.bf16 %v468, %v468
    %v635 = vpack.c.bf16 %v599, %v599
    %v636 = vpack.c.bf16 %v611, %v611
    %v637 = vpack.c.bf16 %v623, %v623
    %v638 = vpack.c.bf16 %v471, %v471
    %v639 = vpack.c.bf16 %v601, %v601
    %v640 = vpack.c.bf16 %v613, %v613
    %v641 = vpack.c.bf16 %v625, %v625
    %v642 = vpack.c.bf16 %v476, %v476
    %v643 = vpack.c.bf16 %v603, %v603
    %v644 = vpack.c.bf16 %v615, %v615
    %v645 = vpack.c.bf16 %v627, %v627
    %v646 = vpack.c.bf16 %v479, %v479
    %v647 = vpack.c.bf16 %v605, %v605
    %v648 = vpack.c.bf16 %v617, %v617
    %v649 = vpack.c.bf16 %v629, %v629
    %vm650 = vcmask 64512
    %v652 = vsel %vm650, %v522, 0
    %v655 = vsel %vm650, %v578, 0
    %657 = vmatprep.subr.bf16.mxu0 0
    %658 = vmatpush1.bf16.xpose.msra.mxu0 %v655
    %659 = vmatprep.subr.bf16.mxu0 0
    %660 = vmatpush1.bf16.xpose.msra.mxu0 0
    %661 = vmatprep.subr.bf16.mxu0 0
    %662 = vmatpush1.bf16.xpose.msra.mxu0 0
    %663 = vmatprep.subr.bf16.mxu0 0
    %664 = vmatpush1.bf16.xpose.msra.mxu0 0
    %665 = vmatprep.subr.bf16.mxu0 0
    %666 = vmatpush1.bf16.xpose.msra.mxu0 0
    %667 = vmatprep.subr.bf16.mxu0 0
    %668 = vmatpush1.bf16.xpose.msra.mxu0 0
    %669 = vmatprep.subr.bf16.mxu0 0
    %670 = vmatpush1.bf16.xpose.msra.mxu0 0
    %671 = vmatprep.subr.bf16.mxu0 0
    %672 = vmatpush1.bf16.xpose.msra.mxu0 0
    %673 = vmatprep.subr.bf16.mxu0 0
    %674 = vmatpush1.bf16.xpose.msra.mxu0 0
    %675 = vmatprep.subr.bf16.mxu0 0
    %676 = vmatpush1.bf16.xpose.msra.mxu0 0
    %677 = vmatprep.subr.bf16.mxu0 0
    %678 = vmatpush1.bf16.xpose.msra.mxu0 0
    %679 = vmatprep.subr.bf16.mxu0 0
    %680 = vmatpush1.bf16.xpose.msra.mxu0 0
    %681 = vmatprep.subr.bf16.mxu0 0
    %682 = vmatpush1.bf16.xpose.msra.mxu0 0
    %683 = vmatprep.subr.bf16.mxu0 0
    %684 = vmatpush1.bf16.xpose.msra.mxu0 0
    %685 = vmatprep.subr.bf16.mxu0 0
    %686 = vmatpush1.bf16.xpose.msra.mxu0 0
    %687 = vmatprep.subr.bf16.mxu0 0
    %688 = vmatpush1.bf16.xpose.msra.mxu0 0
    %689 = vmatprep.mubr.bf16.mxu0 0
    %690 = vmatmul.mubr.bf16.gmra.mrb[0].mxu0 %v652
    %v691 = vpop.f32.mrb[0].mxu0
    %v692 = vadd.f32 0.0, %v691
    %v693 = vpop.f32.mrb[0].mxu0
    %v694 = vpop.f32.mrb[0].mxu0
    %v695 = vpop.f32.mrb[0].mxu0
    %696 = vdwg.mxu0
    %v698 = vsel %vm650, %v523, 0
    %v701 = vsel %vm650, %v579, 0
    %703 = vmatprep.subr.bf16.mxu0 0
    %704 = vmatpush1.bf16.xpose.msra.mxu0 %v701
    %705 = vmatprep.subr.bf16.mxu0 0
    %706 = vmatpush1.bf16.xpose.msra.mxu0 0
    %707 = vmatprep.subr.bf16.mxu0 0
    %708 = vmatpush1.bf16.xpose.msra.mxu0 0
    %709 = vmatprep.subr.bf16.mxu0 0
    %710 = vmatpush1.bf16.xpose.msra.mxu0 0
    %711 = vmatprep.subr.bf16.mxu0 0
    %712 = vmatpush1.bf16.xpose.msra.mxu0 0
    %713 = vmatprep.subr.bf16.mxu0 0
    %714 = vmatpush1.bf16.xpose.msra.mxu0 0
    %715 = vmatprep.subr.bf16.mxu0 0
    %716 = vmatpush1.bf16.xpose.msra.mxu0 0
    %717 = vmatprep.subr.bf16.mxu0 0
    %718 = vmatpush1.bf16.xpose.msra.mxu0 0
    %719 = vmatprep.subr.bf16.mxu0 0
    %720 = vmatpush1.bf16.xpose.msra.mxu0 0
    %721 = vmatprep.subr.bf16.mxu0 0
    %722 = vmatpush1.bf16.xpose.msra.mxu0 0
    %723 = vmatprep.subr.bf16.mxu0 0
    %724 = vmatpush1.bf16.xpose.msra.mxu0 0
    %725 = vmatprep.subr.bf16.mxu0 0
    %726 = vmatpush1.bf16.xpose.msra.mxu0 0
    %727 = vmatprep.subr.bf16.mxu0 0
    %728 = vmatpush1.bf16.xpose.msra.mxu0 0
    %729 = vmatprep.subr.bf16.mxu0 0
    %730 = vmatpush1.bf16.xpose.msra.mxu0 0
    %731 = vmatprep.subr.bf16.mxu0 0
    %732 = vmatpush1.bf16.xpose.msra.mxu0 0
    %733 = vmatprep.subr.bf16.mxu0 0
    %734 = vmatpush1.bf16.xpose.msra.mxu0 0
    %735 = vmatprep.mubr.bf16.mxu0 0
    %736 = vmatmul.mubr.bf16.gmra.mrb[0].mxu0 %v698
    %v737 = vpop.f32.mrb[0].mxu0
    %v738 = vadd.f32 0.0, %v737
    %v739 = vpop.f32.mrb[0].mxu0
    %v740 = vpop.f32.mrb[0].mxu0
    %v741 = vpop.f32.mrb[0].mxu0
    %742 = vdwg.mxu0
    %v744 = vsel %vm650, %v524, 0
    %v747 = vsel %vm650, %v580, 0
    %749 = vmatprep.subr.bf16.mxu0 0
    %750 = vmatpush1.bf16.xpose.msra.mxu0 %v747
    %751 = vmatprep.subr.bf16.mxu0 0
    %752 = vmatpush1.bf16.xpose.msra.mxu0 0
    %753 = vmatprep.subr.bf16.mxu0 0
    %754 = vmatpush1.bf16.xpose.msra.mxu0 0
    %755 = vmatprep.subr.bf16.mxu0 0
    %756 = vmatpush1.bf16.xpose.msra.mxu0 0
    %757 = vmatprep.subr.bf16.mxu0 0
    %758 = vmatpush1.bf16.xpose.msra.mxu0 0
    %759 = vmatprep.subr.bf16.mxu0 0
    %760 = vmatpush1.bf16.xpose.msra.mxu0 0
    %761 = vmatprep.subr.bf16.mxu0 0
    %762 = vmatpush1.bf16.xpose.msra.mxu0 0
    %763 = vmatprep.subr.bf16.mxu0 0
    %764 = vmatpush1.bf16.xpose.msra.mxu0 0
    %765 = vmatprep.subr.bf16.mxu0 0
    %766 = vmatpush1.bf16.xpose.msra.mxu0 0
    %767 = vmatprep.subr.bf16.mxu0 0
    %768 = vmatpush1.bf16.xpose.msra.mxu0 0
    %769 = vmatprep.subr.bf16.mxu0 0
    %770 = vmatpush1.bf16.xpose.msra.mxu0 0
    %771 = vmatprep.subr.bf16.mxu0 0
    %772 = vmatpush1.bf16.xpose.msra.mxu0 0
    %773 = vmatprep.subr.bf16.mxu0 0
    %774 = vmatpush1.bf16.xpose.msra.mxu0 0
    %775 = vmatprep.subr.bf16.mxu0 0
    %776 = vmatpush1.bf16.xpose.msra.mxu0 0
    %777 = vmatprep.subr.bf16.mxu0 0
    %778 = vmatpush1.bf16.xpose.msra.mxu0 0
    %779 = vmatprep.subr.bf16.mxu0 0
    %780 = vmatpush1.bf16.xpose.msra.mxu0 0
    %781 = vmatprep.mubr.bf16.mxu0 0
    %782 = vmatmul.mubr.bf16.gmra.mrb[0].mxu0 %v744
    %v783 = vpop.f32.mrb[0].mxu0
    %v784 = vadd.f32 0.0, %v783
    %v785 = vpop.f32.mrb[0].mxu0
    %v786 = vpop.f32.mrb[0].mxu0
    %v787 = vpop.f32.mrb[0].mxu0
    %788 = vdwg.mxu0
    %v790 = vsel %vm650, %v525, 0
    %v793 = vsel %vm650, %v581, 0
    %795 = vmatprep.subr.bf16.mxu0 0
    %796 = vmatpush1.bf16.xpose.msra.mxu0 %v793
    %797 = vmatprep.subr.bf16.mxu0 0
    %798 = vmatpush1.bf16.xpose.msra.mxu0 0
    %799 = vmatprep.subr.bf16.mxu0 0
    %800 = vmatpush1.bf16.xpose.msra.mxu0 0
    %801 = vmatprep.subr.bf16.mxu0 0
    %802 = vmatpush1.bf16.xpose.msra.mxu0 0
    %803 = vmatprep.subr.bf16.mxu0 0
    %804 = vmatpush1.bf16.xpose.msra.mxu0 0
    %805 = vmatprep.subr.bf16.mxu0 0
    %806 = vmatpush1.bf16.xpose.msra.mxu0 0
    %807 = vmatprep.subr.bf16.mxu0 0
    %808 = vmatpush1.bf16.xpose.msra.mxu0 0
    %809 = vmatprep.subr.bf16.mxu0 0
    %810 = vmatpush1.bf16.xpose.msra.mxu0 0
    %811 = vmatprep.subr.bf16.mxu0 0
    %812 = vmatpush1.bf16.xpose.msra.mxu0 0
    %813 = vmatprep.subr.bf16.mxu0 0
    %814 = vmatpush1.bf16.xpose.msra.mxu0 0
    %815 = vmatprep.subr.bf16.mxu0 0
    %816 = vmatpush1.bf16.xpose.msra.mxu0 0
    %817 = vmatprep.subr.bf16.mxu0 0
    %818 = vmatpush1.bf16.xpose.msra.mxu0 0
    %819 = vmatprep.subr.bf16.mxu0 0
    %820 = vmatpush1.bf16.xpose.msra.mxu0 0
    %821 = vmatprep.subr.bf16.mxu0 0
    %822 = vmatpush1.bf16.xpose.msra.mxu0 0
    %823 = vmatprep.subr.bf16.mxu0 0
    %824 = vmatpush1.bf16.xpose.msra.mxu0 0
    %825 = vmatprep.subr.bf16.mxu0 0
    %826 = vmatpush1.bf16.xpose.msra.mxu0 0
    %827 = vmatprep.mubr.bf16.mxu0 0
    %828 = vmatmul.mubr.bf16.gmra.mrb[0].mxu0 %v790
    %v829 = vpop.f32.mrb[0].mxu0
    %v830 = vadd.f32 0.0, %v829
    %v831 = vpop.f32.mrb[0].mxu0
    %v832 = vpop.f32.mrb[0].mxu0
    %v833 = vpop.f32.mrb[0].mxu0
    %834 = vdwg.mxu0
    %v836 = vsel %vm650, %v526, 0
    %v839 = vsel %vm650, %v582, 0
    %841 = vmatprep.subr.bf16.mxu0 0
    %842 = vmatpush1.bf16.xpose.msra.mxu0 %v839
    %843 = vmatprep.subr.bf16.mxu0 0
    %844 = vmatpush1.bf16.xpose.msra.mxu0 0
    %845 = vmatprep.subr.bf16.mxu0 0
    %846 = vmatpush1.bf16.xpose.msra.mxu0 0
    %847 = vmatprep.subr.bf16.mxu0 0
    %848 = vmatpush1.bf16.xpose.msra.mxu0 0
    %849 = vmatprep.subr.bf16.mxu0 0
    %850 = vmatpush1.bf16.xpose.msra.mxu0 0
    %851 = vmatprep.subr.bf16.mxu0 0
    %852 = vmatpush1.bf16.xpose.msra.mxu0 0
    %853 = vmatprep.subr.bf16.mxu0 0
    %854 = vmatpush1.bf16.xpose.msra.mxu0 0
    %855 = vmatprep.subr.bf16.mxu0 0
    %856 = vmatpush1.bf16.xpose.msra.mxu0 0
    %857 = vmatprep.subr.bf16.mxu0 0
    %858 = vmatpush1.bf16.xpose.msra.mxu0 0
    %859 = vmatprep.subr.bf16.mxu0 0
    %860 = vmatpush1.bf16.xpose.msra.mxu0 0
    %861 = vmatprep.subr.bf16.mxu0 0
    %862 = vmatpush1.bf16.xpose.msra.mxu0 0
    %863 = vmatprep.subr.bf16.mxu0 0
    %864 = vmatpush1.bf16.xpose.msra.mxu0 0
    %865 = vmatprep.subr.bf16.mxu0 0
    %866 = vmatpush1.bf16.xpose.msra.mxu0 0
    %867 = vmatprep.subr.bf16.mxu0 0
    %868 = vmatpush1.bf16.xpose.msra.mxu0 0
    %869 = vmatprep.subr.bf16.mxu0 0
    %870 = vmatpush1.bf16.xpose.msra.mxu0 0
    %871 = vmatprep.subr.bf16.mxu0 0
    %872 = vmatpush1.bf16.xpose.msra.mxu0 0
    %873 = vmatprep.mubr.bf16.mxu0 0
    %874 = vmatmul.mubr.bf16.gmra.mrb[0].mxu0 %v836
    %v875 = vpop.f32.mrb[0].mxu0
    %v876 = vadd.f32 0.0, %v875
    %v877 = vpop.f32.mrb[0].mxu0
    %v878 = vpop.f32.mrb[0].mxu0
    %v879 = vpop.f32.mrb[0].mxu0
    %880 = vdwg.mxu0
    %v882 = vsel %vm650, %v527, 0
    %v885 = vsel %vm650, %v583, 0
    %887 = vmatprep.subr.bf16.mxu0 0
    %888 = vmatpush1.bf16.xpose.msra.mxu0 %v885
    %889 = vmatprep.subr.bf16.mxu0 0
    %890 = vmatpush1.bf16.xpose.msra.mxu0 0
    %891 = vmatprep.subr.bf16.mxu0 0
    %892 = vmatpush1.bf16.xpose.msra.mxu0 0
    %893 = vmatprep.subr.bf16.mxu0 0
    %894 = vmatpush1.bf16.xpose.msra.mxu0 0
    %895 = vmatprep.subr.bf16.mxu0 0
    %896 = vmatpush1.bf16.xpose.msra.mxu0 0
    %897 = vmatprep.subr.bf16.mxu0 0
    %898 = vmatpush1.bf16.xpose.msra.mxu0 0
    %899 = vmatprep.subr.bf16.mxu0 0
    %900 = vmatpush1.bf16.xpose.msra.mxu0 0
    %901 = vmatprep.subr.bf16.mxu0 0
    %902 = vmatpush1.bf16.xpose.msra.mxu0 0
    %903 = vmatprep.subr.bf16.mxu0 0
    %904 = vmatpush1.bf16.xpose.msra.mxu0 0
    %905 = vmatprep.subr.bf16.mxu0 0
    %906 = vmatpush1.bf16.xpose.msra.mxu0 0
    %907 = vmatprep.subr.bf16.mxu0 0
    %908 = vmatpush1.bf16.xpose.msra.mxu0 0
    %909 = vmatprep.subr.bf16.mxu0 0
    %910 = vmatpush1.bf16.xpose.msra.mxu0 0
    %911 = vmatprep.subr.bf16.mxu0 0
    %912 = vmatpush1.bf16.xpose.msra.mxu0 0
    %913 = vmatprep.subr.bf16.mxu0 0
    %914 = vmatpush1.bf16.xpose.msra.mxu0 0
    %915 = vmatprep.subr.bf16.mxu0 0
    %916 = vmatpush1.bf16.xpose.msra.mxu0 0
    %917 = vmatprep.subr.bf16.mxu0 0
    %918 = vmatpush1.bf16.xpose.msra.mxu0 0
    %919 = vmatprep.mubr.bf16.mxu0 0
    %920 = vmatmul.mubr.bf16.gmra.mrb[0].mxu0 %v882
    %v921 = vpop.f32.mrb[0].mxu0
    %v922 = vadd.f32 0.0, %v921
    %v923 = vpop.f32.mrb[0].mxu0
    %v924 = vpop.f32.mrb[0].mxu0
    %v925 = vpop.f32.mrb[0].mxu0
    %926 = vdwg.mxu0
    %v928 = vsel %vm650, %v528, 0
    %v931 = vsel %vm650, %v584, 0
    %933 = vmatprep.subr.bf16.mxu0 0
    %934 = vmatpush1.bf16.xpose.msra.mxu0 %v931
    %935 = vmatprep.subr.bf16.mxu0 0
    %936 = vmatpush1.bf16.xpose.msra.mxu0 0
    %937 = vmatprep.subr.bf16.mxu0 0
    %938 = vmatpush1.bf16.xpose.msra.mxu0 0
    %939 = vmatprep.subr.bf16.mxu0 0
    %940 = vmatpush1.bf16.xpose.msra.mxu0 0
    %941 = vmatprep.subr.bf16.mxu0 0
    %942 = vmatpush1.bf16.xpose.msra.mxu0 0
    %943 = vmatprep.subr.bf16.mxu0 0
    %944 = vmatpush1.bf16.xpose.msra.mxu0 0
    %945 = vmatprep.subr.bf16.mxu0 0
    %946 = vmatpush1.bf16.xpose.msra.mxu0 0
    %947 = vmatprep.subr.bf16.mxu0 0
    %948 = vmatpush1.bf16.xpose.msra.mxu0 0
    %949 = vmatprep.subr.bf16.mxu0 0
    %950 = vmatpush1.bf16.xpose.msra.mxu0 0
    %951 = vmatprep.subr.bf16.mxu0 0
    %952 = vmatpush1.bf16.xpose.msra.mxu0 0
    %953 = vmatprep.subr.bf16.mxu0 0
    %954 = vmatpush1.bf16.xpose.msra.mxu0 0
    %955 = vmatprep.subr.bf16.mxu0 0
    %956 = vmatpush1.bf16.xpose.msra.mxu0 0
    %957 = vmatprep.subr.bf16.mxu0 0
    %958 = vmatpush1.bf16.xpose.msra.mxu0 0
    %959 = vmatprep.subr.bf16.mxu0 0
    %960 = vmatpush1.bf16.xpose.msra.mxu0 0
    %961 = vmatprep.subr.bf16.mxu0 0
    %962 = vmatpush1.bf16.xpose.msra.mxu0 0
    %963 = vmatprep.subr.bf16.mxu0 0
    %964 = vmatpush1.bf16.xpose.msra.mxu0 0
    %965 = vmatprep.mubr.bf16.mxu0 0
    %966 = vmatmul.mubr.bf16.gmra.mrb[0].mxu0 %v928
    %v967 = vpop.f32.mrb[0].mxu0
    %v968 = vadd.f32 0.0, %v967
    %v969 = vpop.f32.mrb[0].mxu0
    %v970 = vpop.f32.mrb[0].mxu0
    %v971 = vpop.f32.mrb[0].mxu0
    %972 = vdwg.mxu0
    %v974 = vsel %vm650, %v529, 0
    %v977 = vsel %vm650, %v585, 0
    %979 = vmatprep.subr.bf16.mxu0 0
    %980 = vmatpush1.bf16.xpose.msra.mxu0 %v977
    %981 = vmatprep.subr.bf16.mxu0 0
    %982 = vmatpush1.bf16.xpose.msra.mxu0 0
    %983 = vmatprep.subr.bf16.mxu0 0
    %984 = vmatpush1.bf16.xpose.msra.mxu0 0
    %985 = vmatprep.subr.bf16.mxu0 0
    %986 = vmatpush1.bf16.xpose.msra.mxu0 0
    %987 = vmatprep.subr.bf16.mxu0 0
    %988 = vmatpush1.bf16.xpose.msra.mxu0 0
    %989 = vmatprep.subr.bf16.mxu0 0
    %990 = vmatpush1.bf16.xpose.msra.mxu0 0
    %991 = vmatprep.subr.bf16.mxu0 0
    %992 = vmatpush1.bf16.xpose.msra.mxu0 0
    %993 = vmatprep.subr.bf16.mxu0 0
    %994 = vmatpush1.bf16.xpose.msra.mxu0 0
    %995 = vmatprep.subr.bf16.mxu0 0
    %996 = vmatpush1.bf16.xpose.msra.mxu0 0
    %997 = vmatprep.subr.bf16.mxu0 0
    %998 = vmatpush1.bf16.xpose.msra.mxu0 0
    %999 = vmatprep.subr.bf16.mxu0 0
    %1000 = vmatpush1.bf16.xpose.msra.mxu0 0
    %1001 = vmatprep.subr.bf16.mxu0 0
    %1002 = vmatpush1.bf16.xpose.msra.mxu0 0
    %1003 = vmatprep.subr.bf16.mxu0 0
    %1004 = vmatpush1.bf16.xpose.msra.mxu0 0
    %1005 = vmatprep.subr.bf16.mxu0 0
    %1006 = vmatpush1.bf16.xpose.msra.mxu0 0
    %1007 = vmatprep.subr.bf16.mxu0 0
    %1008 = vmatpush1.bf16.xpose.msra.mxu0 0
    %1009 = vmatprep.subr.bf16.mxu0 0
    %1010 = vmatpush1.bf16.xpose.msra.mxu0 0
    %1011 = vmatprep.mubr.bf16.mxu0 0
    %1012 = vmatmul.mubr.bf16.gmra.mrb[0].mxu0 %v974
    %v1013 = vpop.f32.mrb[0].mxu0
    %v1014 = vadd.f32 0.0, %v1013
    %v1015 = vpop.f32.mrb[0].mxu0
    %v1016 = vpop.f32.mrb[0].mxu0
    %v1017 = vpop.f32.mrb[0].mxu0
    %1018 = vdwg.mxu0
    %v1020 = vsel %vm650, %v530, 0
    %v1023 = vsel %vm650, %v586, 0
    %1025 = vmatprep.subr.bf16.mxu0 0
    %1026 = vmatpush1.bf16.xpose.msra.mxu0 %v1023
    %1027 = vmatprep.subr.bf16.mxu0 0
    %1028 = vmatpush1.bf16.xpose.msra.mxu0 0
    %1029 = vmatprep.subr.bf16.mxu0 0
    %1030 = vmatpush1.bf16.xpose.msra.mxu0 0
    %1031 = vmatprep.subr.bf16.mxu0 0
    %1032 = vmatpush1.bf16.xpose.msra.mxu0 0
    %1033 = vmatprep.subr.bf16.mxu0 0
    %1034 = vmatpush1.bf16.xpose.msra.mxu0 0
    %1035 = vmatprep.subr.bf16.mxu0 0
    %1036 = vmatpush1.bf16.xpose.msra.mxu0 0
    %1037 = vmatprep.subr.bf16.mxu0 0
    %1038 = vmatpush1.bf16.xpose.msra.mxu0 0
    %1039 = vmatprep.subr.bf16.mxu0 0
    %1040 = vmatpush1.bf16.xpose.msra.mxu0 0
    %1041 = vmatprep.subr.bf16.mxu0 0
    %1042 = vmatpush1.bf16.xpose.msra.mxu0 0
    %1043 = vmatprep.subr.bf16.mxu0 0
    %1044 = vmatpush1.bf16.xpose.msra.mxu0 0
    %1045 = vmatprep.subr.bf16.mxu0 0
    %1046 = vmatpush1.bf16.xpose.msra.mxu0 0
    %1047 = vmatprep.subr.bf16.mxu0 0
    %1048 = vmatpush1.bf16.xpose.msra.mxu0 0
    %1049 = vmatprep.subr.bf16.mxu0 0
    %1050 = vmatpush1.bf16.xpose.msra.mxu0 0
    %1051 = vmatprep.subr.bf16.mxu0 0
    %1052 = vmatpush1.bf16.xpose.msra.mxu0 0
    %1053 = vmatprep.subr.bf16.mxu0 0
    %1054 = vmatpush1.bf16.xpose.msra.mxu0 0
    %1055 = vmatprep.subr.bf16.mxu0 0
    %1056 = vmatpush1.bf16.xpose.msra.mxu0 0
    %1057 = vmatprep.mubr.bf16.mxu0 0
    %1058 = vmatmul.mubr.bf16.gmra.mrb[0].mxu0 %v1020
    %v1059 = vpop.f32.mrb[0].mxu0
    %v1060 = vadd.f32 0.0, %v1059
    %v1061 = vpop.f32.mrb[0].mxu0
    %v1062 = vpop.f32.mrb[0].mxu0
    %v1063 = vpop.f32.mrb[0].mxu0
    %1064 = vdwg.mxu0
    %v1066 = vsel %vm650, %v531, 0
    %v1069 = vsel %vm650, %v587, 0
    %1071 = vmatprep.subr.bf16.mxu0 0
    %1072 = vmatpush1.bf16.xpose.msra.mxu0 %v1069
    %1073 = vmatprep.subr.bf16.mxu0 0
    %1074 = vmatpush1.bf16.xpose.msra.mxu0 0
    %1075 = vmatprep.subr.bf16.mxu0 0
    %1076 = vmatpush1.bf16.xpose.msra.mxu0 0
    %1077 = vmatprep.subr.bf16.mxu0 0
    %1078 = vmatpush1.bf16.xpose.msra.mxu0 0
    %1079 = vmatprep.subr.bf16.mxu0 0
    %1080 = vmatpush1.bf16.xpose.msra.mxu0 0
    %1081 = vmatprep.subr.bf16.mxu0 0
    %1082 = vmatpush1.bf16.xpose.msra.mxu0 0
    %1083 = vmatprep.subr.bf16.mxu0 0
    %1084 = vmatpush1.bf16.xpose.msra.mxu0 0
    %1085 = vmatprep.subr.bf16.mxu0 0
    %1086 = vmatpush1.bf16.xpose.msra.mxu0 0
    %1087 = vmatprep.subr.bf16.mxu0 0
    %1088 = vmatpush1.bf16.xpose.msra.mxu0 0
    %1089 = vmatprep.subr.bf16.mxu0 0
    %1090 = vmatpush1.bf16.xpose.msra.mxu0 0
    %1091 = vmatprep.subr.bf16.mxu0 0
    %1092 = vmatpush1.bf16.xpose.msra.mxu0 0
    %1093 = vmatprep.subr.bf16.mxu0 0
    %1094 = vmatpush1.bf16.xpose.msra.mxu0 0
    %1095 = vmatprep.subr.bf16.mxu0 0
    %1096 = vmatpush1.bf16.xpose.msra.mxu0 0
    %1097 = vmatprep.subr.bf16.mxu0 0
    %1098 = vmatpush1.bf16.xpose.msra.mxu0 0
    %1099 = vmatprep.subr.bf16.mxu0 0
    %1100 = vmatpush1.bf16.xpose.msra.mxu0 0
    %1101 = vmatprep.subr.bf16.mxu0 0
    %1102 = vmatpush1.bf16.xpose.msra.mxu0 0
    %1103 = vmatprep.mubr.bf16.mxu0 0
    %1104 = vmatmul.mubr.bf16.gmra.mrb[0].mxu0 %v1066
    %v1105 = vpop.f32.mrb[0].mxu0
    %v1106 = vadd.f32 0.0, %v1105
    %v1107 = vpop.f32.mrb[0].mxu0
    %v1108 = vpop.f32.mrb[0].mxu0
    %v1109 = vpop.f32.mrb[0].mxu0
    %1110 = vdwg.mxu0
    %v1112 = vsel %vm650, %v532, 0
    %v1115 = vsel %vm650, %v588, 0
    %1117 = vmatprep.subr.bf16.mxu0 0
    %1118 = vmatpush1.bf16.xpose.msra.mxu0 %v1115
    %1119 = vmatprep.subr.bf16.mxu0 0
    %1120 = vmatpush1.bf16.xpose.msra.mxu0 0
    %1121 = vmatprep.subr.bf16.mxu0 0
    %1122 = vmatpush1.bf16.xpose.msra.mxu0 0
    %1123 = vmatprep.subr.bf16.mxu0 0
    %1124 = vmatpush1.bf16.xpose.msra.mxu0 0
    %1125 = vmatprep.subr.bf16.mxu0 0
    %1126 = vmatpush1.bf16.xpose.msra.mxu0 0
    %1127 = vmatprep.subr.bf16.mxu0 0
    %1128 = vmatpush1.bf16.xpose.msra.mxu0 0
    %1129 = vmatprep.subr.bf16.mxu0 0
    %1130 = vmatpush1.bf16.xpose.msra.mxu0 0
    %1131 = vmatprep.subr.bf16.mxu0 0
    %1132 = vmatpush1.bf16.xpose.msra.mxu0 0
    %1133 = vmatprep.subr.bf16.mxu0 0
    %1134 = vmatpush1.bf16.xpose.msra.mxu0 0
    %1135 = vmatprep.subr.bf16.mxu0 0
    %1136 = vmatpush1.bf16.xpose.msra.mxu0 0
    %1137 = vmatprep.subr.bf16.mxu0 0
    %1138 = vmatpush1.bf16.xpose.msra.mxu0 0
    %1139 = vmatprep.subr.bf16.mxu0 0
    %1140 = vmatpush1.bf16.xpose.msra.mxu0 0
    %1141 = vmatprep.subr.bf16.mxu0 0
    %1142 = vmatpush1.bf16.xpose.msra.mxu0 0
    %1143 = vmatprep.subr.bf16.mxu0 0
    %1144 = vmatpush1.bf16.xpose.msra.mxu0 0
    %1145 = vmatprep.subr.bf16.mxu0 0
    %1146 = vmatpush1.bf16.xpose.msra.mxu0 0
    %1147 = vmatprep.subr.bf16.mxu0 0
    %1148 = vmatpush1.bf16.xpose.msra.mxu0 0
    %1149 = vmatprep.mubr.bf16.mxu0 0
    %1150 = vmatmul.mubr.bf16.gmra.mrb[0].mxu0 %v1112
    %v1151 = vpop.f32.mrb[0].mxu0
    %v1152 = vadd.f32 0.0, %v1151
    %v1153 = vpop.f32.mrb[0].mxu0
    %v1154 = vpop.f32.mrb[0].mxu0
    %v1155 = vpop.f32.mrb[0].mxu0
    %1156 = vdwg.mxu0
    %v1158 = vsel %vm650, %v533, 0
    %v1161 = vsel %vm650, %v589, 0
    %1163 = vmatprep.subr.bf16.mxu0 0
    %1164 = vmatpush1.bf16.xpose.msra.mxu0 %v1161
    %1165 = vmatprep.subr.bf16.mxu0 0
    %1166 = vmatpush1.bf16.xpose.msra.mxu0 0
    %1167 = vmatprep.subr.bf16.mxu0 0
    %1168 = vmatpush1.bf16.xpose.msra.mxu0 0
    %1169 = vmatprep.subr.bf16.mxu0 0
    %1170 = vmatpush1.bf16.xpose.msra.mxu0 0
    %1171 = vmatprep.subr.bf16.mxu0 0
    %1172 = vmatpush1.bf16.xpose.msra.mxu0 0
    %1173 = vmatprep.subr.bf16.mxu0 0
    %1174 = vmatpush1.bf16.xpose.msra.mxu0 0
    %1175 = vmatprep.subr.bf16.mxu0 0
    %1176 = vmatpush1.bf16.xpose.msra.mxu0 0
    %1177 = vmatprep.subr.bf16.mxu0 0
    %1178 = vmatpush1.bf16.xpose.msra.mxu0 0
    %1179 = vmatprep.subr.bf16.mxu0 0
    %1180 = vmatpush1.bf16.xpose.msra.mxu0 0
    %1181 = vmatprep.subr.bf16.mxu0 0
    %1182 = vmatpush1.bf16.xpose.msra.mxu0 0
    %1183 = vmatprep.subr.bf16.mxu0 0
    %1184 = vmatpush1.bf16.xpose.msra.mxu0 0
    %1185 = vmatprep.subr.bf16.mxu0 0
    %1186 = vmatpush1.bf16.xpose.msra.mxu0 0
    %1187 = vmatprep.subr.bf16.mxu0 0
    %1188 = vmatpush1.bf16.xpose.msra.mxu0 0
    %1189 = vmatprep.subr.bf16.mxu0 0
    %1190 = vmatpush1.bf16.xpose.msra.mxu0 0
    %1191 = vmatprep.subr.bf16.mxu0 0
    %1192 = vmatpush1.bf16.xpose.msra.mxu0 0
    %1193 = vmatprep.subr.bf16.mxu0 0
    %1194 = vmatpush1.bf16.xpose.msra.mxu0 0
    %1195 = vmatprep.mubr.bf16.mxu0 0
    %1196 = vmatmul.mubr.bf16.gmra.mrb[0].mxu0 %v1158
    %v1197 = vpop.f32.mrb[0].mxu0
    %v1198 = vadd.f32 0.0, %v1197
    %v1199 = vpop.f32.mrb[0].mxu0
    %v1200 = vpop.f32.mrb[0].mxu0
    %v1201 = vpop.f32.mrb[0].mxu0
    %1202 = vdwg.mxu0
    %v1204 = vsel %vm650, %v534, 0
    %v1207 = vsel %vm650, %v590, 0
    %1209 = vmatprep.subr.bf16.mxu0 0
    %1210 = vmatpush1.bf16.xpose.msra.mxu0 %v1207
    %1211 = vmatprep.subr.bf16.mxu0 0
    %1212 = vmatpush1.bf16.xpose.msra.mxu0 0
    %1213 = vmatprep.subr.bf16.mxu0 0
    %1214 = vmatpush1.bf16.xpose.msra.mxu0 0
    %1215 = vmatprep.subr.bf16.mxu0 0
    %1216 = vmatpush1.bf16.xpose.msra.mxu0 0
    %1217 = vmatprep.subr.bf16.mxu0 0
    %1218 = vmatpush1.bf16.xpose.msra.mxu0 0
    %1219 = vmatprep.subr.bf16.mxu0 0
    %1220 = vmatpush1.bf16.xpose.msra.mxu0 0
    %1221 = vmatprep.subr.bf16.mxu0 0
    %1222 = vmatpush1.bf16.xpose.msra.mxu0 0
    %1223 = vmatprep.subr.bf16.mxu0 0
    %1224 = vmatpush1.bf16.xpose.msra.mxu0 0
    %1225 = vmatprep.subr.bf16.mxu0 0
    %1226 = vmatpush1.bf16.xpose.msra.mxu0 0
    %1227 = vmatprep.subr.bf16.mxu0 0
    %1228 = vmatpush1.bf16.xpose.msra.mxu0 0
    %1229 = vmatprep.subr.bf16.mxu0 0
    %1230 = vmatpush1.bf16.xpose.msra.mxu0 0
    %1231 = vmatprep.subr.bf16.mxu0 0
    %1232 = vmatpush1.bf16.xpose.msra.mxu0 0
    %1233 = vmatprep.subr.bf16.mxu0 0
    %1234 = vmatpush1.bf16.xpose.msra.mxu0 0
    %1235 = vmatprep.subr.bf16.mxu0 0
    %1236 = vmatpush1.bf16.xpose.msra.mxu0 0
    %1237 = vmatprep.subr.bf16.mxu0 0
    %1238 = vmatpush1.bf16.xpose.msra.mxu0 0
    %1239 = vmatprep.subr.bf16.mxu0 0
    %1240 = vmatpush1.bf16.xpose.msra.mxu0 0
    %1241 = vmatprep.mubr.bf16.mxu0 0
    %1242 = vmatmul.mubr.bf16.gmra.mrb[0].mxu0 %v1204
    %v1243 = vpop.f32.mrb[0].mxu0
    %v1244 = vadd.f32 0.0, %v1243
    %v1245 = vpop.f32.mrb[0].mxu0
    %v1246 = vpop.f32.mrb[0].mxu0
    %v1247 = vpop.f32.mrb[0].mxu0
    %1248 = vdwg.mxu0
    %v1250 = vsel %vm650, %v535, 0
    %v1253 = vsel %vm650, %v591, 0
    %1255 = vmatprep.subr.bf16.mxu0 0
    %1256 = vmatpush1.bf16.xpose.msra.mxu0 %v1253
    %1257 = vmatprep.subr.bf16.mxu0 0
    %1258 = vmatpush1.bf16.xpose.msra.mxu0 0
    %1259 = vmatprep.subr.bf16.mxu0 0
    %1260 = vmatpush1.bf16.xpose.msra.mxu0 0
    %1261 = vmatprep.subr.bf16.mxu0 0
    %1262 = vmatpush1.bf16.xpose.msra.mxu0 0
    %1263 = vmatprep.subr.bf16.mxu0 0
    %1264 = vmatpush1.bf16.xpose.msra.mxu0 0
    %1265 = vmatprep.subr.bf16.mxu0 0
    %1266 = vmatpush1.bf16.xpose.msra.mxu0 0
    %1267 = vmatprep.subr.bf16.mxu0 0
    %1268 = vmatpush1.bf16.xpose.msra.mxu0 0
    %1269 = vmatprep.subr.bf16.mxu0 0
    %1270 = vmatpush1.bf16.xpose.msra.mxu0 0
    %1271 = vmatprep.subr.bf16.mxu0 0
    %1272 = vmatpush1.bf16.xpose.msra.mxu0 0
    %1273 = vmatprep.subr.bf16.mxu0 0
    %1274 = vmatpush1.bf16.xpose.msra.mxu0 0
    %1275 = vmatprep.subr.bf16.mxu0 0
    %1276 = vmatpush1.bf16.xpose.msra.mxu0 0
    %1277 = vmatprep.subr.bf16.mxu0 0
    %1278 = vmatpush1.bf16.xpose.msra.mxu0 0
    %1279 = vmatprep.subr.bf16.mxu0 0
    %1280 = vmatpush1.bf16.xpose.msra.mxu0 0
    %1281 = vmatprep.subr.bf16.mxu0 0
    %1282 = vmatpush1.bf16.xpose.msra.mxu0 0
    %1283 = vmatprep.subr.bf16.mxu0 0
    %1284 = vmatpush1.bf16.xpose.msra.mxu0 0
    %1285 = vmatprep.subr.bf16.mxu0 0
    %1286 = vmatpush1.bf16.xpose.msra.mxu0 0
    %1287 = vmatprep.mubr.bf16.mxu0 0
    %1288 = vmatmul.mubr.bf16.gmra.mrb[0].mxu0 %v1250
    %v1289 = vpop.f32.mrb[0].mxu0
    %v1290 = vadd.f32 0.0, %v1289
    %v1291 = vpop.f32.mrb[0].mxu0
    %v1292 = vpop.f32.mrb[0].mxu0
    %v1293 = vpop.f32.mrb[0].mxu0
    %1294 = vdwg.mxu0
    %v1296 = vsel %vm650, %v536, 0
    %v1299 = vsel %vm650, %v592, 0
    %1301 = vmatprep.subr.bf16.mxu0 0
    %1302 = vmatpush1.bf16.xpose.msra.mxu0 %v1299
    %1303 = vmatprep.subr.bf16.mxu0 0
    %1304 = vmatpush1.bf16.xpose.msra.mxu0 0
    %1305 = vmatprep.subr.bf16.mxu0 0
    %1306 = vmatpush1.bf16.xpose.msra.mxu0 0
    %1307 = vmatprep.subr.bf16.mxu0 0
    %1308 = vmatpush1.bf16.xpose.msra.mxu0 0
    %1309 = vmatprep.subr.bf16.mxu0 0
    %1310 = vmatpush1.bf16.xpose.msra.mxu0 0
    %1311 = vmatprep.subr.bf16.mxu0 0
    %1312 = vmatpush1.bf16.xpose.msra.mxu0 0
    %1313 = vmatprep.subr.bf16.mxu0 0
    %1314 = vmatpush1.bf16.xpose.msra.mxu0 0
    %1315 = vmatprep.subr.bf16.mxu0 0
    %1316 = vmatpush1.bf16.xpose.msra.mxu0 0
    %1317 = vmatprep.subr.bf16.mxu0 0
    %1318 = vmatpush1.bf16.xpose.msra.mxu0 0
    %1319 = vmatprep.subr.bf16.mxu0 0
    %1320 = vmatpush1.bf16.xpose.msra.mxu0 0
    %1321 = vmatprep.subr.bf16.mxu0 0
    %1322 = vmatpush1.bf16.xpose.msra.mxu0 0
    %1323 = vmatprep.subr.bf16.mxu0 0
    %1324 = vmatpush1.bf16.xpose.msra.mxu0 0
    %1325 = vmatprep.subr.bf16.mxu0 0
    %1326 = vmatpush1.bf16.xpose.msra.mxu0 0
    %1327 = vmatprep.subr.bf16.mxu0 0
    %1328 = vmatpush1.bf16.xpose.msra.mxu0 0
    %1329 = vmatprep.subr.bf16.mxu0 0
    %1330 = vmatpush1.bf16.xpose.msra.mxu0 0
    %1331 = vmatprep.subr.bf16.mxu0 0
    %1332 = vmatpush1.bf16.xpose.msra.mxu0 0
    %1333 = vmatprep.mubr.bf16.mxu0 0
    %1334 = vmatmul.mubr.bf16.gmra.mrb[0].mxu0 %v1296
    %v1335 = vpop.f32.mrb[0].mxu0
    %v1336 = vadd.f32 0.0, %v1335
    %v1337 = vpop.f32.mrb[0].mxu0
    %v1338 = vpop.f32.mrb[0].mxu0
    %v1339 = vpop.f32.mrb[0].mxu0
    %1340 = vdwg.mxu0
    %v1342 = vsel %vm650, %v537, 0
    %v1345 = vsel %vm650, %v593, 0
    %1347 = vmatprep.subr.bf16.mxu0 0
    %1348 = vmatpush1.bf16.xpose.msra.mxu0 %v1345
    %1349 = vmatprep.subr.bf16.mxu0 0
    %1350 = vmatpush1.bf16.xpose.msra.mxu0 0
    %1351 = vmatprep.subr.bf16.mxu0 0
    %1352 = vmatpush1.bf16.xpose.msra.mxu0 0
    %1353 = vmatprep.subr.bf16.mxu0 0
    %1354 = vmatpush1.bf16.xpose.msra.mxu0 0
    %1355 = vmatprep.subr.bf16.mxu0 0
    %1356 = vmatpush1.bf16.xpose.msra.mxu0 0
    %1357 = vmatprep.subr.bf16.mxu0 0
    %1358 = vmatpush1.bf16.xpose.msra.mxu0 0
    %1359 = vmatprep.subr.bf16.mxu0 0
    %1360 = vmatpush1.bf16.xpose.msra.mxu0 0
    %1361 = vmatprep.subr.bf16.mxu0 0
    %1362 = vmatpush1.bf16.xpose.msra.mxu0 0
    %1363 = vmatprep.subr.bf16.mxu0 0
    %1364 = vmatpush1.bf16.xpose.msra.mxu0 0
    %1365 = vmatprep.subr.bf16.mxu0 0
    %1366 = vmatpush1.bf16.xpose.msra.mxu0 0
    %1367 = vmatprep.subr.bf16.mxu0 0
    %1368 = vmatpush1.bf16.xpose.msra.mxu0 0
    %1369 = vmatprep.subr.bf16.mxu0 0
    %1370 = vmatpush1.bf16.xpose.msra.mxu0 0
    %1371 = vmatprep.subr.bf16.mxu0 0
    %1372 = vmatpush1.bf16.xpose.msra.mxu0 0
    %1373 = vmatprep.subr.bf16.mxu0 0
    %1374 = vmatpush1.bf16.xpose.msra.mxu0 0
    %1375 = vmatprep.subr.bf16.mxu0 0
    %1376 = vmatpush1.bf16.xpose.msra.mxu0 0
    %1377 = vmatprep.subr.bf16.mxu0 0
    %1378 = vmatpush1.bf16.xpose.msra.mxu0 0
    %1379 = vmatprep.mubr.bf16.mxu0 0
    %1380 = vmatmul.mubr.bf16.gmra.mrb[0].mxu0 %v1342
    %v1381 = vpop.f32.mrb[0].mxu0
    %v1382 = vadd.f32 0.0, %v1381
    %v1383 = vpop.f32.mrb[0].mxu0
    %v1384 = vpop.f32.mrb[0].mxu0
    %v1385 = vpop.f32.mrb[0].mxu0
    %1386 = vdwg.mxu0
    %v1387 = vsel %vm650, %v692, -inf
    %1388 = vmax.xlane.f32.xlu0 %v1387
    %v1389 = vpop.xlane.xlu0 %1388
    %v1390 = vsel %vm650, %v738, -inf
    %1391 = vmax.xlane.f32.xlu0 %v1390
    %v1392 = vpop.xlane.xlu0 %1391
    %v1393 = vsel %vm650, %v784, -inf
    %1394 = vmax.xlane.f32.xlu0 %v1393
    %v1395 = vpop.xlane.xlu0 %1394
    %v1396 = vsel %vm650, %v830, -inf
    %1397 = vmax.xlane.f32.xlu0 %v1396
    %v1398 = vpop.xlane.xlu0 %1397
    %v1399 = vsel %vm650, %v876, -inf
    %1400 = vmax.xlane.f32.xlu0 %v1399
    %v1401 = vpop.xlane.xlu0 %1400
    %v1402 = vsel %vm650, %v922, -inf
    %1403 = vmax.xlane.f32.xlu0 %v1402
    %v1404 = vpop.xlane.xlu0 %1403
    %v1405 = vsel %vm650, %v968, -inf
    %1406 = vmax.xlane.f32.xlu0 %v1405
    %v1407 = vpop.xlane.xlu0 %1406
    %v1408 = vsel %vm650, %v1014, -inf
    %1409 = vmax.xlane.f32.xlu0 %v1408
    %v1410 = vpop.xlane.xlu0 %1409
    %v1411 = vsel %vm650, %v1060, -inf
    %1412 = vmax.xlane.f32.xlu0 %v1411
    %v1413 = vpop.xlane.xlu0 %1412
    %v1414 = vsel %vm650, %v1106, -inf
    %1415 = vmax.xlane.f32.xlu0 %v1414
    %v1416 = vpop.xlane.xlu0 %1415
    %v1417 = vsel %vm650, %v1152, -inf
    %1418 = vmax.xlane.f32.xlu0 %v1417
    %v1419 = vpop.xlane.xlu0 %1418
    %v1420 = vsel %vm650, %v1198, -inf
    %1421 = vmax.xlane.f32.xlu0 %v1420
    %v1422 = vpop.xlane.xlu0 %1421
    %v1423 = vsel %vm650, %v1244, -inf
    %1424 = vmax.xlane.f32.xlu0 %v1423
    %v1425 = vpop.xlane.xlu0 %1424
    %v1426 = vsel %vm650, %v1290, -inf
    %1427 = vmax.xlane.f32.xlu0 %v1426
    %v1428 = vpop.xlane.xlu0 %1427
    %v1429 = vsel %vm650, %v1336, -inf
    %1430 = vmax.xlane.f32.xlu0 %v1429
    %v1431 = vpop.xlane.xlu0 %1430
    %v1432 = vsel %vm650, %v1382, -inf
    %1433 = vmax.xlane.f32.xlu0 %v1432
    %v1434 = vpop.xlane.xlu0 %1433
    %v1435 = vsub.f32 %v692, %v1389
    %v1436 = vsub.f32 %v738, %v1392
    %v1437 = vsub.f32 %v784, %v1395
    %v1438 = vsub.f32 %v830, %v1398
    %v1439 = vsub.f32 %v876, %v1401
    %v1440 = vsub.f32 %v922, %v1404
    %v1441 = vsub.f32 %v968, %v1407
    %v1442 = vsub.f32 %v1014, %v1410
    %v1443 = vsub.f32 %v1060, %v1413
    %v1444 = vsub.f32 %v1106, %v1416
    %v1445 = vsub.f32 %v1152, %v1419
    %v1446 = vsub.f32 %v1198, %v1422
    %v1447 = vsub.f32 %v1244, %v1425
    %v1448 = vsub.f32 %v1290, %v1428
    %v1449 = vsub.f32 %v1336, %v1431
    %v1450 = vsub.f32 %v1382, %v1434
    %v1451 = vmul.f32 %v1435, 1.442695
    %v1452 = vpow.pop %v1451
    %v1453 = vmul.f32 %v1436, 1.442695
    %v1454 = vpow.pop %v1453
    %v1455 = vmul.f32 %v1437, 1.442695
    %v1456 = vpow.pop %v1455
    %v1457 = vmul.f32 %v1438, 1.442695
    %v1458 = vpow.pop %v1457
    %v1459 = vmul.f32 %v1439, 1.442695
    %v1460 = vpow.pop %v1459
    %v1461 = vmul.f32 %v1440, 1.442695
    %v1462 = vpow.pop %v1461
    %v1463 = vmul.f32 %v1441, 1.442695
    %v1464 = vpow.pop %v1463
    %v1465 = vmul.f32 %v1442, 1.442695
    %v1466 = vpow.pop %v1465
    %v1467 = vmul.f32 %v1443, 1.442695
    %v1468 = vpow.pop %v1467
    %v1469 = vmul.f32 %v1444, 1.442695
    %v1470 = vpow.pop %v1469
    %v1471 = vmul.f32 %v1445, 1.442695
    %v1472 = vpow.pop %v1471
    %v1473 = vmul.f32 %v1446, 1.442695
    %v1474 = vpow.pop %v1473
    %v1475 = vmul.f32 %v1447, 1.442695
    %v1476 = vpow.pop %v1475
    %v1477 = vmul.f32 %v1448, 1.442695
    %v1478 = vpow.pop %v1477
    %v1479 = vmul.f32 %v1449, 1.442695
    %v1480 = vpow.pop %v1479
    %v1481 = vmul.f32 %v1450, 1.442695
    %v1482 = vpow.pop %v1481
    %v1483 = vsel %vm650, %v1452, 0.0
    %1484 = vadd.xlane.f32.xlu0 %v1483
    %v1485 = vpop.xlane.xlu0 %1484
    %v1486 = vsel %vm650, %v1454, 0.0
    %1487 = vadd.xlane.f32.xlu0 %v1486
    %v1488 = vpop.xlane.xlu0 %1487
    %v1489 = vsel %vm650, %v1456, 0.0
    %1490 = vadd.xlane.f32.xlu0 %v1489
    %v1491 = vpop.xlane.xlu0 %1490
    %v1492 = vsel %vm650, %v1458, 0.0
    %1493 = vadd.xlane.f32.xlu0 %v1492
    %v1494 = vpop.xlane.xlu0 %1493
    %v1495 = vsel %vm650, %v1460, 0.0
    %1496 = vadd.xlane.f32.xlu0 %v1495
    %v1497 = vpop.xlane.xlu0 %1496
    %v1498 = vsel %vm650, %v1462, 0.0
    %1499 = vadd.xlane.f32.xlu0 %v1498
    %v1500 = vpop.xlane.xlu0 %1499
    %v1501 = vsel %vm650, %v1464, 0.0
    %1502 = vadd.xlane.f32.xlu0 %v1501
    %v1503 = vpop.xlane.xlu0 %1502
    %v1504 = vsel %vm650, %v1466, 0.0
    %1505 = vadd.xlane.f32.xlu0 %v1504
    %v1506 = vpop.xlane.xlu0 %1505
    %v1507 = vsel %vm650, %v1468, 0.0
    %1508 = vadd.xlane.f32.xlu0 %v1507
    %v1509 = vpop.xlane.xlu0 %1508
    %v1510 = vsel %vm650, %v1470, 0.0
    %1511 = vadd.xlane.f32.xlu0 %v1510
    %v1512 = vpop.xlane.xlu0 %1511
    %v1513 = vsel %vm650, %v1472, 0.0
    %1514 = vadd.xlane.f32.xlu0 %v1513
    %v1515 = vpop.xlane.xlu0 %1514
    %v1516 = vsel %vm650, %v1474, 0.0
    %1517 = vadd.xlane.f32.xlu0 %v1516
    %v1518 = vpop.xlane.xlu0 %1517
    %v1519 = vsel %vm650, %v1476, 0.0
    %1520 = vadd.xlane.f32.xlu0 %v1519
    %v1521 = vpop.xlane.xlu0 %1520
    %v1522 = vsel %vm650, %v1478, 0.0
    %1523 = vadd.xlane.f32.xlu0 %v1522
    %v1524 = vpop.xlane.xlu0 %1523
    %v1525 = vsel %vm650, %v1480, 0.0
    %1526 = vadd.xlane.f32.xlu0 %v1525
    %v1527 = vpop.xlane.xlu0 %1526
    %v1528 = vsel %vm650, %v1482, 0.0
    %1529 = vadd.xlane.f32.xlu0 %v1528
    %v1530 = vpop.xlane.xlu0 %1529
    %v1531 = vrcp.pop %v1485
    %v1532 = vmul.f32 %v1452, %v1531
    %v1533 = vrcp.pop %v1488
    %v1534 = vmul.f32 %v1454, %v1533
    %v1535 = vrcp.pop %v1491
    %v1536 = vmul.f32 %v1456, %v1535
    %v1537 = vrcp.pop %v1494
    %v1538 = vmul.f32 %v1458, %v1537
    %v1539 = vrcp.pop %v1497
    %v1540 = vmul.f32 %v1460, %v1539
    %v1541 = vrcp.pop %v1500
    %v1542 = vmul.f32 %v1462, %v1541
    %v1543 = vrcp.pop %v1503
    %v1544 = vmul.f32 %v1464, %v1543
    %v1545 = vrcp.pop %v1506
    %v1546 = vmul.f32 %v1466, %v1545
    %v1547 = vrcp.pop %v1509
    %v1548 = vmul.f32 %v1468, %v1547
    %v1549 = vrcp.pop %v1512
    %v1550 = vmul.f32 %v1470, %v1549
    %v1551 = vrcp.pop %v1515
    %v1552 = vmul.f32 %v1472, %v1551
    %v1553 = vrcp.pop %v1518
    %v1554 = vmul.f32 %v1474, %v1553
    %v1555 = vrcp.pop %v1521
    %v1556 = vmul.f32 %v1476, %v1555
    %v1557 = vrcp.pop %v1524
    %v1558 = vmul.f32 %v1478, %v1557
    %v1559 = vrcp.pop %v1527
    %v1560 = vmul.f32 %v1480, %v1559
    %v1561 = vrcp.pop %v1530
    %v1562 = vmul.f32 %v1482, %v1561
    %v1563 = vpack.c.bf16 %v1532, %v1532
    %v1564 = vpack.c.bf16 %v1534, %v1534
    %v1565 = vpack.c.bf16 %v1536, %v1536
    %v1566 = vpack.c.bf16 %v1538, %v1538
    %v1567 = vpack.c.bf16 %v1540, %v1540
    %v1568 = vpack.c.bf16 %v1542, %v1542
    %v1569 = vpack.c.bf16 %v1544, %v1544
    %v1570 = vpack.c.bf16 %v1546, %v1546
    %v1571 = vpack.c.bf16 %v1548, %v1548
    %v1572 = vpack.c.bf16 %v1550, %v1550
    %v1573 = vpack.c.bf16 %v1552, %v1552
    %v1574 = vpack.c.bf16 %v1554, %v1554
    %v1575 = vpack.c.bf16 %v1556, %v1556
    %v1576 = vpack.c.bf16 %v1558, %v1558
    %v1577 = vpack.c.bf16 %v1560, %v1560
    %v1578 = vpack.c.bf16 %v1562, %v1562
    %vm1579 = vcmask 60416
    %1580 = vst.msk [vmem:[#allocation24] sm:$0xf] %vm1579, %v1563
    %1581 = vst.msk [vmem:[#allocation24 + $0x4] sm:$0xf] %vm1579, %v1564
    %1582 = vst.msk [vmem:[#allocation24 + $0x8] sm:$0xf] %vm1579, %v1565
    %1583 = vst.msk [vmem:[#allocation24 + $0xc] sm:$0xf] %vm1579, %v1566
    %1584 = vst.msk [vmem:[#allocation24 + $0x10] sm:$0xf] %vm1579, %v1567
    %1585 = vst.msk [vmem:[#allocation24 + $0x14] sm:$0xf] %vm1579, %v1568
    %1586 = vst.msk [vmem:[#allocation24 + $0x18] sm:$0xf] %vm1579, %v1569
    %1587 = vst.msk [vmem:[#allocation24 + $0x1c] sm:$0xf] %vm1579, %v1570
    %1588 = vst.msk [vmem:[#allocation24 + $0x20] sm:$0xf] %vm1579, %v1571
    %1589 = vst.msk [vmem:[#allocation24 + $0x24] sm:$0xf] %vm1579, %v1572
    %1590 = vst.msk [vmem:[#allocation24 + $0x28] sm:$0xf] %vm1579, %v1573
    %1591 = vst.msk [vmem:[#allocation24 + $0x2c] sm:$0xf] %vm1579, %v1574
    %1592 = vst.msk [vmem:[#allocation24 + $0x30] sm:$0xf] %vm1579, %v1575
    %1593 = vst.msk [vmem:[#allocation24 + $0x34] sm:$0xf] %vm1579, %v1576
    %1594 = vst.msk [vmem:[#allocation24 + $0x38] sm:$0xf] %vm1579, %v1577
    %1595 = vst.msk [vmem:[#allocation24 + $0x3c] sm:$0xf] %vm1579, %v1578
    %v1597 = vsel %vm650, %v1563, 0
    %vm1599 = vcmask 1043456
    %v1601 = vsel %vm1599, %v634, 0
    %1603 = vmatprep.subr.bf16.mxu0 0
    %1604 = vmatpush1.bf16.msra.mxu0 %v1601
    %1605 = vmatprep.subr.bf16.mxu0 0
    %1606 = vmatpush1.bf16.msra.mxu0 0
    %1607 = vmatprep.subr.bf16.mxu0 0
    %1608 = vmatpush1.bf16.msra.mxu0 0
    %1609 = vmatprep.subr.bf16.mxu0 0
    %1610 = vmatpush1.bf16.msra.mxu0 0
    %1611 = vmatprep.subr.bf16.mxu0 0
    %1612 = vmatpush1.bf16.msra.mxu0 0
    %1613 = vmatprep.subr.bf16.mxu0 0
    %1614 = vmatpush1.bf16.msra.mxu0 0
    %1615 = vmatprep.subr.bf16.mxu0 0
    %1616 = vmatpush1.bf16.msra.mxu0 0
    %1617 = vmatprep.subr.bf16.mxu0 0
    %1618 = vmatpush1.bf16.msra.mxu0 0
    %1619 = vmatprep.subr.bf16.mxu0 0
    %1620 = vmatpush1.bf16.msra.mxu0 0
    %1621 = vmatprep.subr.bf16.mxu0 0
    %1622 = vmatpush1.bf16.msra.mxu0 0
    %1623 = vmatprep.subr.bf16.mxu0 0
    %1624 = vmatpush1.bf16.msra.mxu0 0
    %1625 = vmatprep.subr.bf16.mxu0 0
    %1626 = vmatpush1.bf16.msra.mxu0 0
    %1627 = vmatprep.subr.bf16.mxu0 0
    %1628 = vmatpush1.bf16.msra.mxu0 0
    %1629 = vmatprep.subr.bf16.mxu0 0
    %1630 = vmatpush1.bf16.msra.mxu0 0
    %1631 = vmatprep.subr.bf16.mxu0 0
    %1632 = vmatpush1.bf16.msra.mxu0 0
    %1633 = vmatprep.subr.bf16.mxu0 0
    %1634 = vmatpush1.bf16.msra.mxu0 0
    %1635 = vmatprep.mubr.bf16.mxu0 0
    %1636 = vmatmul.mubr.bf16.gmra.mrb[0].mxu0 %v1597
    %v1637 = vpop.f32.mrb[0].mxu0
    %v1638 = vadd.f32 0.0, %v1637
    %v1639 = vpop.f32.mrb[0].mxu0
    %v1640 = vpop.f32.mrb[0].mxu0
    %v1641 = vpop.f32.mrb[0].mxu0
    %1642 = vdwg.mxu0
    %v1644 = vsel %vm650, %v1564, 0
    %v1647 = vsel %vm1599, %v635, 0
    %1649 = vmatprep.subr.bf16.mxu0 0
    %1650 = vmatpush1.bf16.msra.mxu0 %v1647
    %1651 = vmatprep.subr.bf16.mxu0 0
    %1652 = vmatpush1.bf16.msra.mxu0 0
    %1653 = vmatprep.subr.bf16.mxu0 0
    %1654 = vmatpush1.bf16.msra.mxu0 0
    %1655 = vmatprep.subr.bf16.mxu0 0
    %1656 = vmatpush1.bf16.msra.mxu0 0
    %1657 = vmatprep.subr.bf16.mxu0 0
    %1658 = vmatpush1.bf16.msra.mxu0 0
    %1659 = vmatprep.subr.bf16.mxu0 0
    %1660 = vmatpush1.bf16.msra.mxu0 0
    %1661 = vmatprep.subr.bf16.mxu0 0
    %1662 = vmatpush1.bf16.msra.mxu0 0
    %1663 = vmatprep.subr.bf16.mxu0 0
    %1664 = vmatpush1.bf16.msra.mxu0 0
    %1665 = vmatprep.subr.bf16.mxu0 0
    %1666 = vmatpush1.bf16.msra.mxu0 0
    %1667 = vmatprep.subr.bf16.mxu0 0
    %1668 = vmatpush1.bf16.msra.mxu0 0
    %1669 = vmatprep.subr.bf16.mxu0 0
    %1670 = vmatpush1.bf16.msra.mxu0 0
    %1671 = vmatprep.subr.bf16.mxu0 0
    %1672 = vmatpush1.bf16.msra.mxu0 0
    %1673 = vmatprep.subr.bf16.mxu0 0
    %1674 = vmatpush1.bf16.msra.mxu0 0
    %1675 = vmatprep.subr.bf16.mxu0 0
    %1676 = vmatpush1.bf16.msra.mxu0 0
    %1677 = vmatprep.subr.bf16.mxu0 0
    %1678 = vmatpush1.bf16.msra.mxu0 0
    %1679 = vmatprep.subr.bf16.mxu0 0
    %1680 = vmatpush1.bf16.msra.mxu0 0
    %1681 = vmatprep.mubr.bf16.mxu0 0
    %1682 = vmatmul.mubr.bf16.gmra.mrb[0].mxu0 %v1644
    %v1683 = vpop.f32.mrb[0].mxu0
    %v1684 = vadd.f32 0.0, %v1683
    %v1685 = vpop.f32.mrb[0].mxu0
    %v1686 = vpop.f32.mrb[0].mxu0
    %v1687 = vpop.f32.mrb[0].mxu0
    %1688 = vdwg.mxu0
    %v1690 = vsel %vm650, %v1565, 0
    %v1693 = vsel %vm1599, %v636, 0
    %1695 = vmatprep.subr.bf16.mxu0 0
    %1696 = vmatpush1.bf16.msra.mxu0 %v1693
    %1697 = vmatprep.subr.bf16.mxu0 0
    %1698 = vmatpush1.bf16.msra.mxu0 0
    %1699 = vmatprep.subr.bf16.mxu0 0
    %1700 = vmatpush1.bf16.msra.mxu0 0
    %1701 = vmatprep.subr.bf16.mxu0 0
    %1702 = vmatpush1.bf16.msra.mxu0 0
    %1703 = vmatprep.subr.bf16.mxu0 0
    %1704 = vmatpush1.bf16.msra.mxu0 0
    %1705 = vmatprep.subr.bf16.mxu0 0
    %1706 = vmatpush1.bf16.msra.mxu0 0
    %1707 = vmatprep.subr.bf16.mxu0 0
    %1708 = vmatpush1.bf16.msra.mxu0 0
    %1709 = vmatprep.subr.bf16.mxu0 0
    %1710 = vmatpush1.bf16.msra.mxu0 0
    %1711 = vmatprep.subr.bf16.mxu0 0
    %1712 = vmatpush1.bf16.msra.mxu0 0
    %1713 = vmatprep.subr.bf16.mxu0 0
    %1714 = vmatpush1.bf16.msra.mxu0 0
    %1715 = vmatprep.subr.bf16.mxu0 0
    %1716 = vmatpush1.bf16.msra.mxu0 0
    %1717 = vmatprep.subr.bf16.mxu0 0
    %1718 = vmatpush1.bf16.msra.mxu0 0
    %1719 = vmatprep.subr.bf16.mxu0 0
    %1720 = vmatpush1.bf16.msra.mxu0 0
    %1721 = vmatprep.subr.bf16.mxu0 0
    %1722 = vmatpush1.bf16.msra.mxu0 0
    %1723 = vmatprep.subr.bf16.mxu0 0
    %1724 = vmatpush1.bf16.msra.mxu0 0
    %1725 = vmatprep.subr.bf16.mxu0 0
    %1726 = vmatpush1.bf16.msra.mxu0 0
    %1727 = vmatprep.mubr.bf16.mxu0 0
    %1728 = vmatmul.mubr.bf16.gmra.mrb[0].mxu0 %v1690
    %v1729 = vpop.f32.mrb[0].mxu0
    %v1730 = vadd.f32 0.0, %v1729
    %v1731 = vpop.f32.mrb[0].mxu0
    %v1732 = vpop.f32.mrb[0].mxu0
    %v1733 = vpop.f32.mrb[0].mxu0
    %1734 = vdwg.mxu0
    %v1736 = vsel %vm650, %v1566, 0
    %v1739 = vsel %vm1599, %v637, 0
    %1741 = vmatprep.subr.bf16.mxu0 0
    %1742 = vmatpush1.bf16.msra.mxu0 %v1739
    %1743 = vmatprep.subr.bf16.mxu0 0
    %1744 = vmatpush1.bf16.msra.mxu0 0
    %1745 = vmatprep.subr.bf16.mxu0 0
    %1746 = vmatpush1.bf16.msra.mxu0 0
    %1747 = vmatprep.subr.bf16.mxu0 0
    %1748 = vmatpush1.bf16.msra.mxu0 0
    %1749 = vmatprep.subr.bf16.mxu0 0
    %1750 = vmatpush1.bf16.msra.mxu0 0
    %1751 = vmatprep.subr.bf16.mxu0 0
    %1752 = vmatpush1.bf16.msra.mxu0 0
    %1753 = vmatprep.subr.bf16.mxu0 0
    %1754 = vmatpush1.bf16.msra.mxu0 0
    %1755 = vmatprep.subr.bf16.mxu0 0
    %1756 = vmatpush1.bf16.msra.mxu0 0
    %1757 = vmatprep.subr.bf16.mxu0 0
    %1758 = vmatpush1.bf16.msra.mxu0 0
    %1759 = vmatprep.subr.bf16.mxu0 0
    %1760 = vmatpush1.bf16.msra.mxu0 0
    %1761 = vmatprep.subr.bf16.mxu0 0
    %1762 = vmatpush1.bf16.msra.mxu0 0
    %1763 = vmatprep.subr.bf16.mxu0 0
    %1764 = vmatpush1.bf16.msra.mxu0 0
    %1765 = vmatprep.subr.bf16.mxu0 0
    %1766 = vmatpush1.bf16.msra.mxu0 0
    %1767 = vmatprep.subr.bf16.mxu0 0
    %1768 = vmatpush1.bf16.msra.mxu0 0
    %1769 = vmatprep.subr.bf16.mxu0 0
    %1770 = vmatpush1.bf16.msra.mxu0 0
    %1771 = vmatprep.subr.bf16.mxu0 0
    %1772 = vmatpush1.bf16.msra.mxu0 0
    %1773 = vmatprep.mubr.bf16.mxu0 0
    %1774 = vmatmul.mubr.bf16.gmra.mrb[0].mxu0 %v1736
    %v1775 = vpop.f32.mrb[0].mxu0
    %v1776 = vadd.f32 0.0, %v1775
    %v1777 = vpop.f32.mrb[0].mxu0
    %v1778 = vpop.f32.mrb[0].mxu0
    %v1779 = vpop.f32.mrb[0].mxu0
    %1780 = vdwg.mxu0
    %v1782 = vsel %vm650, %v1567, 0
    %v1785 = vsel %vm1599, %v638, 0
    %1787 = vmatprep.subr.bf16.mxu0 0
    %1788 = vmatpush1.bf16.msra.mxu0 %v1785
    %1789 = vmatprep.subr.bf16.mxu0 0
    %1790 = vmatpush1.bf16.msra.mxu0 0
    %1791 = vmatprep.subr.bf16.mxu0 0
    %1792 = vmatpush1.bf16.msra.mxu0 0
    %1793 = vmatprep.subr.bf16.mxu0 0
    %1794 = vmatpush1.bf16.msra.mxu0 0
    %1795 = vmatprep.subr.bf16.mxu0 0
    %1796 = vmatpush1.bf16.msra.mxu0 0
    %1797 = vmatprep.subr.bf16.mxu0 0
    %1798 = vmatpush1.bf16.msra.mxu0 0
    %1799 = vmatprep.subr.bf16.mxu0 0
    %1800 = vmatpush1.bf16.msra.mxu0 0
    %1801 = vmatprep.subr.bf16.mxu0 0
    %1802 = vmatpush1.bf16.msra.mxu0 0
    %1803 = vmatprep.subr.bf16.mxu0 0
    %1804 = vmatpush1.bf16.msra.mxu0 0
    %1805 = vmatprep.subr.bf16.mxu0 0
    %1806 = vmatpush1.bf16.msra.mxu0 0
    %1807 = vmatprep.subr.bf16.mxu0 0
    %1808 = vmatpush1.bf16.msra.mxu0 0
    %1809 = vmatprep.subr.bf16.mxu0 0
    %1810 = vmatpush1.bf16.msra.mxu0 0
    %1811 = vmatprep.subr.bf16.mxu0 0
    %1812 = vmatpush1.bf16.msra.mxu0 0
    %1813 = vmatprep.subr.bf16.mxu0 0
    %1814 = vmatpush1.bf16.msra.mxu0 0
    %1815 = vmatprep.subr.bf16.mxu0 0
    %1816 = vmatpush1.bf16.msra.mxu0 0
    %1817 = vmatprep.subr.bf16.mxu0 0
    %1818 = vmatpush1.bf16.msra.mxu0 0
    %1819 = vmatprep.mubr.bf16.mxu0 0
    %1820 = vmatmul.mubr.bf16.gmra.mrb[0].mxu0 %v1782
    %v1821 = vpop.f32.mrb[0].mxu0
    %v1822 = vadd.f32 0.0, %v1821
    %v1823 = vpop.f32.mrb[0].mxu0
    %v1824 = vpop.f32.mrb[0].mxu0
    %v1825 = vpop.f32.mrb[0].mxu0
    %1826 = vdwg.mxu0
    %v1828 = vsel %vm650, %v1568, 0
    %v1831 = vsel %vm1599, %v639, 0
    %1833 = vmatprep.subr.bf16.mxu0 0
    %1834 = vmatpush1.bf16.msra.mxu0 %v1831
    %1835 = vmatprep.subr.bf16.mxu0 0
    %1836 = vmatpush1.bf16.msra.mxu0 0
    %1837 = vmatprep.subr.bf16.mxu0 0
    %1838 = vmatpush1.bf16.msra.mxu0 0
    %1839 = vmatprep.subr.bf16.mxu0 0
    %1840 = vmatpush1.bf16.msra.mxu0 0
    %1841 = vmatprep.subr.bf16.mxu0 0
    %1842 = vmatpush1.bf16.msra.mxu0 0
    %1843 = vmatprep.subr.bf16.mxu0 0
    %1844 = vmatpush1.bf16.msra.mxu0 0
    %1845 = vmatprep.subr.bf16.mxu0 0
    %1846 = vmatpush1.bf16.msra.mxu0 0
    %1847 = vmatprep.subr.bf16.mxu0 0
    %1848 = vmatpush1.bf16.msra.mxu0 0
    %1849 = vmatprep.subr.bf16.mxu0 0
    %1850 = vmatpush1.bf16.msra.mxu0 0
    %1851 = vmatprep.subr.bf16.mxu0 0
    %1852 = vmatpush1.bf16.msra.mxu0 0
    %1853 = vmatprep.subr.bf16.mxu0 0
    %1854 = vmatpush1.bf16.msra.mxu0 0
    %1855 = vmatprep.subr.bf16.mxu0 0
    %1856 = vmatpush1.bf16.msra.mxu0 0
    %1857 = vmatprep.subr.bf16.mxu0 0
    %1858 = vmatpush1.bf16.msra.mxu0 0
    %1859 = vmatprep.subr.bf16.mxu0 0
    %1860 = vmatpush1.bf16.msra.mxu0 0
    %1861 = vmatprep.subr.bf16.mxu0 0
    %1862 = vmatpush1.bf16.msra.mxu0 0
    %1863 = vmatprep.subr.bf16.mxu0 0
    %1864 = vmatpush1.bf16.msra.mxu0 0
    %1865 = vmatprep.mubr.bf16.mxu0 0
    %1866 = vmatmul.mubr.bf16.gmra.mrb[0].mxu0 %v1828
    %v1867 = vpop.f32.mrb[0].mxu0
    %v1868 = vadd.f32 0.0, %v1867
    %v1869 = vpop.f32.mrb[0].mxu0
    %v1870 = vpop.f32.mrb[0].mxu0
    %v1871 = vpop.f32.mrb[0].mxu0
    %1872 = vdwg.mxu0
    %v1874 = vsel %vm650, %v1569, 0
    %v1877 = vsel %vm1599, %v640, 0
    %1879 = vmatprep.subr.bf16.mxu0 0
    %1880 = vmatpush1.bf16.msra.mxu0 %v1877
    %1881 = vmatprep.subr.bf16.mxu0 0
    %1882 = vmatpush1.bf16.msra.mxu0 0
    %1883 = vmatprep.subr.bf16.mxu0 0
    %1884 = vmatpush1.bf16.msra.mxu0 0
    %1885 = vmatprep.subr.bf16.mxu0 0
    %1886 = vmatpush1.bf16.msra.mxu0 0
    %1887 = vmatprep.subr.bf16.mxu0 0
    %1888 = vmatpush1.bf16.msra.mxu0 0
    %1889 = vmatprep.subr.bf16.mxu0 0
    %1890 = vmatpush1.bf16.msra.mxu0 0
    %1891 = vmatprep.subr.bf16.mxu0 0
    %1892 = vmatpush1.bf16.msra.mxu0 0
    %1893 = vmatprep.subr.bf16.mxu0 0
    %1894 = vmatpush1.bf16.msra.mxu0 0
    %1895 = vmatprep.subr.bf16.mxu0 0
    %1896 = vmatpush1.bf16.msra.mxu0 0
    %1897 = vmatprep.subr.bf16.mxu0 0
    %1898 = vmatpush1.bf16.msra.mxu0 0
    %1899 = vmatprep.subr.bf16.mxu0 0
    %1900 = vmatpush1.bf16.msra.mxu0 0
    %1901 = vmatprep.subr.bf16.mxu0 0
    %1902 = vmatpush1.bf16.msra.mxu0 0
    %1903 = vmatprep.subr.bf16.mxu0 0
    %1904 = vmatpush1.bf16.msra.mxu0 0
    %1905 = vmatprep.subr.bf16.mxu0 0
    %1906 = vmatpush1.bf16.msra.mxu0 0
    %1907 = vmatprep.subr.bf16.mxu0 0
    %1908 = vmatpush1.bf16.msra.mxu0 0
    %1909 = vmatprep.subr.bf16.mxu0 0
    %1910 = vmatpush1.bf16.msra.mxu0 0
    %1911 = vmatprep.mubr.bf16.mxu0 0
    %1912 = vmatmul.mubr.bf16.gmra.mrb[0].mxu0 %v1874
    %v1913 = vpop.f32.mrb[0].mxu0
    %v1914 = vadd.f32 0.0, %v1913
    %v1915 = vpop.f32.mrb[0].mxu0
    %v1916 = vpop.f32.mrb[0].mxu0
    %v1917 = vpop.f32.mrb[0].mxu0
    %1918 = vdwg.mxu0
    %v1920 = vsel %vm650, %v1570, 0
    %v1923 = vsel %vm1599, %v641, 0
    %1925 = vmatprep.subr.bf16.mxu0 0
    %1926 = vmatpush1.bf16.msra.mxu0 %v1923
    %1927 = vmatprep.subr.bf16.mxu0 0
    %1928 = vmatpush1.bf16.msra.mxu0 0
    %1929 = vmatprep.subr.bf16.mxu0 0
    %1930 = vmatpush1.bf16.msra.mxu0 0
    %1931 = vmatprep.subr.bf16.mxu0 0
    %1932 = vmatpush1.bf16.msra.mxu0 0
    %1933 = vmatprep.subr.bf16.mxu0 0
    %1934 = vmatpush1.bf16.msra.mxu0 0
    %1935 = vmatprep.subr.bf16.mxu0 0
    %1936 = vmatpush1.bf16.msra.mxu0 0
    %1937 = vmatprep.subr.bf16.mxu0 0
    %1938 = vmatpush1.bf16.msra.mxu0 0
    %1939 = vmatprep.subr.bf16.mxu0 0
    %1940 = vmatpush1.bf16.msra.mxu0 0
    %1941 = vmatprep.subr.bf16.mxu0 0
    %1942 = vmatpush1.bf16.msra.mxu0 0
    %1943 = vmatprep.subr.bf16.mxu0 0
    %1944 = vmatpush1.bf16.msra.mxu0 0
    %1945 = vmatprep.subr.bf16.mxu0 0
    %1946 = vmatpush1.bf16.msra.mxu0 0
    %1947 = vmatprep.subr.bf16.mxu0 0
    %1948 = vmatpush1.bf16.msra.mxu0 0
    %1949 = vmatprep.subr.bf16.mxu0 0
    %1950 = vmatpush1.bf16.msra.mxu0 0
    %1951 = vmatprep.subr.bf16.mxu0 0
    %1952 = vmatpush1.bf16.msra.mxu0 0
    %1953 = vmatprep.subr.bf16.mxu0 0
    %1954 = vmatpush1.bf16.msra.mxu0 0
    %1955 = vmatprep.subr.bf16.mxu0 0
    %1956 = vmatpush1.bf16.msra.mxu0 0
    %1957 = vmatprep.mubr.bf16.mxu0 0
    %1958 = vmatmul.mubr.bf16.gmra.mrb[0].mxu0 %v1920
    %v1959 = vpop.f32.mrb[0].mxu0
    %v1960 = vadd.f32 0.0, %v1959
    %v1961 = vpop.f32.mrb[0].mxu0
    %v1962 = vpop.f32.mrb[0].mxu0
    %v1963 = vpop.f32.mrb[0].mxu0
    %1964 = vdwg.mxu0
    %v1966 = vsel %vm650, %v1571, 0
    %v1969 = vsel %vm1599, %v642, 0
    %1971 = vmatprep.subr.bf16.mxu0 0
    %1972 = vmatpush1.bf16.msra.mxu0 %v1969
    %1973 = vmatprep.subr.bf16.mxu0 0
    %1974 = vmatpush1.bf16.msra.mxu0 0
    %1975 = vmatprep.subr.bf16.mxu0 0
    %1976 = vmatpush1.bf16.msra.mxu0 0
    %1977 = vmatprep.subr.bf16.mxu0 0
    %1978 = vmatpush1.bf16.msra.mxu0 0
    %1979 = vmatprep.subr.bf16.mxu0 0
    %1980 = vmatpush1.bf16.msra.mxu0 0
    %1981 = vmatprep.subr.bf16.mxu0 0
    %1982 = vmatpush1.bf16.msra.mxu0 0
    %1983 = vmatprep.subr.bf16.mxu0 0
    %1984 = vmatpush1.bf16.msra.mxu0 0
    %1985 = vmatprep.subr.bf16.mxu0 0
    %1986 = vmatpush1.bf16.msra.mxu0 0
    %1987 = vmatprep.subr.bf16.mxu0 0
    %1988 = vmatpush1.bf16.msra.mxu0 0
    %1989 = vmatprep.subr.bf16.mxu0 0
    %1990 = vmatpush1.bf16.msra.mxu0 0
    %1991 = vmatprep.subr.bf16.mxu0 0
    %1992 = vmatpush1.bf16.msra.mxu0 0
    %1993 = vmatprep.subr.bf16.mxu0 0
    %1994 = vmatpush1.bf16.msra.mxu0 0
    %1995 = vmatprep.subr.bf16.mxu0 0
    %1996 = vmatpush1.bf16.msra.mxu0 0
    %1997 = vmatprep.subr.bf16.mxu0 0
    %1998 = vmatpush1.bf16.msra.mxu0 0
    %1999 = vmatprep.subr.bf16.mxu0 0
    %2000 = vmatpush1.bf16.msra.mxu0 0
    %2001 = vmatprep.subr.bf16.mxu0 0
    %2002 = vmatpush1.bf16.msra.mxu0 0
    %2003 = vmatprep.mubr.bf16.mxu0 0
    %2004 = vmatmul.mubr.bf16.gmra.mrb[0].mxu0 %v1966
    %v2005 = vpop.f32.mrb[0].mxu0
    %v2006 = vadd.f32 0.0, %v2005
    %v2007 = vpop.f32.mrb[0].mxu0
    %v2008 = vpop.f32.mrb[0].mxu0
    %v2009 = vpop.f32.mrb[0].mxu0
    %2010 = vdwg.mxu0
    %v2012 = vsel %vm650, %v1572, 0
    %v2015 = vsel %vm1599, %v643, 0
    %2017 = vmatprep.subr.bf16.mxu0 0
    %2018 = vmatpush1.bf16.msra.mxu0 %v2015
    %2019 = vmatprep.subr.bf16.mxu0 0
    %2020 = vmatpush1.bf16.msra.mxu0 0
    %2021 = vmatprep.subr.bf16.mxu0 0
    %2022 = vmatpush1.bf16.msra.mxu0 0
    %2023 = vmatprep.subr.bf16.mxu0 0
    %2024 = vmatpush1.bf16.msra.mxu0 0
    %2025 = vmatprep.subr.bf16.mxu0 0
    %2026 = vmatpush1.bf16.msra.mxu0 0
    %2027 = vmatprep.subr.bf16.mxu0 0
    %2028 = vmatpush1.bf16.msra.mxu0 0
    %2029 = vmatprep.subr.bf16.mxu0 0
    %2030 = vmatpush1.bf16.msra.mxu0 0
    %2031 = vmatprep.subr.bf16.mxu0 0
    %2032 = vmatpush1.bf16.msra.mxu0 0
    %2033 = vmatprep.subr.bf16.mxu0 0
    %2034 = vmatpush1.bf16.msra.mxu0 0
    %2035 = vmatprep.subr.bf16.mxu0 0
    %2036 = vmatpush1.bf16.msra.mxu0 0
    %2037 = vmatprep.subr.bf16.mxu0 0
    %2038 = vmatpush1.bf16.msra.mxu0 0
    %2039 = vmatprep.subr.bf16.mxu0 0
    %2040 = vmatpush1.bf16.msra.mxu0 0
    %2041 = vmatprep.subr.bf16.mxu0 0
    %2042 = vmatpush1.bf16.msra.mxu0 0
    %2043 = vmatprep.subr.bf16.mxu0 0
    %2044 = vmatpush1.bf16.msra.mxu0 0
    %2045 = vmatprep.subr.bf16.mxu0 0
    %2046 = vmatpush1.bf16.msra.mxu0 0
    %2047 = vmatprep.subr.bf16.mxu0 0
    %2048 = vmatpush1.bf16.msra.mxu0 0
    %2049 = vmatprep.mubr.bf16.mxu0 0
    %2050 = vmatmul.mubr.bf16.gmra.mrb[0].mxu0 %v2012
    %v2051 = vpop.f32.mrb[0].mxu0
    %v2052 = vadd.f32 0.0, %v2051
    %v2053 = vpop.f32.mrb[0].mxu0
    %v2054 = vpop.f32.mrb[0].mxu0
    %v2055 = vpop.f32.mrb[0].mxu0
    %2056 = vdwg.mxu0
    %v2058 = vsel %vm650, %v1573, 0
    %v2061 = vsel %vm1599, %v644, 0
    %2063 = vmatprep.subr.bf16.mxu0 0
    %2064 = vmatpush1.bf16.msra.mxu0 %v2061
    %2065 = vmatprep.subr.bf16.mxu0 0
    %2066 = vmatpush1.bf16.msra.mxu0 0
    %2067 = vmatprep.subr.bf16.mxu0 0
    %2068 = vmatpush1.bf16.msra.mxu0 0
    %2069 = vmatprep.subr.bf16.mxu0 0
    %2070 = vmatpush1.bf16.msra.mxu0 0
    %2071 = vmatprep.subr.bf16.mxu0 0
    %2072 = vmatpush1.bf16.msra.mxu0 0
    %2073 = vmatprep.subr.bf16.mxu0 0
    %2074 = vmatpush1.bf16.msra.mxu0 0
    %2075 = vmatprep.subr.bf16.mxu0 0
    %2076 = vmatpush1.bf16.msra.mxu0 0
    %2077 = vmatprep.subr.bf16.mxu0 0
    %2078 = vmatpush1.bf16.msra.mxu0 0
    %2079 = vmatprep.subr.bf16.mxu0 0
    %2080 = vmatpush1.bf16.msra.mxu0 0
    %2081 = vmatprep.subr.bf16.mxu0 0
    %2082 = vmatpush1.bf16.msra.mxu0 0
    %2083 = vmatprep.subr.bf16.mxu0 0
    %2084 = vmatpush1.bf16.msra.mxu0 0
    %2085 = vmatprep.subr.bf16.mxu0 0
    %2086 = vmatpush1.bf16.msra.mxu0 0
    %2087 = vmatprep.subr.bf16.mxu0 0
    %2088 = vmatpush1.bf16.msra.mxu0 0
    %2089 = vmatprep.subr.bf16.mxu0 0
    %2090 = vmatpush1.bf16.msra.mxu0 0
    %2091 = vmatprep.subr.bf16.mxu0 0
    %2092 = vmatpush1.bf16.msra.mxu0 0
    %2093 = vmatprep.subr.bf16.mxu0 0
    %2094 = vmatpush1.bf16.msra.mxu0 0
    %2095 = vmatprep.mubr.bf16.mxu0 0
    %2096 = vmatmul.mubr.bf16.gmra.mrb[0].mxu0 %v2058
    %v2097 = vpop.f32.mrb[0].mxu0
    %v2098 = vadd.f32 0.0, %v2097
    %v2099 = vpop.f32.mrb[0].mxu0
    %v2100 = vpop.f32.mrb[0].mxu0
    %v2101 = vpop.f32.mrb[0].mxu0
    %2102 = vdwg.mxu0
    %v2104 = vsel %vm650, %v1574, 0
    %v2107 = vsel %vm1599, %v645, 0
    %2109 = vmatprep.subr.bf16.mxu0 0
    %2110 = vmatpush1.bf16.msra.mxu0 %v2107
    %2111 = vmatprep.subr.bf16.mxu0 0
    %2112 = vmatpush1.bf16.msra.mxu0 0
    %2113 = vmatprep.subr.bf16.mxu0 0
    %2114 = vmatpush1.bf16.msra.mxu0 0
    %2115 = vmatprep.subr.bf16.mxu0 0
    %2116 = vmatpush1.bf16.msra.mxu0 0
    %2117 = vmatprep.subr.bf16.mxu0 0
    %2118 = vmatpush1.bf16.msra.mxu0 0
    %2119 = vmatprep.subr.bf16.mxu0 0
    %2120 = vmatpush1.bf16.msra.mxu0 0
    %2121 = vmatprep.subr.bf16.mxu0 0
    %2122 = vmatpush1.bf16.msra.mxu0 0
    %2123 = vmatprep.subr.bf16.mxu0 0
    %2124 = vmatpush1.bf16.msra.mxu0 0
    %2125 = vmatprep.subr.bf16.mxu0 0
    %2126 = vmatpush1.bf16.msra.mxu0 0
    %2127 = vmatprep.subr.bf16.mxu0 0
    %2128 = vmatpush1.bf16.msra.mxu0 0
    %2129 = vmatprep.subr.bf16.mxu0 0
    %2130 = vmatpush1.bf16.msra.mxu0 0
    %2131 = vmatprep.subr.bf16.mxu0 0
    %2132 = vmatpush1.bf16.msra.mxu0 0
    %2133 = vmatprep.subr.bf16.mxu0 0
    %2134 = vmatpush1.bf16.msra.mxu0 0
    %2135 = vmatprep.subr.bf16.mxu0 0
    %2136 = vmatpush1.bf16.msra.mxu0 0
    %2137 = vmatprep.subr.bf16.mxu0 0
    %2138 = vmatpush1.bf16.msra.mxu0 0
    %2139 = vmatprep.subr.bf16.mxu0 0
    %2140 = vmatpush1.bf16.msra.mxu0 0
    %2141 = vmatprep.mubr.bf16.mxu0 0
    %2142 = vmatmul.mubr.bf16.gmra.mrb[0].mxu0 %v2104
    %v2143 = vpop.f32.mrb[0].mxu0
    %v2144 = vadd.f32 0.0, %v2143
    %v2145 = vpop.f32.mrb[0].mxu0
    %v2146 = vpop.f32.mrb[0].mxu0
    %v2147 = vpop.f32.mrb[0].mxu0
    %2148 = vdwg.mxu0
    %v2150 = vsel %vm650, %v1575, 0
    %v2153 = vsel %vm1599, %v646, 0
    %2155 = vmatprep.subr.bf16.mxu0 0
    %2156 = vmatpush1.bf16.msra.mxu0 %v2153
    %2157 = vmatprep.subr.bf16.mxu0 0
    %2158 = vmatpush1.bf16.msra.mxu0 0
    %2159 = vmatprep.subr.bf16.mxu0 0
    %2160 = vmatpush1.bf16.msra.mxu0 0
    %2161 = vmatprep.subr.bf16.mxu0 0
    %2162 = vmatpush1.bf16.msra.mxu0 0
    %2163 = vmatprep.subr.bf16.mxu0 0
    %2164 = vmatpush1.bf16.msra.mxu0 0
    %2165 = vmatprep.subr.bf16.mxu0 0
    %2166 = vmatpush1.bf16.msra.mxu0 0
    %2167 = vmatprep.subr.bf16.mxu0 0
    %2168 = vmatpush1.bf16.msra.mxu0 0
    %2169 = vmatprep.subr.bf16.mxu0 0
    %2170 = vmatpush1.bf16.msra.mxu0 0
    %2171 = vmatprep.subr.bf16.mxu0 0
    %2172 = vmatpush1.bf16.msra.mxu0 0
    %2173 = vmatprep.subr.bf16.mxu0 0
    %2174 = vmatpush1.bf16.msra.mxu0 0
    %2175 = vmatprep.subr.bf16.mxu0 0
    %2176 = vmatpush1.bf16.msra.mxu0 0
    %2177 = vmatprep.subr.bf16.mxu0 0
    %2178 = vmatpush1.bf16.msra.mxu0 0
    %2179 = vmatprep.subr.bf16.mxu0 0
    %2180 = vmatpush1.bf16.msra.mxu0 0
    %2181 = vmatprep.subr.bf16.mxu0 0
    %2182 = vmatpush1.bf16.msra.mxu0 0
    %2183 = vmatprep.subr.bf16.mxu0 0
    %2184 = vmatpush1.bf16.msra.mxu0 0
    %2185 = vmatprep.subr.bf16.mxu0 0
    %2186 = vmatpush1.bf16.msra.mxu0 0
    %2187 = vmatprep.mubr.bf16.mxu0 0
    %2188 = vmatmul.mubr.bf16.gmra.mrb[0].mxu0 %v2150
    %v2189 = vpop.f32.mrb[0].mxu0
    %v2190 = vadd.f32 0.0, %v2189
    %v2191 = vpop.f32.mrb[0].mxu0
    %v2192 = vpop.f32.mrb[0].mxu0
    %v2193 = vpop.f32.mrb[0].mxu0
    %2194 = vdwg.mxu0
    %v2196 = vsel %vm650, %v1576, 0
    %v2199 = vsel %vm1599, %v647, 0
    %2201 = vmatprep.subr.bf16.mxu0 0
    %2202 = vmatpush1.bf16.msra.mxu0 %v2199
    %2203 = vmatprep.subr.bf16.mxu0 0
    %2204 = vmatpush1.bf16.msra.mxu0 0
    %2205 = vmatprep.subr.bf16.mxu0 0
    %2206 = vmatpush1.bf16.msra.mxu0 0
    %2207 = vmatprep.subr.bf16.mxu0 0
    %2208 = vmatpush1.bf16.msra.mxu0 0
    %2209 = vmatprep.subr.bf16.mxu0 0
    %2210 = vmatpush1.bf16.msra.mxu0 0
    %2211 = vmatprep.subr.bf16.mxu0 0
    %2212 = vmatpush1.bf16.msra.mxu0 0
    %2213 = vmatprep.subr.bf16.mxu0 0
    %2214 = vmatpush1.bf16.msra.mxu0 0
    %2215 = vmatprep.subr.bf16.mxu0 0
    %2216 = vmatpush1.bf16.msra.mxu0 0
    %2217 = vmatprep.subr.bf16.mxu0 0
    %2218 = vmatpush1.bf16.msra.mxu0 0
    %2219 = vmatprep.subr.bf16.mxu0 0
    %2220 = vmatpush1.bf16.msra.mxu0 0
    %2221 = vmatprep.subr.bf16.mxu0 0
    %2222 = vmatpush1.bf16.msra.mxu0 0
    %2223 = vmatprep.subr.bf16.mxu0 0
    %2224 = vmatpush1.bf16.msra.mxu0 0
    %2225 = vmatprep.subr.bf16.mxu0 0
    %2226 = vmatpush1.bf16.msra.mxu0 0
    %2227 = vmatprep.subr.bf16.mxu0 0
    %2228 = vmatpush1.bf16.msra.mxu0 0
    %2229 = vmatprep.subr.bf16.mxu0 0
    %2230 = vmatpush1.bf16.msra.mxu0 0
    %2231 = vmatprep.subr.bf16.mxu0 0
    %2232 = vmatpush1.bf16.msra.mxu0 0
    %2233 = vmatprep.mubr.bf16.mxu0 0
    %2234 = vmatmul.mubr.bf16.gmra.mrb[0].mxu0 %v2196
    %v2235 = vpop.f32.mrb[0].mxu0
    %v2236 = vadd.f32 0.0, %v2235
    %v2237 = vpop.f32.mrb[0].mxu0
    %v2238 = vpop.f32.mrb[0].mxu0
    %v2239 = vpop.f32.mrb[0].mxu0
    %2240 = vdwg.mxu0
    %v2242 = vsel %vm650, %v1577, 0
    %v2245 = vsel %vm1599, %v648, 0
    %2247 = vmatprep.subr.bf16.mxu0 0
    %2248 = vmatpush1.bf16.msra.mxu0 %v2245
    %2249 = vmatprep.subr.bf16.mxu0 0
    %2250 = vmatpush1.bf16.msra.mxu0 0
    %2251 = vmatprep.subr.bf16.mxu0 0
    %2252 = vmatpush1.bf16.msra.mxu0 0
    %2253 = vmatprep.subr.bf16.mxu0 0
    %2254 = vmatpush1.bf16.msra.mxu0 0
    %2255 = vmatprep.subr.bf16.mxu0 0
    %2256 = vmatpush1.bf16.msra.mxu0 0
    %2257 = vmatprep.subr.bf16.mxu0 0
    %2258 = vmatpush1.bf16.msra.mxu0 0
    %2259 = vmatprep.subr.bf16.mxu0 0
    %2260 = vmatpush1.bf16.msra.mxu0 0
    %2261 = vmatprep.subr.bf16.mxu0 0
    %2262 = vmatpush1.bf16.msra.mxu0 0
    %2263 = vmatprep.subr.bf16.mxu0 0
    %2264 = vmatpush1.bf16.msra.mxu0 0
    %2265 = vmatprep.subr.bf16.mxu0 0
    %2266 = vmatpush1.bf16.msra.mxu0 0
    %2267 = vmatprep.subr.bf16.mxu0 0
    %2268 = vmatpush1.bf16.msra.mxu0 0
    %2269 = vmatprep.subr.bf16.mxu0 0
    %2270 = vmatpush1.bf16.msra.mxu0 0
    %2271 = vmatprep.subr.bf16.mxu0 0
    %2272 = vmatpush1.bf16.msra.mxu0 0
    %2273 = vmatprep.subr.bf16.mxu0 0
    %2274 = vmatpush1.bf16.msra.mxu0 0
    %2275 = vmatprep.subr.bf16.mxu0 0
    %2276 = vmatpush1.bf16.msra.mxu0 0
    %2277 = vmatprep.subr.bf16.mxu0 0
    %2278 = vmatpush1.bf16.msra.mxu0 0
    %2279 = vmatprep.mubr.bf16.mxu0 0
    %2280 = vmatmul.mubr.bf16.gmra.mrb[0].mxu0 %v2242
    %v2281 = vpop.f32.mrb[0].mxu0
    %v2282 = vadd.f32 0.0, %v2281
    %v2283 = vpop.f32.mrb[0].mxu0
    %v2284 = vpop.f32.mrb[0].mxu0
    %v2285 = vpop.f32.mrb[0].mxu0
    %2286 = vdwg.mxu0
    %v2288 = vsel %vm650, %v1578, 0
    %v2291 = vsel %vm1599, %v649, 0
    %2293 = vmatprep.subr.bf16.mxu0 0
    %2294 = vmatpush1.bf16.msra.mxu0 %v2291
    %2295 = vmatprep.subr.bf16.mxu0 0
    %2296 = vmatpush1.bf16.msra.mxu0 0
    %2297 = vmatprep.subr.bf16.mxu0 0
    %2298 = vmatpush1.bf16.msra.mxu0 0
    %2299 = vmatprep.subr.bf16.mxu0 0
    %2300 = vmatpush1.bf16.msra.mxu0 0
    %2301 = vmatprep.subr.bf16.mxu0 0
    %2302 = vmatpush1.bf16.msra.mxu0 0
    %2303 = vmatprep.subr.bf16.mxu0 0
    %2304 = vmatpush1.bf16.msra.mxu0 0
    %2305 = vmatprep.subr.bf16.mxu0 0
    %2306 = vmatpush1.bf16.msra.mxu0 0
    %2307 = vmatprep.subr.bf16.mxu0 0
    %2308 = vmatpush1.bf16.msra.mxu0 0
    %2309 = vmatprep.subr.bf16.mxu0 0
    %2310 = vmatpush1.bf16.msra.mxu0 0
    %2311 = vmatprep.subr.bf16.mxu0 0
    %2312 = vmatpush1.bf16.msra.mxu0 0
    %2313 = vmatprep.subr.bf16.mxu0 0
    %2314 = vmatpush1.bf16.msra.mxu0 0
    %2315 = vmatprep.subr.bf16.mxu0 0
    %2316 = vmatpush1.bf16.msra.mxu0 0
    %2317 = vmatprep.subr.bf16.mxu0 0
    %2318 = vmatpush1.bf16.msra.mxu0 0
    %2319 = vmatprep.subr.bf16.mxu0 0
    %2320 = vmatpush1.bf16.msra.mxu0 0
    %2321 = vmatprep.subr.bf16.mxu0 0
    %2322 = vmatpush1.bf16.msra.mxu0 0
    %2323 = vmatprep.subr.bf16.mxu0 0
    %2324 = vmatpush1.bf16.msra.mxu0 0
    %2325 = vmatprep.mubr.bf16.mxu0 0
    %2326 = vmatmul.mubr.bf16.gmra.mrb[0].mxu0 %v2288
    %v2327 = vpop.f32.mrb[0].mxu0
    %v2328 = vadd.f32 0.0, %v2327
    %v2329 = vpop.f32.mrb[0].mxu0
    %v2330 = vpop.f32.mrb[0].mxu0
    %v2331 = vpop.f32.mrb[0].mxu0
    %2332 = vdwg.mxu0
    %2337 = vrot.lane.b32.xlu0 %v1684, 8
    %v2338 = vpop.permute.xlu0 %2337
    %2339 = vrot.lane.b32.xlu0 %v1868, 8
    %v2340 = vpop.permute.xlu0 %2339
    %2341 = vrot.lane.b32.xlu0 %v2052, 8
    %v2342 = vpop.permute.xlu0 %2341
    %2343 = vrot.lane.b32.xlu0 %v2236, 8
    %v2344 = vpop.permute.xlu0 %2343
    %2353 = vrot.lane.b32.xlu0 %v1730, 16
    %v2354 = vpop.permute.xlu0 %2353
    %2355 = vrot.lane.b32.xlu0 %v1914, 16
    %v2356 = vpop.permute.xlu0 %2355
    %2357 = vrot.lane.b32.xlu0 %v2098, 16
    %v2358 = vpop.permute.xlu0 %2357
    %2359 = vrot.lane.b32.xlu0 %v2282, 16
    %v2360 = vpop.permute.xlu0 %2359
    %2369 = vrot.lane.b32.xlu0 %v1776, 24
    %v2370 = vpop.permute.xlu0 %2369
    %2371 = vrot.lane.b32.xlu0 %v1960, 24
    %v2372 = vpop.permute.xlu0 %2371
    %2373 = vrot.lane.b32.xlu0 %v2144, 24
    %v2374 = vpop.permute.xlu0 %2373
    %2375 = vrot.lane.b32.xlu0 %v2328, 24
    %v2376 = vpop.permute.xlu0 %2375
    %v2381 = vsel %vm650, %v1638, %v2338
    %v2382 = vsel %vm650, %v1822, %v2340
    %v2383 = vsel %vm650, %v2006, %v2342
    %v2384 = vsel %vm650, %v2190, %v2344
    %vm2385 = vcmask 130048
    %v2386 = vsel %vm2385, %v2381, %v2354
    %v2387 = vsel %vm2385, %v2382, %v2356
    %v2388 = vsel %vm2385, %v2383, %v2358
    %v2389 = vsel %vm2385, %v2384, %v2360
    %vm2390 = vcmask 195584
    %v2391 = vsel %vm2390, %v2386, %v2370
    %v2392 = vsel %vm2390, %v2387, %v2372
    %v2393 = vsel %vm2390, %v2388, %v2374
    %v2394 = vsel %vm2390, %v2389, %v2376
    %v2395 = vpack.c.bf16 %v2392, %v2391
    %v2396 = vpack.c.bf16 %v2394, %v2393
    %v2397 = vld [vmem:[#allocation17] sm:$0xf]
    %v2398 = vld [vmem:[#allocation17 + $0x4] sm:$0xf]
    %v2399 = vld [vmem:[#allocation17 + $0x8] sm:$0xf]
    %v2400 = vld [vmem:[#allocation17 + $0xc] sm:$0xf]
    %v2401 = vld [vmem:[#allocation19] sm:$0x1]
    %v2403 = vlaneseq
    %v2404 = vshrl.u32 %v2403, 7
    %v2405 = vsub.s32 0, %v2404
    %v2406 = vrot.slane %v2401, %v2405
    %v2412 = vunpack.c.l.b16 %v2397
    %v2413 = vunpack.c.l.b16 %v2398
    %v2414 = vunpack.c.l.b16 %v2399
    %v2415 = vunpack.c.l.b16 %v2400
    %v2416 = vpack.c.b16 %v2413, %v2412
    %v2417 = vpack.c.b16 %v2415, %v2414
    %v2421 = vsel %vm250, %v2395, 0
    %v2424 = vsel %vm250, %v2396, 0
    %2426 = vmatprep.subr.bf16.mxu0 0
    %2427 = vmatpush1.bf16.msra.mxu0 %v2416
    %2428 = vmatprep.subr.bf16.mxu0 0
    %2429 = vmatpush1.bf16.msra.mxu0 %v2417
    %2430 = vmatprep.subr.bf16.mxu0 0
    %2431 = vmatpush1.bf16.msra.mxu0 0
    %2432 = vmatprep.subr.bf16.mxu0 0
    %2433 = vmatpush1.bf16.msra.mxu0 0
    %2434 = vmatprep.subr.bf16.mxu0 0
    %2435 = vmatpush1.bf16.msra.mxu0 0
    %2436 = vmatprep.subr.bf16.mxu0 0
    %2437 = vmatpush1.bf16.msra.mxu0 0
    %2438 = vmatprep.subr.bf16.mxu0 0
    %2439 = vmatpush1.bf16.msra.mxu0 0
    %2440 = vmatprep.subr.bf16.mxu0 0
    %2441 = vmatpush1.bf16.msra.mxu0 0
    %2442 = vmatprep.subr.bf16.mxu0 0
    %2443 = vmatpush1.bf16.msra.mxu0 0
    %2444 = vmatprep.subr.bf16.mxu0 0
    %2445 = vmatpush1.bf16.msra.mxu0 0
    %2446 = vmatprep.subr.bf16.mxu0 0
    %2447 = vmatpush1.bf16.msra.mxu0 0
    %2448 = vmatprep.subr.bf16.mxu0 0
    %2449 = vmatpush1.bf16.msra.mxu0 0
    %2450 = vmatprep.subr.bf16.mxu0 0
    %2451 = vmatpush1.bf16.msra.mxu0 0
    %2452 = vmatprep.subr.bf16.mxu0 0
    %2453 = vmatpush1.bf16.msra.mxu0 0
    %2454 = vmatprep.subr.bf16.mxu0 0
    %2455 = vmatpush1.bf16.msra.mxu0 0
    %2456 = vmatprep.subr.bf16.mxu0 0
    %2457 = vmatpush1.bf16.msra.mxu0 0
    %2458 = vmatprep.mubr.bf16.mxu0 0
    %2459 = vmatmul.mubr.bf16.gmra.mrb[0].mxu0 %v2421
    %v2460 = vpop.f32.mrb[0].mxu0
    %v2461 = vadd.f32 %v2406, %v2460
    %v2462 = vpop.f32.mrb[0].mxu0
    %v2463 = vpop.f32.mrb[0].mxu0
    %v2464 = vadd.f32 %v2406, %v2463
    %v2465 = vpop.f32.mrb[0].mxu0
    %2466 = vmatprep.mubr.bf16.mxu0 0
    %2467 = vmatmul.mubr.bf16.gmra.mrb[0].mxu0 %v2424
    %v2468 = vpop.f32.mrb[0].mxu0
    %v2469 = vadd.f32 %v2406, %v2468
    %v2470 = vpop.f32.mrb[0].mxu0
    %v2471 = vpop.f32.mrb[0].mxu0
    %v2472 = vadd.f32 %v2406, %v2471
    %v2473 = vpop.f32.mrb[0].mxu0
    %2474 = vdwg.mxu0
    %v2475 = vadd.f32 %v213, %v2461
    %v2476 = vadd.f32 %v214, %v2464
    %v2477 = vadd.f32 %v215, %v2469
    %v2478 = vadd.f32 %v216, %v2472
    %v2479 = vsel %vm250, %v2475, 0.0
    %2480 = vadd.xlane.f32.xlu0 %v2479
    %v2481 = vpop.xlane.xlu0 %2480
    %v2482 = vsel %vm250, %v2476, 0.0
    %2483 = vadd.xlane.f32.xlu0 %v2482
    %v2484 = vpop.xlane.xlu0 %2483
    %v2485 = vsel %vm250, %v2477, 0.0
    %2486 = vadd.xlane.f32.xlu0 %v2485
    %v2487 = vpop.xlane.xlu0 %2486
    %v2488 = vsel %vm250, %v2478, 0.0
    %2489 = vadd.xlane.f32.xlu0 %v2488
    %v2490 = vpop.xlane.xlu0 %2489
    %v2491 = vrcp.pop 32.0
    %v2492 = vmul.f32 %v2481, %v2491
    %v2493 = vmul.f32 %v2484, %v2491
    %v2494 = vmul.f32 %v2487, %v2491
    %v2495 = vmul.f32 %v2490, %v2491
    %v2496 = vsub.f32 %v2475, %v2492
    %v2497 = vsub.f32 %v2476, %v2493
    %v2498 = vsub.f32 %v2477, %v2494
    %v2499 = vsub.f32 %v2478, %v2495
    %v2500 = vmul.f32 %v2496, %v2496
    %v2501 = vmul.f32 %v2497, %v2497
    %v2502 = vmul.f32 %v2498, %v2498
    %v2503 = vmul.f32 %v2499, %v2499
    %v2504 = vsel %vm250, %v2500, 0.0
    %2505 = vadd.xlane.f32.xlu0 %v2504
    %v2506 = vpop.xlane.xlu0 %2505
    %v2507 = vsel %vm250, %v2501, 0.0
    %2508 = vadd.xlane.f32.xlu0 %v2507
    %v2509 = vpop.xlane.xlu0 %2508
    %v2510 = vsel %vm250, %v2502, 0.0
    %2511 = vadd.xlane.f32.xlu0 %v2510
    %v2512 = vpop.xlane.xlu0 %2511
    %v2513 = vsel %vm250, %v2503, 0.0
    %2514 = vadd.xlane.f32.xlu0 %v2513
    %v2515 = vpop.xlane.xlu0 %2514
    %v2516 = vmul.f32 %v2506, %v2491
    %v2517 = vmul.f32 %v2509, %v2491
    %v2518 = vmul.f32 %v2512, %v2491
    %v2519 = vmul.f32 %v2515, %v2491
    %v2520 = vadd.f32 %v2516, 1e-05
    %v2521 = vadd.f32 %v2517, 1e-05
    %v2522 = vadd.f32 %v2518, 1e-05
    %v2523 = vadd.f32 %v2519, 1e-05
    %v2524 = vrsqrt.pop %v2520
    %v2525 = vrsqrt.pop %v2521
    %v2526 = vrsqrt.pop %v2522
    %v2527 = vrsqrt.pop %v2523
    %v2528 = vmul.f32 %v2496, %v2524
    %v2529 = vmul.f32 %v2497, %v2525
    %v2530 = vmul.f32 %v2498, %v2526
    %v2531 = vmul.f32 %v2499, %v2527
    %v2532 = vld [vmem:[#allocation20] sm:$0x1]
    %v2534 = vlaneseq
    %v2535 = vshrl.u32 %v2534, 7
    %v2536 = vsub.s32 0, %v2535
    %v2537 = vrot.slane %v2532, %v2536
    %v2539 = vmul.f32 %v2528, %v2537
    %v2540 = vmul.f32 %v2529, %v2537
    %v2541 = vmul.f32 %v2530, %v2537
    %v2542 = vmul.f32 %v2531, %v2537
    %v2543 = vld [vmem:[#allocation22] sm:$0x1]
    %v2545 = vlaneseq
    %v2546 = vshrl.u32 %v2545, 7
    %v2547 = vsub.s32 0, %v2546
    %v2548 = vrot.slane %v2543, %v2547
    %v2550 = vadd.f32 %v2539, %v2548
    %v2551 = vadd.f32 %v2540, %v2548
    %v2552 = vadd.f32 %v2541, %v2548
    %v2553 = vadd.f32 %v2542, %v2548
    %2554 = vst.msk [vmem:[#allocation23] sm:$0xff] %vm250, %v2550
    %2555 = vst.msk [vmem:[#allocation23 + $0x8] sm:$0xff] %vm250, %v2551
    %2556 = vst.msk [vmem:[#allocation23 + $0x10] sm:$0xff] %vm250, %v2552
    %2557 = vst.msk [vmem:[#allocation23 + $0x18] sm:$0xff] %vm250, %v2553
    // Predicated region
    $region106: #{tpu_custom_call.1} parent=1 // pred_check
      _
    $region107: #{tpu_custom_call.1} parent=1 // pred_check_branch
      %2559 = sbr.rel (0) target = $region109
    $region108: #{tpu_custom_call.1} parent=1 // pred_region
      %s2561 = ssub.s32 512, 512
      %2562 = vsyncadd [#allocation4], %s2561
      %s2563 = sshll.u32 [#allocation23], 4
      %s2564 = int_to_ptr.vmem [resolvable:$true] %s2563
      %2569 = dma.vmem_to_hbm [thread:$0]  %s2564, 512, %s13, [#allocation4], 128, 128, 8
    $region109: #{tpu_custom_call.1} parent=1 // pred_fallthru
      _
    // Predicated region
    $region110: #{tpu_custom_call.1} parent=1 // pred_check
      _
    $region111: #{tpu_custom_call.1} parent=1 // pred_check_branch
      %2571 = sbr.rel (0) target = $region113
    $region112: #{tpu_custom_call.1} parent=1 // pred_region
      %s2573 = ssub.s32 1024, 1024
      %2574 = vsyncadd [#allocation25], %s2573
      %s2575 = sshll.u32 [#allocation24], 4
      %s2576 = int_to_ptr.vmem [resolvable:$true] %s2575
      %2581 = dma.vmem_to_hbm [thread:$0]  %s2576, 1024, %s14, [#allocation25], 64, 64, 4
    $region113: #{tpu_custom_call.1} parent=1 // pred_fallthru
      _
    // Predicated region
    $region114: #{tpu_custom_call.1} parent=1 // pred_check
      _
    $region115: #{tpu_custom_call.1} parent=1 // pred_check_branch
      %2583 = sbr.rel (0) target = $region117
    $region116: #{tpu_custom_call.1} parent=1 // pred_region
      %2584 = dma.done [#allocation4], 512
    $region117: #{tpu_custom_call.1} parent=1 // pred_fallthru
      _
    // Predicated region
    $region118: #{tpu_custom_call.1} parent=1 // pred_check
      _
    $region119: #{tpu_custom_call.1} parent=1 // pred_check_branch
      %2586 = sbr.rel (0) target = $region121
    $region120: #{tpu_custom_call.1} parent=1 // pred_region
      %2587 = dma.done [#allocation25], 1024
    $region121: #{tpu_custom_call.1} parent=1 // pred_fallthru
      _
    %2588 = vsyncpa [#allocation3], 1
    %2589 = vsyncpa [#allocation6], 1
    %2590 = vsyncpa [#allocation9], 1
    %2591 = vsyncpa [#allocation12], 1
    %2592 = vsyncpa [#allocation15], 1
    %2593 = vsyncpa [#allocation18], 1
    %2594 = vsyncpa [#allocation21], 1
    %2595 = vsyncpa [#allocation4], 1
    %2596 = vsyncpa [#allocation25], 1

// kernel: tpu_custom_call.1
$region0: #{tpu_custom_call.1}
  #allocation0 [shape = 'u32[]', space=smem, size = 0x4, offset = 0x4, fixed_abs, tag = 'smem constant byte address 0x4 - core index']
  #allocation1 [shape = 'u32[144,128]{1,0:T(1,128)}', space=vmem, size = 0x12000, scoped, tag = 'internal scratch']
  %s0 = inlined_call_operand.hbm [shape: f32[4,8,32], index: 0, kind: input, shape index: {}]
  %s1 = inlined_call_operand.hbm [shape: bf16[4,8,32], index: 1, kind: input, shape index: {}]
  %s2 = inlined_call_operand.hbm [shape: bf16[4,8,32], index: 2, kind: input, shape index: {}]
  %s3 = inlined_call_operand.hbm [shape: bf16[32,32], index: 3, kind: input, shape index: {}]
  %s4 = inlined_call_operand.hbm [shape: f32[1,32], index: 4, kind: input, shape index: {}]
  %s5 = inlined_call_operand.hbm [shape: bf16[32,32], index: 5, kind: input, shape index: {}]
  %s6 = inlined_call_operand.hbm [shape: f32[1,32], index: 6, kind: input, shape index: {}]
  %s7 = inlined_call_operand.hbm [shape: bf16[32,32], index: 7, kind: input, shape index: {}]
  %s8 = inlined_call_operand.hbm [shape: f32[1,32], index: 8, kind: input, shape index: {}]
  %s9 = inlined_call_operand.hbm [shape: bf16[32,32], index: 9, kind: input, shape index: {}]
  %s10 = inlined_call_operand.hbm [shape: f32[1,32], index: 10, kind: input, shape index: {}]
  %s11 = inlined_call_operand.hbm [shape: f32[1,32], index: 11, kind: input, shape index: {}]
  %s12 = inlined_call_operand.hbm [shape: f32[1,32], index: 12, kind: input, shape index: {}]
  %s13 = inlined_call_operand.hbm [shape: f32[4,8,32], index: 13, kind: output, shape index: {0}]
  %s14 = inlined_call_operand.hbm [shape: bf16[4,4,8,8], index: 14, kind: output, shape index: {1}]
  %15 = xla_tuple %s13, %s14
  %s16 = sld [smem:[#allocation0]]
  $region122: #{tpu_custom_call.1} parent=0
    _
  %s18 = ssub.s32 1, %s16
  %s19 = scalar_select 0, %s18, %s16
  $region1: #{tpu_custom_call.1} parent=0
    #allocation2 [shape = 'u8[16384]{0}', space=vmem, size = 0x4000, scoped, tag = 'input window, operand 0, single buffered']
    #allocation3 [shape = 's32[1]{0}', space=sflag, size = 0x4, scoped, tag = 'scoped memory for tpu_custom_call.1']
    #allocation4 [shape = 's32[1]{0}', space=sflag, size = 0x4, scoped, tag = 'scoped memory for tpu_custom_call.1']
    #allocation5 [shape = 'u8[8192]{0}', space=vmem, size = 0x2000, scoped, tag = 'input window, operand 1, single buffered']
    #allocation6 [shape = 's32[1]{0}', space=sflag, size = 0x4, scoped, tag = 'scoped memory for tpu_custom_call.1']
    #allocation7 [shape = 'u8[8192]{0}', space=vmem, size = 0x2000, scoped, tag = 'input window, operand 2, single buffered']
    #allocation8 [shape = 'u8[8192]{0}', space=vmem, size = 0x2000, scoped, tag = 'input window, operand 3, single buffered']
    #allocation9 [shape = 's32[1]{0}', space=sflag, size = 0x4, scoped, tag = 'scoped memory for tpu_custom_call.1']
    #allocation10 [shape = 'u8[512]{0}', space=vmem, size = 0x400, scoped, tag = 'input window, operand 4, single buffered']
    #allocation11 [shape = 'u8[8192]{0}', space=vmem, size = 0x2000, scoped, tag = 'input window, operand 5, single buffered']
    #allocation12 [shape = 's32[1]{0}', space=sflag, size = 0x4, scoped, tag = 'scoped memory for tpu_custom_call.1']
    #allocation13 [shape = 'u8[512]{0}', space=vmem, size = 0x400, scoped, tag = 'input window, operand 6, single buffered']
    #allocation14 [shape = 'u8[8192]{0}', space=vmem, size = 0x2000, scoped, tag = 'input window, operand 7, single buffered']
    #allocation15 [shape = 's32[1]{0}', space=sflag, size = 0x4, scoped, tag = 'scoped memory for tpu_custom_call.1']
    #allocation16 [shape = 'u8[512]{0}', space=vmem, size = 0x400, scoped, tag = 'input window, operand 8, single buffered']
    #allocation17 [shape = 'u8[8192]{0}', space=vmem, size = 0x2000, scoped, tag = 'input window, operand 9, single buffered']
    #allocation18 [shape = 's32[1]{0}', space=sflag, size = 0x4, scoped, tag = 'scoped memory for tpu_custom_call.1']
    #allocation19 [shape = 'u8[512]{0}', space=vmem, size = 0x400, scoped, tag = 'input window, operand 10, single buffered']
    #allocation20 [shape = 'u8[512]{0}', space=vmem, size = 0x400, scoped, tag = 'input window, operand 11, single buffered']
    #allocation21 [shape = 's32[1]{0}', space=sflag, size = 0x4, scoped, tag = 'scoped memory for tpu_custom_call.1']
    #allocation22 [shape = 'u8[512]{0}', space=vmem, size = 0x400, scoped, tag = 'input window, operand 12, single buffered']
    #allocation23 [shape = 'u8[16384]{0}', space=vmem, size = 0x4000, scoped, tag = 'output window, operand 0, single buffered']
    #allocation24 [shape = 'u8[32768]{0}', space=vmem, size = 0x8000, scoped, tag = 'output window, operand 1, single buffered']
    #allocation25 [shape = 's32[1]{0}', space=sflag, size = 0x4, scoped, tag = 'scoped memory for tpu_custom_call.1']
    %20 = vsyncpa [#allocation3], 0
    %21 = vsyncpa [#allocation6], 0
    %22 = vsyncpa [#allocation9], 0
    %23 = vsyncpa [#allocation12], 0
    %24 = vsyncpa [#allocation15], 0
    %25 = vsyncpa [#allocation18], 0
    %26 = vsyncpa [#allocation21], 0
    %27 = vsyncpa [#allocation4], 0
    %28 = vsyncpa [#allocation25], 0
    // Predicated region
    $region2: #{tpu_custom_call.1} parent=1 // pred_check
      _
    $region3: #{tpu_custom_call.1} parent=1 // pred_check_branch
      %30 = sbr.rel (0) target = $region5
    $region4: #{tpu_custom_call.1} parent=1 // pred_region
      %s32 = ssub.s32 512, 512
      %33 = vsyncadd [#allocation3], %s32
      %s34 = sshll.u32 [#allocation2], 4
      %s35 = int_to_ptr.vmem [resolvable:$true] %s34
      %40 = dma.hbm_to_vmem [thread:$0]  %s0, 512, %s35, [#allocation3], 128, 128, 8
    $region5: #{tpu_custom_call.1} parent=1 // pred_fallthru
      _
    // Predicated region
    $region6: #{tpu_custom_call.1} parent=1 // pred_check
      _
    $region7: #{tpu_custom_call.1} parent=1 // pred_check_branch
      %42 = sbr.rel (0) target = $region9
    $region8: #{tpu_custom_call.1} parent=1 // pred_region
      %s44 = ssub.s32 256, 256
      %45 = vsyncadd [#allocation6], %s44
      %s46 = sshll.u32 [#allocation5], 4
      %s47 = int_to_ptr.vmem [resolvable:$true] %s46
      %52 = dma.hbm_to_vmem [thread:$0]  %s1, 256, %s47, [#allocation6], 64, 64, 4
    $region9: #{tpu_custom_call.1} parent=1 // pred_fallthru
      _
    // Predicated region
    $region10: #{tpu_custom_call.1} parent=1 // pred_check
      _
    $region11: #{tpu_custom_call.1} parent=1 // pred_check_branch
      %54 = sbr.rel (0) target = $region13
    $region12: #{tpu_custom_call.1} parent=1 // pred_region
      %s56 = ssub.s32 256, 256
      %57 = vsyncadd [#allocation6], %s56
      %s58 = sshll.u32 [#allocation7], 4
      %s59 = int_to_ptr.vmem [resolvable:$true] %s58
      %64 = dma.hbm_to_vmem [thread:$0]  %s2, 256, %s59, [#allocation6], 64, 64, 4
    $region13: #{tpu_custom_call.1} parent=1 // pred_fallthru
      _
    // Predicated region
    $region14: #{tpu_custom_call.1} parent=1 // pred_check
      _
    $region15: #{tpu_custom_call.1} parent=1 // pred_check_branch
      %66 = sbr.rel (0) target = $region17
    $region16: #{tpu_custom_call.1} parent=1 // pred_region
      %s68 = ssub.s32 256, 256
      %69 = vsyncadd [#allocation9], %s68
      %s70 = sshll.u32 [#allocation8], 4
      %s71 = int_to_ptr.vmem [resolvable:$true] %s70
      %76 = dma.hbm_to_vmem [thread:$0]  %s3, 256, %s71, [#allocation9], 64, 64, 4
    $region17: #{tpu_custom_call.1} parent=1 // pred_fallthru
      _
    // Predicated region
    $region18: #{tpu_custom_call.1} parent=1 // pred_check
      _
    $region19: #{tpu_custom_call.1} parent=1 // pred_check_branch
      %78 = sbr.rel (0) target = $region21
    $region20: #{tpu_custom_call.1} parent=1 // pred_region
      %s80 = ssub.s32 16, 16
      %81 = vsyncadd [#allocation9], %s80
      %s83 = sshll.u32 [#allocation10], 4
      %s84 = int_to_ptr.vmem [resolvable:$true] %s83
      %86 = dma.hbm_to_vmem [thread:$0]  %s4, 16, %s84, [#allocation9]
    $region21: #{tpu_custom_call.1} parent=1 // pred_fallthru
      _
    // Predicated region
    $region22: #{tpu_custom_call.1} parent=1 // pred_check
      _
    $region23: #{tpu_custom_call.1} parent=1 // pred_check_branch
      %88 = sbr.rel (0) target = $region25
    $region24: #{tpu_custom_call.1} parent=1 // pred_region
      %s90 = ssub.s32 256, 256
      %91 = vsyncadd [#allocation12], %s90
      %s92 = sshll.u32 [#allocation11], 4
      %s93 = int_to_ptr.vmem [resolvable:$true] %s92
      %98 = dma.hbm_to_vmem [thread:$0]  %s5, 256, %s93, [#allocation12], 64, 64, 4
    $region25: #{tpu_custom_call.1} parent=1 // pred_fallthru
      _
    // Predicated region
    $region26: #{tpu_custom_call.1} parent=1 // pred_check
      _
    $region27: #{tpu_custom_call.1} parent=1 // pred_check_branch
      %100 = sbr.rel (0) target = $region29
    $region28: #{tpu_custom_call.1} parent=1 // pred_region
      %s102 = ssub.s32 16, 16
      %103 = vsyncadd [#allocation12], %s102
      %s105 = sshll.u32 [#allocation13], 4
      %s106 = int_to_ptr.vmem [resolvable:$true] %s105
      %108 = dma.hbm_to_vmem [thread:$0]  %s6, 16, %s106, [#allocation12]
    $region29: #{tpu_custom_call.1} parent=1 // pred_fallthru
      _
    // Predicated region
    $region30: #{tpu_custom_call.1} parent=1 // pred_check
      _
    $region31: #{tpu_custom_call.1} parent=1 // pred_check_branch
      %110 = sbr.rel (0) target = $region33
    $region32: #{tpu_custom_call.1} parent=1 // pred_region
      %s112 = ssub.s32 256, 256
      %113 = vsyncadd [#allocation15], %s112
      %s114 = sshll.u32 [#allocation14], 4
      %s115 = int_to_ptr.vmem [resolvable:$true] %s114
      %120 = dma.hbm_to_vmem [thread:$0]  %s7, 256, %s115, [#allocation15], 64, 64, 4
    $region33: #{tpu_custom_call.1} parent=1 // pred_fallthru
      _
    // Predicated region
    $region34: #{tpu_custom_call.1} parent=1 // pred_check
      _
    $region35: #{tpu_custom_call.1} parent=1 // pred_check_branch
      %122 = sbr.rel (0) target = $region37
    $region36: #{tpu_custom_call.1} parent=1 // pred_region
      %s124 = ssub.s32 16, 16
      %125 = vsyncadd [#allocation15], %s124
      %s127 = sshll.u32 [#allocation16], 4
      %s128 = int_to_ptr.vmem [resolvable:$true] %s127
      %130 = dma.hbm_to_vmem [thread:$0]  %s8, 16, %s128, [#allocation15]
    $region37: #{tpu_custom_call.1} parent=1 // pred_fallthru
      _
    // Predicated region
    $region38: #{tpu_custom_call.1} parent=1 // pred_check
      _
    $region39: #{tpu_custom_call.1} parent=1 // pred_check_branch
      %132 = sbr.rel (0) target = $region41
    $region40: #{tpu_custom_call.1} parent=1 // pred_region
      %s134 = ssub.s32 256, 256
      %135 = vsyncadd [#allocation18], %s134
      %s136 = sshll.u32 [#allocation17], 4
      %s137 = int_to_ptr.vmem [resolvable:$true] %s136
      %142 = dma.hbm_to_vmem [thread:$0]  %s9, 256, %s137, [#allocation18], 64, 64, 4
    $region41: #{tpu_custom_call.1} parent=1 // pred_fallthru
      _
    // Predicated region
    $region42: #{tpu_custom_call.1} parent=1 // pred_check
      _
    $region43: #{tpu_custom_call.1} parent=1 // pred_check_branch
      %144 = sbr.rel (0) target = $region45
    $region44: #{tpu_custom_call.1} parent=1 // pred_region
      %s146 = ssub.s32 16, 16
      %147 = vsyncadd [#allocation18], %s146
      %s149 = sshll.u32 [#allocation19], 4
      %s150 = int_to_ptr.vmem [resolvable:$true] %s149
      %152 = dma.hbm_to_vmem [thread:$0]  %s10, 16, %s150, [#allocation18]
    $region45: #{tpu_custom_call.1} parent=1 // pred_fallthru
      _
    // Predicated region
    $region46: #{tpu_custom_call.1} parent=1 // pred_check
      _
    $region47: #{tpu_custom_call.1} parent=1 // pred_check_branch
      %154 = sbr.rel (0) target = $region49
    $region48: #{tpu_custom_call.1} parent=1 // pred_region
      %s156 = ssub.s32 16, 16
      %157 = vsyncadd [#allocation21], %s156
      %s159 = sshll.u32 [#allocation20], 4
      %s160 = int_to_ptr.vmem [resolvable:$true] %s159
      %162 = dma.hbm_to_vmem [thread:$0]  %s11, 16, %s160, [#allocation21]
    $region49: #{tpu_custom_call.1} parent=1 // pred_fallthru
      _
    // Predicated region
    $region50: #{tpu_custom_call.1} parent=1 // pred_check
      _
    $region51: #{tpu_custom_call.1} parent=1 // pred_check_branch
      %164 = sbr.rel (0) target = $region53
    $region52: #{tpu_custom_call.1} parent=1 // pred_region
      %s166 = ssub.s32 16, 16
      %167 = vsyncadd [#allocation21], %s166
      %s169 = sshll.u32 [#allocation22], 4
      %s170 = int_to_ptr.vmem [resolvable:$true] %s169
      %172 = dma.hbm_to_vmem [thread:$0]  %s12, 16, %s170, [#allocation21]
    $region53: #{tpu_custom_call.1} parent=1 // pred_fallthru
      _
    // Predicated region
    $region54: #{tpu_custom_call.1} parent=1 // pred_check
      _
    $region55: #{tpu_custom_call.1} parent=1 // pred_check_branch
      %174 = sbr.rel (0) target = $region57
    $region56: #{tpu_custom_call.1} parent=1 // pred_region
      %175 = dma.done [#allocation3], 512
    $region57: #{tpu_custom_call.1} parent=1 // pred_fallthru
      _
    // Predicated region
    $region58: #{tpu_custom_call.1} parent=1 // pred_check
      _
    $region59: #{tpu_custom_call.1} parent=1 // pred_check_branch
      %177 = sbr.rel (0) target = $region61
    $region60: #{tpu_custom_call.1} parent=1 // pred_region
      %178 = dma.done [#allocation6], 256
    $region61: #{tpu_custom_call.1} parent=1 // pred_fallthru
      _
    // Predicated region
    $region62: #{tpu_custom_call.1} parent=1 // pred_check
      _
    $region63: #{tpu_custom_call.1} parent=1 // pred_check_branch
      %180 = sbr.rel (0) target = $region65
    $region64: #{tpu_custom_call.1} parent=1 // pred_region
      %181 = dma.done [#allocation6], 256
    $region65: #{tpu_custom_call.1} parent=1 // pred_fallthru
      _
    // Predicated region
    $region66: #{tpu_custom_call.1} parent=1 // pred_check
      _
    $region67: #{tpu_custom_call.1} parent=1 // pred_check_branch
      %183 = sbr.rel (0) target = $region69
    $region68: #{tpu_custom_call.1} parent=1 // pred_region
      %184 = dma.done [#allocation9], 256
    $region69: #{tpu_custom_call.1} parent=1 // pred_fallthru
      _
    // Predicated region
    $region70: #{tpu_custom_call.1} parent=1 // pred_check
      _
    $region71: #{tpu_custom_call.1} parent=1 // pred_check_branch
      %186 = sbr.rel (0) target = $region73
    $region72: #{tpu_custom_call.1} parent=1 // pred_region
      %187 = dma.done [#allocation9], 16
    $region73: #{tpu_custom_call.1} parent=1 // pred_fallthru
      _
    // Predicated region
    $region74: #{tpu_custom_call.1} parent=1 // pred_check
      _
    $region75: #{tpu_custom_call.1} parent=1 // pred_check_branch
      %189 = sbr.rel (0) target = $region77
    $region76: #{tpu_custom_call.1} parent=1 // pred_region
      %190 = dma.done [#allocation12], 256
    $region77: #{tpu_custom_call.1} parent=1 // pred_fallthru
      _
    // Predicated region
    $region78: #{tpu_custom_call.1} parent=1 // pred_check
      _
    $region79: #{tpu_custom_call.1} parent=1 // pred_check_branch
      %192 = sbr.rel (0) target = $region81
    $region80: #{tpu_custom_call.1} parent=1 // pred_region
      %193 = dma.done [#allocation12], 16
    $region81: #{tpu_custom_call.1} parent=1 // pred_fallthru
      _
    // Predicated region
    $region82: #{tpu_custom_call.1} parent=1 // pred_check
      _
    $region83: #{tpu_custom_call.1} parent=1 // pred_check_branch
      %195 = sbr.rel (0) target = $region85
    $region84: #{tpu_custom_call.1} parent=1 // pred_region
      %196 = dma.done [#allocation15], 256
    $region85: #{tpu_custom_call.1} parent=1 // pred_fallthru
      _
    // Predicated region
    $region86: #{tpu_custom_call.1} parent=1 // pred_check
      _
    $region87: #{tpu_custom_call.1} parent=1 // pred_check_branch
      %198 = sbr.rel (0) target = $region89
    $region88: #{tpu_custom_call.1} parent=1 // pred_region
      %199 = dma.done [#allocation15], 16
    $region89: #{tpu_custom_call.1} parent=1 // pred_fallthru
      _
    // Predicated region
    $region90: #{tpu_custom_call.1} parent=1 // pred_check
      _
    $region91: #{tpu_custom_call.1} parent=1 // pred_check_branch
      %201 = sbr.rel (0) target = $region93
    $region92: #{tpu_custom_call.1} parent=1 // pred_region
      %202 = dma.done [#allocation18], 256
    $region93: #{tpu_custom_call.1} parent=1 // pred_fallthru
      _
    // Predicated region
    $region94: #{tpu_custom_call.1} parent=1 // pred_check
      _
    $region95: #{tpu_custom_call.1} parent=1 // pred_check_branch
      %204 = sbr.rel (0) target = $region97
    $region96: #{tpu_custom_call.1} parent=1 // pred_region
      %205 = dma.done [#allocation18], 16
    $region97: #{tpu_custom_call.1} parent=1 // pred_fallthru
      _
    // Predicated region
    $region98: #{tpu_custom_call.1} parent=1 // pred_check
      _
    $region99: #{tpu_custom_call.1} parent=1 // pred_check_branch
      %207 = sbr.rel (0) target = $region101
    $region100: #{tpu_custom_call.1} parent=1 // pred_region
      %208 = dma.done [#allocation21], 16
    $region101: #{tpu_custom_call.1} parent=1 // pred_fallthru
      _
    // Predicated region
    $region102: #{tpu_custom_call.1} parent=1 // pred_check
      _
    $region103: #{tpu_custom_call.1} parent=1 // pred_check_branch
      %210 = sbr.rel (0) target = $region105
    $region104: #{tpu_custom_call.1} parent=1 // pred_region
      %211 = dma.done [#allocation21], 16
    $region105: #{tpu_custom_call.1} parent=1 // pred_fallthru
      _
    %v213 = vld [vmem:[#allocation2] sm:$0xff]
    %v214 = vld [vmem:[#allocation2 + $0x8] sm:$0xff]
    %v215 = vld [vmem:[#allocation2 + $0x10] sm:$0xff]
    %v216 = vld [vmem:[#allocation2 + $0x18] sm:$0xff]
    %v217 = vpack.c.bf16 %v214, %v213
    %v218 = vpack.c.bf16 %v216, %v215
    %v219 = vld [vmem:[#allocation5] sm:$0xf]
    %v220 = vld [vmem:[#allocation5 + $0x4] sm:$0xf]
    %v221 = vld [vmem:[#allocation5 + $0x8] sm:$0xf]
    %v222 = vld [vmem:[#allocation5 + $0xc] sm:$0xf]
    %v223 = vld [vmem:[#allocation7] sm:$0xf]
    %v224 = vld [vmem:[#allocation7 + $0x4] sm:$0xf]
    %v225 = vld [vmem:[#allocation7 + $0x8] sm:$0xf]
    %v226 = vld [vmem:[#allocation7 + $0xc] sm:$0xf]
    %v227 = vld [vmem:[#allocation8] sm:$0xf]
    %v228 = vld [vmem:[#allocation8 + $0x4] sm:$0xf]
    %v229 = vld [vmem:[#allocation8 + $0x8] sm:$0xf]
    %v230 = vld [vmem:[#allocation8 + $0xc] sm:$0xf]
    %v231 = vld [vmem:[#allocation10] sm:$0x1]
    %v233 = vlaneseq
    %v234 = vshrl.u32 %v233, 7
    %v235 = vsub.s32 0, %v234
    %v236 = vrot.slane %v231, %v235
    %v242 = vunpack.c.l.b16 %v227
    %v243 = vunpack.c.l.b16 %v228
    %v244 = vunpack.c.l.b16 %v229
    %v245 = vunpack.c.l.b16 %v230
    %v246 = vpack.c.b16 %v243, %v242
    %v247 = vpack.c.b16 %v245, %v244
    %vm250 = vcmask 261120
    %v252 = vsel %vm250, %v217, 0
    %v255 = vsel %vm250, %v218, 0
    %257 = vmatprep.subr.bf16.mxu0 0
    %258 = vmatpush1.bf16.msra.mxu0 %v246
    %259 = vmatprep.subr.bf16.mxu0 0
    %260 = vmatpush1.bf16.msra.mxu0 %v247
    %261 = vmatprep.subr.bf16.mxu0 0
    %262 = vmatpush1.bf16.msra.mxu0 0
    %263 = vmatprep.subr.bf16.mxu0 0
    %264 = vmatpush1.bf16.msra.mxu0 0
    %265 = vmatprep.subr.bf16.mxu0 0
    %266 = vmatpush1.bf16.msra.mxu0 0
    %267 = vmatprep.subr.bf16.mxu0 0
    %268 = vmatpush1.bf16.msra.mxu0 0
    %269 = vmatprep.subr.bf16.mxu0 0
    %270 = vmatpush1.bf16.msra.mxu0 0
    %271 = vmatprep.subr.bf16.mxu0 0
    %272 = vmatpush1.bf16.msra.mxu0 0
    %273 = vmatprep.subr.bf16.mxu0 0
    %274 = vmatpush1.bf16.msra.mxu0 0
    %275 = vmatprep.subr.bf16.mxu0 0
    %276 = vmatpush1.bf16.msra.mxu0 0
    %277 = vmatprep.subr.bf16.mxu0 0
    %278 = vmatpush1.bf16.msra.mxu0 0
    %279 = vmatprep.subr.bf16.mxu0 0
    %280 = vmatpush1.bf16.msra.mxu0 0
    %281 = vmatprep.subr.bf16.mxu0 0
    %282 = vmatpush1.bf16.msra.mxu0 0
    %283 = vmatprep.subr.bf16.mxu0 0
    %284 = vmatpush1.bf16.msra.mxu0 0
    %285 = vmatprep.subr.bf16.mxu0 0
    %286 = vmatpush1.bf16.msra.mxu0 0
    %287 = vmatprep.subr.bf16.mxu0 0
    %288 = vmatpush1.bf16.msra.mxu0 0
    %289 = vmatprep.mubr.bf16.mxu0 0
    %290 = vmatmul.mubr.bf16.gmra.mrb[0].mxu0 %v252
    %v291 = vpop.f32.mrb[0].mxu0
    %v292 = vadd.f32 %v236, %v291
    %v293 = vpop.f32.mrb[0].mxu0
    %v294 = vpop.f32.mrb[0].mxu0
    %v295 = vadd.f32 %v236, %v294
    %v296 = vpop.f32.mrb[0].mxu0
    %297 = vmatprep.mubr.bf16.mxu0 0
    %298 = vmatmul.mubr.bf16.gmra.mrb[0].mxu0 %v255
    %v299 = vpop.f32.mrb[0].mxu0
    %v300 = vadd.f32 %v236, %v299
    %v301 = vpop.f32.mrb[0].mxu0
    %v302 = vpop.f32.mrb[0].mxu0
    %v303 = vadd.f32 %v236, %v302
    %v304 = vpop.f32.mrb[0].mxu0
    %305 = vdwg.mxu0
    %v306 = vld [vmem:[#allocation11] sm:$0xf]
    %v307 = vld [vmem:[#allocation11 + $0x4] sm:$0xf]
    %v308 = vld [vmem:[#allocation11 + $0x8] sm:$0xf]
    %v309 = vld [vmem:[#allocation11 + $0xc] sm:$0xf]
    %v310 = vld [vmem:[#allocation13] sm:$0x1]
    %v312 = vlaneseq
    %v313 = vshrl.u32 %v312, 7
    %v314 = vsub.s32 0, %v313
    %v315 = vrot.slane %v310, %v314
    %v321 = vunpack.c.l.b16 %v219
    %v322 = vunpack.c.l.b16 %v220
    %v323 = vunpack.c.l.b16 %v221
    %v324 = vunpack.c.l.b16 %v222
    %v325 = vpack.c.b16 %v322, %v321
    %v326 = vpack.c.b16 %v324, %v323
    %v331 = vunpack.c.l.b16 %v306
    %v332 = vunpack.c.l.b16 %v307
    %v333 = vunpack.c.l.b16 %v308
    %v334 = vunpack.c.l.b16 %v309
    %v335 = vpack.c.b16 %v332, %v331
    %v336 = vpack.c.b16 %v334, %v333
    %v340 = vsel %vm250, %v325, 0
    %v343 = vsel %vm250, %v326, 0
    %345 = vmatprep.subr.bf16.mxu0 0
    %346 = vmatpush1.bf16.msra.mxu0 %v335
    %347 = vmatprep.subr.bf16.mxu0 0
    %348 = vmatpush1.bf16.msra.mxu0 %v336
    %349 = vmatprep.subr.bf16.mxu0 0
    %350 = vmatpush1.bf16.msra.mxu0 0
    %351 = vmatprep.subr.bf16.mxu0 0
    %352 = vmatpush1.bf16.msra.mxu0 0
    %353 = vmatprep.subr.bf16.mxu0 0
    %354 = vmatpush1.bf16.msra.mxu0 0
    %355 = vmatprep.subr.bf16.mxu0 0
    %356 = vmatpush1.bf16.msra.mxu0 0
    %357 = vmatprep.subr.bf16.mxu0 0
    %358 = vmatpush1.bf16.msra.mxu0 0
    %359 = vmatprep.subr.bf16.mxu0 0
    %360 = vmatpush1.bf16.msra.mxu0 0
    %361 = vmatprep.subr.bf16.mxu0 0
    %362 = vmatpush1.bf16.msra.mxu0 0
    %363 = vmatprep.subr.bf16.mxu0 0
    %364 = vmatpush1.bf16.msra.mxu0 0
    %365 = vmatprep.subr.bf16.mxu0 0
    %366 = vmatpush1.bf16.msra.mxu0 0
    %367 = vmatprep.subr.bf16.mxu0 0
    %368 = vmatpush1.bf16.msra.mxu0 0
    %369 = vmatprep.subr.bf16.mxu0 0
    %370 = vmatpush1.bf16.msra.mxu0 0
    %371 = vmatprep.subr.bf16.mxu0 0
    %372 = vmatpush1.bf16.msra.mxu0 0
    %373 = vmatprep.subr.bf16.mxu0 0
    %374 = vmatpush1.bf16.msra.mxu0 0
    %375 = vmatprep.subr.bf16.mxu0 0
    %376 = vmatpush1.bf16.msra.mxu0 0
    %377 = vmatprep.mubr.bf16.mxu0 0
    %378 = vmatmul.mubr.bf16.gmra.mrb[0].mxu0 %v340
    %v379 = vpop.f32.mrb[0].mxu0
    %v380 = vadd.f32 %v315, %v379
    %v381 = vpop.f32.mrb[0].mxu0
    %v382 = vpop.f32.mrb[0].mxu0
    %v383 = vadd.f32 %v315, %v382
    %v384 = vpop.f32.mrb[0].mxu0
    %385 = vmatprep.mubr.bf16.mxu0 0
    %386 = vmatmul.mubr.bf16.gmra.mrb[0].mxu0 %v343
    %v387 = vpop.f32.mrb[0].mxu0
    %v388 = vadd.f32 %v315, %v387
    %v389 = vpop.f32.mrb[0].mxu0
    %v390 = vpop.f32.mrb[0].mxu0
    %v391 = vadd.f32 %v315, %v390
    %v392 = vpop.f32.mrb[0].mxu0
    %393 = vdwg.mxu0
    %v394 = vld [vmem:[#allocation14] sm:$0xf]
    %v395 = vld [vmem:[#allocation14 + $0x4] sm:$0xf]
    %v396 = vld [vmem:[#allocation14 + $0x8] sm:$0xf]
    %v397 = vld [vmem:[#allocation14 + $0xc] sm:$0xf]
    %v398 = vld [vmem:[#allocation16] sm:$0x1]
    %v400 = vlaneseq
    %v401 = vshrl.u32 %v400, 7
    %v402 = vsub.s32 0, %v401
    %v403 = vrot.slane %v398, %v402
    %v409 = vunpack.c.l.b16 %v223
    %v410 = vunpack.c.l.b16 %v224
    %v411 = vunpack.c.l.b16 %v225
    %v412 = vunpack.c.l.b16 %v226
    %v413 = vpack.c.b16 %v410, %v409
    %v414 = vpack.c.b16 %v412, %v411
    %v419 = vunpack.c.l.b16 %v394
    %v420 = vunpack.c.l.b16 %v395
    %v421 = vunpack.c.l.b16 %v396
    %v422 = vunpack.c.l.b16 %v397
    %v423 = vpack.c.b16 %v420, %v419
    %v424 = vpack.c.b16 %v422, %v421
    %v428 = vsel %vm250, %v413, 0
    %v431 = vsel %vm250, %v414, 0
    %433 = vmatprep.subr.bf16.mxu0 0
    %434 = vmatpush1.bf16.msra.mxu0 %v423
    %435 = vmatprep.subr.bf16.mxu0 0
    %436 = vmatpush1.bf16.msra.mxu0 %v424
    %437 = vmatprep.subr.bf16.mxu0 0
    %438 = vmatpush1.bf16.msra.mxu0 0
    %439 = vmatprep.subr.bf16.mxu0 0
    %440 = vmatpush1.bf16.msra.mxu0 0
    %441 = vmatprep.subr.bf16.mxu0 0
    %442 = vmatpush1.bf16.msra.mxu0 0
    %443 = vmatprep.subr.bf16.mxu0 0
    %444 = vmatpush1.bf16.msra.mxu0 0
    %445 = vmatprep.subr.bf16.mxu0 0
    %446 = vmatpush1.bf16.msra.mxu0 0
    %447 = vmatprep.subr.bf16.mxu0 0
    %448 = vmatpush1.bf16.msra.mxu0 0
    %449 = vmatprep.subr.bf16.mxu0 0
    %450 = vmatpush1.bf16.msra.mxu0 0
    %451 = vmatprep.subr.bf16.mxu0 0
    %452 = vmatpush1.bf16.msra.mxu0 0
    %453 = vmatprep.subr.bf16.mxu0 0
    %454 = vmatpush1.bf16.msra.mxu0 0
    %455 = vmatprep.subr.bf16.mxu0 0
    %456 = vmatpush1.bf16.msra.mxu0 0
    %457 = vmatprep.subr.bf16.mxu0 0
    %458 = vmatpush1.bf16.msra.mxu0 0
    %459 = vmatprep.subr.bf16.mxu0 0
    %460 = vmatpush1.bf16.msra.mxu0 0
    %461 = vmatprep.subr.bf16.mxu0 0
    %462 = vmatpush1.bf16.msra.mxu0 0
    %463 = vmatprep.subr.bf16.mxu0 0
    %464 = vmatpush1.bf16.msra.mxu0 0
    %465 = vmatprep.mubr.bf16.mxu0 0
    %466 = vmatmul.mubr.bf16.gmra.mrb[0].mxu0 %v428
    %v467 = vpop.f32.mrb[0].mxu0
    %v468 = vadd.f32 %v403, %v467
    %v469 = vpop.f32.mrb[0].mxu0
    %v470 = vpop.f32.mrb[0].mxu0
    %v471 = vadd.f32 %v403, %v470
    %v472 = vpop.f32.mrb[0].mxu0
    %473 = vmatprep.mubr.bf16.mxu0 0
    %474 = vmatmul.mubr.bf16.gmra.mrb[0].mxu0 %v431
    %v475 = vpop.f32.mrb[0].mxu0
    %v476 = vadd.f32 %v403, %v475
    %v477 = vpop.f32.mrb[0].mxu0
    %v478 = vpop.f32.mrb[0].mxu0
    %v479 = vadd.f32 %v403, %v478
    %v480 = vpop.f32.mrb[0].mxu0
    %481 = vdwg.mxu0
    %486 = vrot.lane.b32.xlu0 %v292, 120
    %v487 = vpop.permute.xlu0 %486
    %488 = vrot.lane.b32.xlu0 %v295, 120
    %v489 = vpop.permute.xlu0 %488
    %490 = vrot.lane.b32.xlu0 %v300, 120
    %v491 = vpop.permute.xlu0 %490
    %492 = vrot.lane.b32.xlu0 %v303, 120
    %v493 = vpop.permute.xlu0 %492
    %498 = vrot.lane.b32.xlu0 %v292, 112
    %v499 = vpop.permute.xlu0 %498
    %500 = vrot.lane.b32.xlu0 %v295, 112
    %v501 = vpop.permute.xlu0 %500
    %502 = vrot.lane.b32.xlu0 %v300, 112
    %v503 = vpop.permute.xlu0 %502
    %504 = vrot.lane.b32.xlu0 %v303, 112
    %v505 = vpop.permute.xlu0 %504
    %510 = vrot.lane.b32.xlu0 %v292, 104
    %v511 = vpop.permute.xlu0 %510
    %512 = vrot.lane.b32.xlu0 %v295, 104
    %v513 = vpop.permute.xlu0 %512
    %514 = vrot.lane.b32.xlu0 %v300, 104
    %v515 = vpop.permute.xlu0 %514
    %516 = vrot.lane.b32.xlu0 %v303, 104
    %v517 = vpop.permute.xlu0 %516
    %v522 = vpack.c.bf16 %v292, %v292
    %v523 = vpack.c.bf16 %v487, %v487
    %v524 = vpack.c.bf16 %v499, %v499
    %v525 = vpack.c.bf16 %v511, %v511
    %v526 = vpack.c.bf16 %v295, %v295
    %v527 = vpack.c.bf16 %v489, %v489
    %v528 = vpack.c.bf16 %v501, %v501
    %v529 = vpack.c.bf16 %v513, %v513
    %v530 = vpack.c.bf16 %v300, %v300
    %v531 = vpack.c.bf16 %v491, %v491
    %v532 = vpack.c.bf16 %v503, %v503
    %v533 = vpack.c.bf16 %v515, %v515
    %v534 = vpack.c.bf16 %v303, %v303
    %v535 = vpack.c.bf16 %v493, %v493
    %v536 = vpack.c.bf16 %v505, %v505
    %v537 = vpack.c.bf16 %v517, %v517
    %542 = vrot.lane.b32.xlu0 %v380, 120
    %v543 = vpop.permute.xlu0 %542
    %544 = vrot.lane.b32.xlu0 %v383, 120
    %v545 = vpop.permute.xlu0 %544
    %546 = vrot.lane.b32.xlu0 %v388, 120
    %v547 = vpop.permute.xlu0 %546
    %548 = vrot.lane.b32.xlu0 %v391, 120
    %v549 = vpop.permute.xlu0 %548
    %554 = vrot.lane.b32.xlu0 %v380, 112
    %v555 = vpop.permute.xlu0 %554
    %556 = vrot.lane.b32.xlu0 %v383, 112
    %v557 = vpop.permute.xlu0 %556
    %558 = vrot.lane.b32.xlu0 %v388, 112
    %v559 = vpop.permute.xlu0 %558
    %560 = vrot.lane.b32.xlu0 %v391, 112
    %v561 = vpop.permute.xlu0 %560
    %566 = vrot.lane.b32.xlu0 %v380, 104
    %v567 = vpop.permute.xlu0 %566
    %568 = vrot.lane.b32.xlu0 %v383, 104
    %v569 = vpop.permute.xlu0 %568
    %570 = vrot.lane.b32.xlu0 %v388, 104
    %v571 = vpop.permute.xlu0 %570
    %572 = vrot.lane.b32.xlu0 %v391, 104
    %v573 = vpop.permute.xlu0 %572
    %v578 = vpack.c.bf16 %v380, %v380
    %v579 = vpack.c.bf16 %v543, %v543
    %v580 = vpack.c.bf16 %v555, %v555
    %v581 = vpack.c.bf16 %v567, %v567
    %v582 = vpack.c.bf16 %v383, %v383
    %v583 = vpack.c.bf16 %v545, %v545
    %v584 = vpack.c.bf16 %v557, %v557
    %v585 = vpack.c.bf16 %v569, %v569
    %v586 = vpack.c.bf16 %v388, %v388
    %v587 = vpack.c.bf16 %v547, %v547
    %v588 = vpack.c.bf16 %v559, %v559
    %v589 = vpack.c.bf16 %v571, %v571
    %v590 = vpack.c.bf16 %v391, %v391
    %v591 = vpack.c.bf16 %v549, %v549
    %v592 = vpack.c.bf16 %v561, %v561
    %v593 = vpack.c.bf16 %v573, %v573
    %598 = vrot.lane.b32.xlu0 %v468, 120
    %v599 = vpop.permute.xlu0 %598
    %600 = vrot.lane.b32.xlu0 %v471, 120
    %v601 = vpop.permute.xlu0 %600
    %602 = vrot.lane.b32.xlu0 %v476, 120
    %v603 = vpop.permute.xlu0 %602
    %604 = vrot.lane.b32.xlu0 %v479, 120
    %v605 = vpop.permute.xlu0 %604
    %610 = vrot.lane.b32.xlu0 %v468, 112
    %v611 = vpop.permute.xlu0 %610
    %612 = vrot.lane.b32.xlu0 %v471, 112
    %v613 = vpop.permute.xlu0 %612
    %614 = vrot.lane.b32.xlu0 %v476, 112
    %v615 = vpop.permute.xlu0 %614
    %616 = vrot.lane.b32.xlu0 %v479, 112
    %v617 = vpop.permute.xlu0 %616
    %622 = vrot.lane.b32.xlu0 %v468, 104
    %v623 = vpop.permute.xlu0 %622
    %624 = vrot.lane.b32.xlu0 %v471, 104
    %v625 = vpop.permute.xlu0 %624
    %626 = vrot.lane.b32.xlu0 %v476, 104
    %v627 = vpop.permute.xlu0 %626
    %628 = vrot.lane.b32.xlu0 %v479, 104
    %v629 = vpop.permute.xlu0 %628
    %v634 = vpack.c.bf16 %v468, %v468
    %v635 = vpack.c.bf16 %v599, %v599
    %v636 = vpack.c.bf16 %v611, %v611
    %v637 = vpack.c.bf16 %v623, %v623
    %v638 = vpack.c.bf16 %v471, %v471
    %v639 = vpack.c.bf16 %v601, %v601
    %v640 = vpack.c.bf16 %v613, %v613
    %v641 = vpack.c.bf16 %v625, %v625
    %v642 = vpack.c.bf16 %v476, %v476
    %v643 = vpack.c.bf16 %v603, %v603
    %v644 = vpack.c.bf16 %v615, %v615
    %v645 = vpack.c.bf16 %v627, %v627
    %v646 = vpack.c.bf16 %v479, %v479
    %v647 = vpack.c.bf16 %v605, %v605
    %v648 = vpack.c.bf16 %v617, %v617
    %v649 = vpack.c.bf16 %v629, %v629
    %vm650 = vcmask 64512
    %v652 = vsel %vm650, %v522, 0
    %v655 = vsel %vm650, %v578, 0
    %657 = vmatprep.subr.bf16.mxu0 0
    %658 = vmatpush1.bf16.xpose.msra.mxu0 %v655
    %659 = vmatprep.subr.bf16.mxu0 0
    %660 = vmatpush1.bf16.xpose.msra.mxu0 0
    %661 = vmatprep.subr.bf16.mxu0 0
    %662 = vmatpush1.bf16.xpose.msra.mxu0 0
    %663 = vmatprep.subr.bf16.mxu0 0
    %664 = vmatpush1.bf16.xpose.msra.mxu0 0
    %665 = vmatprep.subr.bf16.mxu0 0
    %666 = vmatpush1.bf16.xpose.msra.mxu0 0
    %667 = vmatprep.subr.bf16.mxu0 0
    %668 = vmatpush1.bf16.xpose.msra.mxu0 0
    %669 = vmatprep.subr.bf16.mxu0 0
    %670 = vmatpush1.bf16.xpose.msra.mxu0 0
    %671 = vmatprep.subr.bf16.mxu0 0
    %672 = vmatpush1.bf16.xpose.msra.mxu0 0
    %673 = vmatprep.subr.bf16.mxu0 0
    %674 = vmatpush1.bf16.xpose.msra.mxu0 0
    %675 = vmatprep.subr.bf16.mxu0 0
    %676 = vmatpush1.bf16.xpose.msra.mxu0 0
    %677 = vmatprep.subr.bf16.mxu0 0
    %678 = vmatpush1.bf16.xpose.msra.mxu0 0
    %679 = vmatprep.subr.bf16.mxu0 0
    %680 = vmatpush1.bf16.xpose.msra.mxu0 0
    %681 = vmatprep.subr.bf16.mxu0 0
    %682 = vmatpush1.bf16.xpose.msra.mxu0 0
    %683 = vmatprep.subr.bf16.mxu0 0
    %684 = vmatpush1.bf16.xpose.msra.mxu0 0
    %685 = vmatprep.subr.bf16.mxu0 0
    %686 = vmatpush1.bf16.xpose.msra.mxu0 0
    %687 = vmatprep.subr.bf16.mxu0 0
    %688 = vmatpush1.bf16.xpose.msra.mxu0 0
    %689 = vmatprep.mubr.bf16.mxu0 0
    %690 = vmatmul.mubr.bf16.gmra.mrb[0].mxu0 %v652
    %v691 = vpop.f32.mrb[0].mxu0
    %v692 = vadd.f32 0.0, %v691
    %v693 = vpop.f32.mrb[0].mxu0
    %v694 = vpop.f32.mrb[0].mxu0
    %v695 = vpop.f32.mrb[0].mxu0
    %696 = vdwg.mxu0
    %v698 = vsel %vm650, %v523, 0
    %v701 = vsel %vm650, %v579, 0
    %703 = vmatprep.subr.bf16.mxu0 0
    %704 = vmatpush1.bf16.xpose.msra.mxu0 %v701
    %705 = vmatprep.subr.bf16.mxu0 0
    %706 = vmatpush1.bf16.xpose.msra.mxu0 0
    %707 = vmatprep.subr.bf16.mxu0 0
    %708 = vmatpush1.bf16.xpose.msra.mxu0 0
    %709 = vmatprep.subr.bf16.mxu0 0
    %710 = vmatpush1.bf16.xpose.msra.mxu0 0
    %711 = vmatprep.subr.bf16.mxu0 0
    %712 = vmatpush1.bf16.xpose.msra.mxu0 0
    %713 = vmatprep.subr.bf16.mxu0 0
    %714 = vmatpush1.bf16.xpose.msra.mxu0 0
    %715 = vmatprep.subr.bf16.mxu0 0
    %716 = vmatpush1.bf16.xpose.msra.mxu0 0
    %717 = vmatprep.subr.bf16.mxu0 0
    %718 = vmatpush1.bf16.xpose.msra.mxu0 0
    %719 = vmatprep.subr.bf16.mxu0 0
    %720 = vmatpush1.bf16.xpose.msra.mxu0 0
    %721 = vmatprep.subr.bf16.mxu0 0
    %722 = vmatpush1.bf16.xpose.msra.mxu0 0
    %723 = vmatprep.subr.bf16.mxu0 0
    %724 = vmatpush1.bf16.xpose.msra.mxu0 0
    %725 = vmatprep.subr.bf16.mxu0 0
    %726 = vmatpush1.bf16.xpose.msra.mxu0 0
    %727 = vmatprep.subr.bf16.mxu0 0
    %728 = vmatpush1.bf16.xpose.msra.mxu0 0
    %729 = vmatprep.subr.bf16.mxu0 0
    %730 = vmatpush1.bf16.xpose.msra.mxu0 0
    %731 = vmatprep.subr.bf16.mxu0 0
    %732 = vmatpush1.bf16.xpose.msra.mxu0 0
    %733 = vmatprep.subr.bf16.mxu0 0
    %734 = vmatpush1.bf16.xpose.msra.mxu0 0
    %735 = vmatprep.mubr.bf16.mxu0 0
    %736 = vmatmul.mubr.bf16.gmra.mrb[0].mxu0 %v698
    %v737 = vpop.f32.mrb[0].mxu0
    %v738 = vadd.f32 0.0, %v737
    %v739 = vpop.f32.mrb[0].mxu0
    %v740 = vpop.f32.mrb[0].mxu0
    %v741 = vpop.f32.mrb[0].mxu0
    %742 = vdwg.mxu0
    %v744 = vsel %vm650, %v524, 0
    %v747 = vsel %vm650, %v580, 0
    %749 = vmatprep.subr.bf16.mxu0 0
    %750 = vmatpush1.bf16.xpose.msra.mxu0 %v747
    %751 = vmatprep.subr.bf16.mxu0 0
    %752 = vmatpush1.bf16.xpose.msra.mxu0 0
    %753 = vmatprep.subr.bf16.mxu0 0
    %754 = vmatpush1.bf16.xpose.msra.mxu0 0
    %755 = vmatprep.subr.bf16.mxu0 0
    %756 = vmatpush1.bf16.xpose.msra.mxu0 0
    %757 = vmatprep.subr.bf16.mxu0 0
    %758 = vmatpush1.bf16.xpose.msra.mxu0 0
    %759 = vmatprep.subr.bf16.mxu0 0
    %760 = vmatpush1.bf16.xpose.msra.mxu0 0
    %761 = vmatprep.subr.bf16.mxu0 0
    %762 = vmatpush1.bf16.xpose.msra.mxu0 0
    %763 = vmatprep.subr.bf16.mxu0 0
    %764 = vmatpush1.bf16.xpose.msra.mxu0 0
    %765 = vmatprep.subr.bf16.mxu0 0
    %766 = vmatpush1.bf16.xpose.msra.mxu0 0
    %767 = vmatprep.subr.bf16.mxu0 0
    %768 = vmatpush1.bf16.xpose.msra.mxu0 0
    %769 = vmatprep.subr.bf16.mxu0 0
    %770 = vmatpush1.bf16.xpose.msra.mxu0 0
    %771 = vmatprep.subr.bf16.mxu0 0
    %772 = vmatpush1.bf16.xpose.msra.mxu0 0
    %773 = vmatprep.subr.bf16.mxu0 0
    %774 = vmatpush1.bf16.xpose.msra.mxu0 0
    %775 = vmatprep.subr.bf16.mxu0 0
    %776 = vmatpush1.bf16.xpose.msra.mxu0 0
    %777 = vmatprep.subr.bf16.mxu0 0
    %778 = vmatpush1.bf16.xpose.msra.mxu0 0
    %779 = vmatprep.subr.bf16.mxu0 0
    %780 = vmatpush1.bf16.xpose.msra.mxu0 0
    %781 = vmatprep.mubr.bf16.mxu0 0
    %782 = vmatmul.mubr.bf16.gmra.mrb[0].mxu0 %v744
    %v783 = vpop.f32.mrb[0].mxu0
    %v784 = vadd.f32 0.0, %v783
    %v785 = vpop.f32.mrb[0].mxu0
    %v786 = vpop.f32.mrb[0].mxu0
    %v787 = vpop.f32.mrb[0].mxu0
    %788 = vdwg.mxu0
    %v790 = vsel %vm650, %v525, 0
    %v793 = vsel %vm650, %v581, 0
    %795 = vmatprep.subr.bf16.mxu0 0
    %796 = vmatpush1.bf16.xpose.msra.mxu0 %v793
    %797 = vmatprep.subr.bf16.mxu0 0
    %798 = vmatpush1.bf16.xpose.msra.mxu0 0
    %799 = vmatprep.subr.bf16.mxu0 0
    %800 = vmatpush1.bf16.xpose.msra.mxu0 0
    %801 = vmatprep.subr.bf16.mxu0 0
    %802 = vmatpush1.bf16.xpose.msra.mxu0 0
    %803 = vmatprep.subr.bf16.mxu0 0
    %804 = vmatpush1.bf16.xpose.msra.mxu0 0
    %805 = vmatprep.subr.bf16.mxu0 0
    %806 = vmatpush1.bf16.xpose.msra.mxu0 0
    %807 = vmatprep.subr.bf16.mxu0 0
    %808 = vmatpush1.bf16.xpose.msra.mxu0 0
    %809 = vmatprep.subr.bf16.mxu0 0
    %810 = vmatpush1.bf16.xpose.msra.mxu0 0
    %811 = vmatprep.subr.bf16.mxu0 0
    %812 = vmatpush1.bf16.xpose.msra.mxu0 0
    %813 = vmatprep.subr.bf16.mxu0 0
    %814 = vmatpush1.bf16.xpose.msra.mxu0 0
    %815 = vmatprep.subr.bf16.mxu0 0
    %816 = vmatpush1.bf16.xpose.msra.mxu0 0
    %817 = vmatprep.subr.bf16.mxu0 0
    %818 = vmatpush1.bf16.xpose.msra.mxu0 0
    %819 = vmatprep.subr.bf16.mxu0 0
    %820 = vmatpush1.bf16.xpose.msra.mxu0 0
    %821 = vmatprep.subr.bf16.mxu0 0
    %822 = vmatpush1.bf16.xpose.msra.mxu0 0
    %823 = vmatprep.subr.bf16.mxu0 0
    %824 = vmatpush1.bf16.xpose.msra.mxu0 0
    %825 = vmatprep.subr.bf16.mxu0 0
    %826 = vmatpush1.bf16.xpose.msra.mxu0 0
    %827 = vmatprep.mubr.bf16.mxu0 0
    %828 = vmatmul.mubr.bf16.gmra.mrb[0].mxu0 %v790
    %v829 = vpop.f32.mrb[0].mxu0
    %v830 = vadd.f32 0.0, %v829
    %v831 = vpop.f32.mrb[0].mxu0
    %v832 = vpop.f32.mrb[0].mxu0
    %v833 = vpop.f32.mrb[0].mxu0
    %834 = vdwg.mxu0
    %v836 = vsel %vm650, %v526, 0
    %v839 = vsel %vm650, %v582, 0
    %841 = vmatprep.subr.bf16.mxu0 0
    %842 = vmatpush1.bf16.xpose.msra.mxu0 %v839
    %843 = vmatprep.subr.bf16.mxu0 0
    %844 = vmatpush1.bf16.xpose.msra.mxu0 0
    %845 = vmatprep.subr.bf16.mxu0 0
    %846 = vmatpush1.bf16.xpose.msra.mxu0 0
    %847 = vmatprep.subr.bf16.mxu0 0
    %848 = vmatpush1.bf16.xpose.msra.mxu0 0
    %849 = vmatprep.subr.bf16.mxu0 0
    %850 = vmatpush1.bf16.xpose.msra.mxu0 0
    %851 = vmatprep.subr.bf16.mxu0 0
    %852 = vmatpush1.bf16.xpose.msra.mxu0 0
    %853 = vmatprep.subr.bf16.mxu0 0
    %854 = vmatpush1.bf16.xpose.msra.mxu0 0
    %855 = vmatprep.subr.bf16.mxu0 0
    %856 = vmatpush1.bf16.xpose.msra.mxu0 0
    %857 = vmatprep.subr.bf16.mxu0 0
    %858 = vmatpush1.bf16.xpose.msra.mxu0 0
    %859 = vmatprep.subr.bf16.mxu0 0
    %860 = vmatpush1.bf16.xpose.msra.mxu0 0
    %861 = vmatprep.subr.bf16.mxu0 0
    %862 = vmatpush1.bf16.xpose.msra.mxu0 0
    %863 = vmatprep.subr.bf16.mxu0 0
    %864 = vmatpush1.bf16.xpose.msra.mxu0 0
    %865 = vmatprep.subr.bf16.mxu0 0
    %866 = vmatpush1.bf16.xpose.msra.mxu0 0
    %867 = vmatprep.subr.bf16.mxu0 0
    %868 = vmatpush1.bf16.xpose.msra.mxu0 0
    %869 = vmatprep.subr.bf16.mxu0 0
    %870 = vmatpush1.bf16.xpose.msra.mxu0 0
    %871 = vmatprep.subr.bf16.mxu0 0
    %872 = vmatpush1.bf16.xpose.msra.mxu0 0
    %873 = vmatprep.mubr.bf16.mxu0 0
    %874 = vmatmul.mubr.bf16.gmra.mrb[0].mxu0 %v836
    %v875 = vpop.f32.mrb[0].mxu0
    %v876 = vadd.f32 0.0, %v875
    %v877 = vpop.f32.mrb[0].mxu0
    %v878 = vpop.f32.mrb[0].mxu0
    %v879 = vpop.f32.mrb[0].mxu0
    %880 = vdwg.mxu0
    %v882 = vsel %vm650, %v527, 0
    %v885 = vsel %vm650, %v583, 0
    %887 = vmatprep.subr.bf16.mxu0 0
    %888 = vmatpush1.bf16.xpose.msra.mxu0 %v885
    %889 = vmatprep.subr.bf16.mxu0 0
    %890 = vmatpush1.bf16.xpose.msra.mxu0 0
    %891 = vmatprep.subr.bf16.mxu0 0
    %892 = vmatpush1.bf16.xpose.msra.mxu0 0
    %893 = vmatprep.subr.bf16.mxu0 0
    %894 = vmatpush1.bf16.xpose.msra.mxu0 0
    %895 = vmatprep.subr.bf16.mxu0 0
    %896 = vmatpush1.bf16.xpose.msra.mxu0 0
    %897 = vmatprep.subr.bf16.mxu0 0
    %898 = vmatpush1.bf16.xpose.msra.mxu0 0
    %899 = vmatprep.subr.bf16.mxu0 0
    %900 = vmatpush1.bf16.xpose.msra.mxu0 0
    %901 = vmatprep.subr.bf16.mxu0 0
    %902 = vmatpush1.bf16.xpose.msra.mxu0 0
    %903 = vmatprep.subr.bf16.mxu0 0
    %904 = vmatpush1.bf16.xpose.msra.mxu0 0
    %905 = vmatprep.subr.bf16.mxu0 0
    %906 = vmatpush1.bf16.xpose.msra.mxu0 0
    %907 = vmatprep.subr.bf16.mxu0 0
    %908 = vmatpush1.bf16.xpose.msra.mxu0 0
    %909 = vmatprep.subr.bf16.mxu0 0
    %910 = vmatpush1.bf16.xpose.msra.mxu0 0
    %911 = vmatprep.subr.bf16.mxu0 0
    %912 = vmatpush1.bf16.xpose.msra.mxu0 0
    %913 = vmatprep.subr.bf16.mxu0 0
    %914 = vmatpush1.bf16.xpose.msra.mxu0 0
    %915 = vmatprep.subr.bf16.mxu0 0
    %916 = vmatpush1.bf16.xpose.msra.mxu0 0
    %917 = vmatprep.subr.bf16.mxu0 0
    %918 = vmatpush1.bf16.xpose.msra.mxu0 0
    %919 = vmatprep.mubr.bf16.mxu0 0
    %920 = vmatmul.mubr.bf16.gmra.mrb[0].mxu0 %v882
    %v921 = vpop.f32.mrb[0].mxu0
    %v922 = vadd.f32 0.0, %v921
    %v923 = vpop.f32.mrb[0].mxu0
    %v924 = vpop.f32.mrb[0].mxu0
    %v925 = vpop.f32.mrb[0].mxu0
    %926 = vdwg.mxu0
    %v928 = vsel %vm650, %v528, 0
    %v931 = vsel %vm650, %v584, 0
    %933 = vmatprep.subr.bf16.mxu0 0
    %934 = vmatpush1.bf16.xpose.msra.mxu0 %v931
    %935 = vmatprep.subr.bf16.mxu0 0
    %936 = vmatpush1.bf16.xpose.msra.mxu0 0
    %937 = vmatprep.subr.bf16.mxu0 0
    %938 = vmatpush1.bf16.xpose.msra.mxu0 0
    %939 = vmatprep.subr.bf16.mxu0 0
    %940 = vmatpush1.bf16.xpose.msra.mxu0 0
    %941 = vmatprep.subr.bf16.mxu0 0
    %942 = vmatpush1.bf16.xpose.msra.mxu0 0
    %943 = vmatprep.subr.bf16.mxu0 0
    %944 = vmatpush1.bf16.xpose.msra.mxu0 0
    %945 = vmatprep.subr.bf16.mxu0 0
    %946 = vmatpush1.bf16.xpose.msra.mxu0 0
    %947 = vmatprep.subr.bf16.mxu0 0
    %948 = vmatpush1.bf16.xpose.msra.mxu0 0
    %949 = vmatprep.subr.bf16.mxu0 0
    %950 = vmatpush1.bf16.xpose.msra.mxu0 0
    %951 = vmatprep.subr.bf16.mxu0 0
    %952 = vmatpush1.bf16.xpose.msra.mxu0 0
    %953 = vmatprep.subr.bf16.mxu0 0
    %954 = vmatpush1.bf16.xpose.msra.mxu0 0
    %955 = vmatprep.subr.bf16.mxu0 0
    %956 = vmatpush1.bf16.xpose.msra.mxu0 0
    %957 = vmatprep.subr.bf16.mxu0 0
    %958 = vmatpush1.bf16.xpose.msra.mxu0 0
    %959 = vmatprep.subr.bf16.mxu0 0
    %960 = vmatpush1.bf16.xpose.msra.mxu0 0
    %961 = vmatprep.subr.bf16.mxu0 0
    %962 = vmatpush1.bf16.xpose.msra.mxu0 0
    %963 = vmatprep.subr.bf16.mxu0 0
    %964 = vmatpush1.bf16.xpose.msra.mxu0 0
    %965 = vmatprep.mubr.bf16.mxu0 0
    %966 = vmatmul.mubr.bf16.gmra.mrb[0].mxu0 %v928
    %v967 = vpop.f32.mrb[0].mxu0
    %v968 = vadd.f32 0.0, %v967
    %v969 = vpop.f32.mrb[0].mxu0
    %v970 = vpop.f32.mrb[0].mxu0
    %v971 = vpop.f32.mrb[0].mxu0
    %972 = vdwg.mxu0
    %v974 = vsel %vm650, %v529, 0
    %v977 = vsel %vm650, %v585, 0
    %979 = vmatprep.subr.bf16.mxu0 0
    %980 = vmatpush1.bf16.xpose.msra.mxu0 %v977
    %981 = vmatprep.subr.bf16.mxu0 0
    %982 = vmatpush1.bf16.xpose.msra.mxu0 0
    %983 = vmatprep.subr.bf16.mxu0 0
    %984 = vmatpush1.bf16.xpose.msra.mxu0 0
    %985 = vmatprep.subr.bf16.mxu0 0
    %986 = vmatpush1.bf16.xpose.msra.mxu0 0
    %987 = vmatprep.subr.bf16.mxu0 0
    %988 = vmatpush1.bf16.xpose.msra.mxu0 0
    %989 = vmatprep.subr.bf16.mxu0 0
    %990 = vmatpush1.bf16.xpose.msra.mxu0 0
    %991 = vmatprep.subr.bf16.mxu0 0
    %992 = vmatpush1.bf16.xpose.msra.mxu0 0
    %993 = vmatprep.subr.bf16.mxu0 0
    %994 = vmatpush1.bf16.xpose.msra.mxu0 0
    %995 = vmatprep.subr.bf16.mxu0 0
    %996 = vmatpush1.bf16.xpose.msra.mxu0 0
    %997 = vmatprep.subr.bf16.mxu0 0
    %998 = vmatpush1.bf16.xpose.msra.mxu0 0
    %999 = vmatprep.subr.bf16.mxu0 0
    %1000 = vmatpush1.bf16.xpose.msra.mxu0 0
    %1001 = vmatprep.subr.bf16.mxu0 0
    %1002 = vmatpush1.bf16.xpose.msra.mxu0 0
    %1003 = vmatprep.subr.bf16.mxu0 0
    %1004 = vmatpush1.bf16.xpose.msra.mxu0 0
    %1005 = vmatprep.subr.bf16.mxu0 0
    %1006 = vmatpush1.bf16.xpose.msra.mxu0 0
    %1007 = vmatprep.subr.bf16.mxu0 0
    %1008 = vmatpush1.bf16.xpose.msra.mxu0 0
    %1009 = vmatprep.subr.bf16.mxu0 0
    %1010 = vmatpush1.bf16.xpose.msra.mxu0 0
    %1011 = vmatprep.mubr.bf16.mxu0 0
    %1012 = vmatmul.mubr.bf16.gmra.mrb[0].mxu0 %v974
    %v1013 = vpop.f32.mrb[0].mxu0
    %v1014 = vadd.f32 0.0, %v1013
    %v1015 = vpop.f32.mrb[0].mxu0
    %v1016 = vpop.f32.mrb[0].mxu0
    %v1017 = vpop.f32.mrb[0].mxu0
    %1018 = vdwg.mxu0
    %v1020 = vsel %vm650, %v530, 0
    %v1023 = vsel %vm650, %v586, 0
    %1025 = vmatprep.subr.bf16.mxu0 0
    %1026 = vmatpush1.bf16.xpose.msra.mxu0 %v1023
    %1027 = vmatprep.subr.bf16.mxu0 0
    %1028 = vmatpush1.bf16.xpose.msra.mxu0 0
    %1029 = vmatprep.subr.bf16.mxu0 0
    %1030 = vmatpush1.bf16.xpose.msra.mxu0 0
    %1031 = vmatprep.subr.bf16.mxu0 0
    %1032 = vmatpush1.bf16.xpose.msra.mxu0 0
    %1033 = vmatprep.subr.bf16.mxu0 0
    %1034 = vmatpush1.bf16.xpose.msra.mxu0 0
    %1035 = vmatprep.subr.bf16.mxu0 0
    %1036 = vmatpush1.bf16.xpose.msra.mxu0 0
    %1037 = vmatprep.subr.bf16.mxu0 0
    %1038 = vmatpush1.bf16.xpose.msra.mxu0 0
    %1039 = vmatprep.subr.bf16.mxu0 0
    %1040 = vmatpush1.bf16.xpose.msra.mxu0 0
    %1041 = vmatprep.subr.bf16.mxu0 0
    %1042 = vmatpush1.bf16.xpose.msra.mxu0 0
    %1043 = vmatprep.subr.bf16.mxu0 0
    %1044 = vmatpush1.bf16.xpose.msra.mxu0 0
    %1045 = vmatprep.subr.bf16.mxu0 0
    %1046 = vmatpush1.bf16.xpose.msra.mxu0 0
    %1047 = vmatprep.subr.bf16.mxu0 0
    %1048 = vmatpush1.bf16.xpose.msra.mxu0 0
    %1049 = vmatprep.subr.bf16.mxu0 0
    %1050 = vmatpush1.bf16.xpose.msra.mxu0 0
    %1051 = vmatprep.subr.bf16.mxu0 0
    %1052 = vmatpush1.bf16.xpose.msra.mxu0 0
    %1053 = vmatprep.subr.bf16.mxu0 0
    %1054 = vmatpush1.bf16.xpose.msra.mxu0 0
    %1055 = vmatprep.subr.bf16.mxu0 0
    %1056 = vmatpush1.bf16.xpose.msra.mxu0 0
    %1057 = vmatprep.mubr.bf16.mxu0 0
    %1058 = vmatmul.mubr.bf16.gmra.mrb[0].mxu0 %v1020
    %v1059 = vpop.f32.mrb[0].mxu0
    %v1060 = vadd.f32 0.0, %v1059
    %v1061 = vpop.f32.mrb[0].mxu0
    %v1062 = vpop.f32.mrb[0].mxu0
    %v1063 = vpop.f32.mrb[0].mxu0
    %1064 = vdwg.mxu0
    %v1066 = vsel %vm650, %v531, 0
    %v1069 = vsel %vm650, %v587, 0
    %1071 = vmatprep.subr.bf16.mxu0 0
    %1072 = vmatpush1.bf16.xpose.msra.mxu0 %v1069
    %1073 = vmatprep.subr.bf16.mxu0 0
    %1074 = vmatpush1.bf16.xpose.msra.mxu0 0
    %1075 = vmatprep.subr.bf16.mxu0 0
    %1076 = vmatpush1.bf16.xpose.msra.mxu0 0
    %1077 = vmatprep.subr.bf16.mxu0 0
    %1078 = vmatpush1.bf16.xpose.msra.mxu0 0
    %1079 = vmatprep.subr.bf16.mxu0 0
    %1080 = vmatpush1.bf16.xpose.msra.mxu0 0
    %1081 = vmatprep.subr.bf16.mxu0 0
    %1082 = vmatpush1.bf16.xpose.msra.mxu0 0
    %1083 = vmatprep.subr.bf16.mxu0 0
    %1084 = vmatpush1.bf16.xpose.msra.mxu0 0
    %1085 = vmatprep.subr.bf16.mxu0 0
    %1086 = vmatpush1.bf16.xpose.msra.mxu0 0
    %1087 = vmatprep.subr.bf16.mxu0 0
    %1088 = vmatpush1.bf16.xpose.msra.mxu0 0
    %1089 = vmatprep.subr.bf16.mxu0 0
    %1090 = vmatpush1.bf16.xpose.msra.mxu0 0
    %1091 = vmatprep.subr.bf16.mxu0 0
    %1092 = vmatpush1.bf16.xpose.msra.mxu0 0
    %1093 = vmatprep.subr.bf16.mxu0 0
    %1094 = vmatpush1.bf16.xpose.msra.mxu0 0
    %1095 = vmatprep.subr.bf16.mxu0 0
    %1096 = vmatpush1.bf16.xpose.msra.mxu0 0
    %1097 = vmatprep.subr.bf16.mxu0 0
    %1098 = vmatpush1.bf16.xpose.msra.mxu0 0
    %1099 = vmatprep.subr.bf16.mxu0 0
    %1100 = vmatpush1.bf16.xpose.msra.mxu0 0
    %1101 = vmatprep.subr.bf16.mxu0 0
    %1102 = vmatpush1.bf16.xpose.msra.mxu0 0
    %1103 = vmatprep.mubr.bf16.mxu0 0
    %1104 = vmatmul.mubr.bf16.gmra.mrb[0].mxu0 %v1066
    %v1105 = vpop.f32.mrb[0].mxu0
    %v1106 = vadd.f32 0.0, %v1105
    %v1107 = vpop.f32.mrb[0].mxu0
    %v1108 = vpop.f32.mrb[0].mxu0
    %v1109 = vpop.f32.mrb[0].mxu0
    %1110 = vdwg.mxu0
    %v1112 = vsel %vm650, %v532, 0
    %v1115 = vsel %vm650, %v588, 0
    %1117 = vmatprep.subr.bf16.mxu0 0
    %1118 = vmatpush1.bf16.xpose.msra.mxu0 %v1115
    %1119 = vmatprep.subr.bf16.mxu0 0
    %1120 = vmatpush1.bf16.xpose.msra.mxu0 0
    %1121 = vmatprep.subr.bf16.mxu0 0
    %1122 = vmatpush1.bf16.xpose.msra.mxu0 0
    %1123 = vmatprep.subr.bf16.mxu0 0
    %1124 = vmatpush1.bf16.xpose.msra.mxu0 0
    %1125 = vmatprep.subr.bf16.mxu0 0
    %1126 = vmatpush1.bf16.xpose.msra.mxu0 0
    %1127 = vmatprep.subr.bf16.mxu0 0
    %1128 = vmatpush1.bf16.xpose.msra.mxu0 0
    %1129 = vmatprep.subr.bf16.mxu0 0
    %1130 = vmatpush1.bf16.xpose.msra.mxu0 0
    %1131 = vmatprep.subr.bf16.mxu0 0
    %1132 = vmatpush1.bf16.xpose.msra.mxu0 0
    %1133 = vmatprep.subr.bf16.mxu0 0
    %1134 = vmatpush1.bf16.xpose.msra.mxu0 0
    %1135 = vmatprep.subr.bf16.mxu0 0
    %1136 = vmatpush1.bf16.xpose.msra.mxu0 0
    %1137 = vmatprep.subr.bf16.mxu0 0
    %1138 = vmatpush1.bf16.xpose.msra.mxu0 0
    %1139 = vmatprep.subr.bf16.mxu0 0
    %1140 = vmatpush1.bf16.xpose.msra.mxu0 0
    %1141 = vmatprep.subr.bf16.mxu0 0
    %1142 = vmatpush1.bf16.xpose.msra.mxu0 0
    %1143 = vmatprep.subr.bf16.mxu0 0
    %1144 = vmatpush1.bf16.xpose.msra.mxu0 0
    %1145 = vmatprep.subr.bf16.mxu0 0
    %1146 = vmatpush1.bf16.xpose.msra.mxu0 0
    %1147 = vmatprep.subr.bf16.mxu0 0
    %1148 = vmatpush1.bf16.xpose.msra.mxu0 0
    %1149 = vmatprep.mubr.bf16.mxu0 0
    %1150 = vmatmul.mubr.bf16.gmra.mrb[0].mxu0 %v1112
    %v1151 = vpop.f32.mrb[0].mxu0
    %v1152 = vadd.f32 0.0, %v1151
    %v1153 = vpop.f32.mrb[0].mxu0
    %v1154 = vpop.f32.mrb[0].mxu0
    %v1155 = vpop.f32.mrb[0].mxu0
    %1156 = vdwg.mxu0
    %v1158 = vsel %vm650, %v533, 0
    %v1161 = vsel %vm650, %v589, 0
    %1163 = vmatprep.subr.bf16.mxu0 0
    %1164 = vmatpush1.bf16.xpose.msra.mxu0 %v1161
    %1165 = vmatprep.subr.bf16.mxu0 0
    %1166 = vmatpush1.bf16.xpose.msra.mxu0 0
    %1167 = vmatprep.subr.bf16.mxu0 0
    %1168 = vmatpush1.bf16.xpose.msra.mxu0 0
    %1169 = vmatprep.subr.bf16.mxu0 0
    %1170 = vmatpush1.bf16.xpose.msra.mxu0 0
    %1171 = vmatprep.subr.bf16.mxu0 0
    %1172 = vmatpush1.bf16.xpose.msra.mxu0 0
    %1173 = vmatprep.subr.bf16.mxu0 0
    %1174 = vmatpush1.bf16.xpose.msra.mxu0 0
    %1175 = vmatprep.subr.bf16.mxu0 0
    %1176 = vmatpush1.bf16.xpose.msra.mxu0 0
    %1177 = vmatprep.subr.bf16.mxu0 0
    %1178 = vmatpush1.bf16.xpose.msra.mxu0 0
    %1179 = vmatprep.subr.bf16.mxu0 0
    %1180 = vmatpush1.bf16.xpose.msra.mxu0 0
    %1181 = vmatprep.subr.bf16.mxu0 0
    %1182 = vmatpush1.bf16.xpose.msra.mxu0 0
    %1183 = vmatprep.subr.bf16.mxu0 0
    %1184 = vmatpush1.bf16.xpose.msra.mxu0 0
    %1185 = vmatprep.subr.bf16.mxu0 0
    %1186 = vmatpush1.bf16.xpose.msra.mxu0 0
    %1187 = vmatprep.subr.bf16.mxu0 0
    %1188 = vmatpush1.bf16.xpose.msra.mxu0 0
    %1189 = vmatprep.subr.bf16.mxu0 0
    %1190 = vmatpush1.bf16.xpose.msra.mxu0 0
    %1191 = vmatprep.subr.bf16.mxu0 0
    %1192 = vmatpush1.bf16.xpose.msra.mxu0 0
    %1193 = vmatprep.subr.bf16.mxu0 0
    %1194 = vmatpush1.bf16.xpose.msra.mxu0 0
    %1195 = vmatprep.mubr.bf16.mxu0 0
    %1196 = vmatmul.mubr.bf16.gmra.mrb[0].mxu0 %v1158
    %v1197 = vpop.f32.mrb[0].mxu0
    %v1198 = vadd.f32 0.0, %v1197
    %v1199 = vpop.f32.mrb[0].mxu0
    %v1200 = vpop.f32.mrb[0].mxu0
    %v1201 = vpop.f32.mrb[0].mxu0
    %1202 = vdwg.mxu0
    %v1204 = vsel %vm650, %v534, 0
    %v1207 = vsel %vm650, %v590, 0
    %1209 = vmatprep.subr.bf16.mxu0 0
    %1210 = vmatpush1.bf16.xpose.msra.mxu0 %v1207
    %1211 = vmatprep.subr.bf16.mxu0 0
    %1212 = vmatpush1.bf16.xpose.msra.mxu0 0
    %1213 = vmatprep.subr.bf16.mxu0 0
    %1214 = vmatpush1.bf16.xpose.msra.mxu0 0
    %1215 = vmatprep.subr.bf16.mxu0 0
    %1216 = vmatpush1.bf16.xpose.msra.mxu0 0
    %1217 = vmatprep.subr.bf16.mxu0 0
    %1218 = vmatpush1.bf16.xpose.msra.mxu0 0
    %1219 = vmatprep.subr.bf16.mxu0 0
    %1220 = vmatpush1.bf16.xpose.msra.mxu0 0
    %1221 = vmatprep.subr.bf16.mxu0 0
    %1222 = vmatpush1.bf16.xpose.msra.mxu0 0
    %1223 = vmatprep.subr.bf16.mxu0 0
    %1224 = vmatpush1.bf16.xpose.msra.mxu0 0
    %1225 = vmatprep.subr.bf16.mxu0 0
    %1226 = vmatpush1.bf16.xpose.msra.mxu0 0
    %1227 = vmatprep.subr.bf16.mxu0 0
    %1228 = vmatpush1.bf16.xpose.msra.mxu0 0
    %1229 = vmatprep.subr.bf16.mxu0 0
    %1230 = vmatpush1.bf16.xpose.msra.mxu0 0
    %1231 = vmatprep.subr.bf16.mxu0 0
    %1232 = vmatpush1.bf16.xpose.msra.mxu0 0
    %1233 = vmatprep.subr.bf16.mxu0 0
    %1234 = vmatpush1.bf16.xpose.msra.mxu0 0
    %1235 = vmatprep.subr.bf16.mxu0 0
    %1236 = vmatpush1.bf16.xpose.msra.mxu0 0
    %1237 = vmatprep.subr.bf16.mxu0 0
    %1238 = vmatpush1.bf16.xpose.msra.mxu0 0
    %1239 = vmatprep.subr.bf16.mxu0 0
    %1240 = vmatpush1.bf16.xpose.msra.mxu0 0
    %1241 = vmatprep.mubr.bf16.mxu0 0
    %1242 = vmatmul.mubr.bf16.gmra.mrb[0].mxu0 %v1204
    %v1243 = vpop.f32.mrb[0].mxu0
    %v1244 = vadd.f32 0.0, %v1243
    %v1245 = vpop.f32.mrb[0].mxu0
    %v1246 = vpop.f32.mrb[0].mxu0
    %v1247 = vpop.f32.mrb[0].mxu0
    %1248 = vdwg.mxu0
    %v1250 = vsel %vm650, %v535, 0
    %v1253 = vsel %vm650, %v591, 0
    %1255 = vmatprep.subr.bf16.mxu0 0
    %1256 = vmatpush1.bf16.xpose.msra.mxu0 %v1253
    %1257 = vmatprep.subr.bf16.mxu0 0
    %1258 = vmatpush1.bf16.xpose.msra.mxu0 0
    %1259 = vmatprep.subr.bf16.mxu0 0
    %1260 = vmatpush1.bf16.xpose.msra.mxu0 0
    %1261 = vmatprep.subr.bf16.mxu0 0
    %1262 = vmatpush1.bf16.xpose.msra.mxu0 0
    %1263 = vmatprep.subr.bf16.mxu0 0
    %1264 = vmatpush1.bf16.xpose.msra.mxu0 0
    %1265 = vmatprep.subr.bf16.mxu0 0
    %1266 = vmatpush1.bf16.xpose.msra.mxu0 0
    %1267 = vmatprep.subr.bf16.mxu0 0
    %1268 = vmatpush1.bf16.xpose.msra.mxu0 0
    %1269 = vmatprep.subr.bf16.mxu0 0
    %1270 = vmatpush1.bf16.xpose.msra.mxu0 0
    %1271 = vmatprep.subr.bf16.mxu0 0
    %1272 = vmatpush1.bf16.xpose.msra.mxu0 0
    %1273 = vmatprep.subr.bf16.mxu0 0
    %1274 = vmatpush1.bf16.xpose.msra.mxu0 0
    %1275 = vmatprep.subr.bf16.mxu0 0
    %1276 = vmatpush1.bf16.xpose.msra.mxu0 0
    %1277 = vmatprep.subr.bf16.mxu0 0
    %1278 = vmatpush1.bf16.xpose.msra.mxu0 0
    %1279 = vmatprep.subr.bf16.mxu0 0
    %1280 = vmatpush1.bf16.xpose.msra.mxu0 0
    %1281 = vmatprep.subr.bf16.mxu0 0
    %1282 = vmatpush1.bf16.xpose.msra.mxu0 0
    %1283 = vmatprep.subr.bf16.mxu0 0
    %1284 = vmatpush1.bf16.xpose.msra.mxu0 0
    %1285 = vmatprep.subr.bf16.mxu0 0
    %1286 = vmatpush1.bf16.xpose.msra.mxu0 0
    %1287 = vmatprep.mubr.bf16.mxu0 0
    %1288 = vmatmul.mubr.bf16.gmra.mrb[0].mxu0 %v1250
    %v1289 = vpop.f32.mrb[0].mxu0
    %v1290 = vadd.f32 0.0, %v1289
    %v1291 = vpop.f32.mrb[0].mxu0
    %v1292 = vpop.f32.mrb[0].mxu0
    %v1293 = vpop.f32.mrb[0].mxu0
    %1294 = vdwg.mxu0
    %v1296 = vsel %vm650, %v536, 0
    %v1299 = vsel %vm650, %v592, 0
    %1301 = vmatprep.subr.bf16.mxu0 0
    %1302 = vmatpush1.bf16.xpose.msra.mxu0 %v1299
    %1303 = vmatprep.subr.bf16.mxu0 0
    %1304 = vmatpush1.bf16.xpose.msra.mxu0 0
    %1305 = vmatprep.subr.bf16.mxu0 0
    %1306 = vmatpush1.bf16.xpose.msra.mxu0 0
    %1307 = vmatprep.subr.bf16.mxu0 0
    %1308 = vmatpush1.bf16.xpose.msra.mxu0 0
    %1309 = vmatprep.subr.bf16.mxu0 0
    %1310 = vmatpush1.bf16.xpose.msra.mxu0 0
    %1311 = vmatprep.subr.bf16.mxu0 0
    %1312 = vmatpush1.bf16.xpose.msra.mxu0 0
    %1313 = vmatprep.subr.bf16.mxu0 0
    %1314 = vmatpush1.bf16.xpose.msra.mxu0 0
    %1315 = vmatprep.subr.bf16.mxu0 0
    %1316 = vmatpush1.bf16.xpose.msra.mxu0 0
    %1317 = vmatprep.subr.bf16.mxu0 0
    %1318 = vmatpush1.bf16.xpose.msra.mxu0 0
    %1319 = vmatprep.subr.bf16.mxu0 0
    %1320 = vmatpush1.bf16.xpose.msra.mxu0 0
    %1321 = vmatprep.subr.bf16.mxu0 0
    %1322 = vmatpush1.bf16.xpose.msra.mxu0 0
    %1323 = vmatprep.subr.bf16.mxu0 0
    %1324 = vmatpush1.bf16.xpose.msra.mxu0 0
    %1325 = vmatprep.subr.bf16.mxu0 0
    %1326 = vmatpush1.bf16.xpose.msra.mxu0 0
    %1327 = vmatprep.subr.bf16.mxu0 0
    %1328 = vmatpush1.bf16.xpose.msra.mxu0 0
    %1329 = vmatprep.subr.bf16.mxu0 0
    %1330 = vmatpush1.bf16.xpose.msra.mxu0 0
    %1331 = vmatprep.subr.bf16.mxu0 0
    %1332 = vmatpush1.bf16.xpose.msra.mxu0 0
    %1333 = vmatprep.mubr.bf16.mxu0 0
    %1334 = vmatmul.mubr.bf16.gmra.mrb[0].mxu0 %v1296
    %v1335 = vpop.f32.mrb[0].mxu0
    %v1336 = vadd.f32 0.0, %v1335
    %v1337 = vpop.f32.mrb[0].mxu0
    %v1338 = vpop.f32.mrb[0].mxu0
    %v1339 = vpop.f32.mrb[0].mxu0
    %1340 = vdwg.mxu0
    %v1342 = vsel %vm650, %v537, 0
    %v1345 = vsel %vm650, %v593, 0
    %1347 = vmatprep.subr.bf16.mxu0 0
    %1348 = vmatpush1.bf16.xpose.msra.mxu0 %v1345
    %1349 = vmatprep.subr.bf16.mxu0 0
    %1350 = vmatpush1.bf16.xpose.msra.mxu0 0
    %1351 = vmatprep.subr.bf16.mxu0 0
    %1352 = vmatpush1.bf16.xpose.msra.mxu0 0
    %1353 = vmatprep.subr.bf16.mxu0 0
    %1354 = vmatpush1.bf16.xpose.msra.mxu0 0
    %1355 = vmatprep.subr.bf16.mxu0 0
    %1356 = vmatpush1.bf16.xpose.msra.mxu0 0
    %1357 = vmatprep.subr.bf16.mxu0 0
    %1358 = vmatpush1.bf16.xpose.msra.mxu0 0
    %1359 = vmatprep.subr.bf16.mxu0 0
    %1360 = vmatpush1.bf16.xpose.msra.mxu0 0
    %1361 = vmatprep.subr.bf16.mxu0 0
    %1362 = vmatpush1.bf16.xpose.msra.mxu0 0
    %1363 = vmatprep.subr.bf16.mxu0 0
    %1364 = vmatpush1.bf16.xpose.msra.mxu0 0
    %1365 = vmatprep.subr.bf16.mxu0 0
    %1366 = vmatpush1.bf16.xpose.msra.mxu0 0
    %1367 = vmatprep.subr.bf16.mxu0 0
    %1368 = vmatpush1.bf16.xpose.msra.mxu0 0
    %1369 = vmatprep.subr.bf16.mxu0 0
    %1370 = vmatpush1.bf16.xpose.msra.mxu0 0
    %1371 = vmatprep.subr.bf16.mxu0 0
    %1372 = vmatpush1.bf16.xpose.msra.mxu0 0
    %1373 = vmatprep.subr.bf16.mxu0 0
    %1374 = vmatpush1.bf16.xpose.msra.mxu0 0
    %1375 = vmatprep.subr.bf16.mxu0 0
    %1376 = vmatpush1.bf16.xpose.msra.mxu0 0
    %1377 = vmatprep.subr.bf16.mxu0 0
    %1378 = vmatpush1.bf16.xpose.msra.mxu0 0
    %1379 = vmatprep.mubr.bf16.mxu0 0
    %1380 = vmatmul.mubr.bf16.gmra.mrb[0].mxu0 %v1342
    %v1381 = vpop.f32.mrb[0].mxu0
    %v1382 = vadd.f32 0.0, %v1381
    %v1383 = vpop.f32.mrb[0].mxu0
    %v1384 = vpop.f32.mrb[0].mxu0
    %v1385 = vpop.f32.mrb[0].mxu0
    %1386 = vdwg.mxu0
    %v1387 = vsel %vm650, %v692, -inf
    %1388 = vmax.xlane.f32.xlu0 %v1387
    %v1389 = vpop.xlane.xlu0 %1388
    %v1390 = vsel %vm650, %v738, -inf
    %1391 = vmax.xlane.f32.xlu0 %v1390
    %v1392 = vpop.xlane.xlu0 %1391
    %v1393 = vsel %vm650, %v784, -inf
    %1394 = vmax.xlane.f32.xlu0 %v1393
    %v1395 = vpop.xlane.xlu0 %1394
    %v1396 = vsel %vm650, %v830, -inf
    %1397 = vmax.xlane.f32.xlu0 %v1396
    %v1398 = vpop.xlane.xlu0 %1397
    %v1399 = vsel %vm650, %v876, -inf
    %1400 = vmax.xlane.f32.xlu0 %v1399
    %v1401 = vpop.xlane.xlu0 %1400
    %v1402 = vsel %vm650, %v922, -inf
    %1403 = vmax.xlane.f32.xlu0 %v1402
    %v1404 = vpop.xlane.xlu0 %1403
    %v1405 = vsel %vm650, %v968, -inf
    %1406 = vmax.xlane.f32.xlu0 %v1405
    %v1407 = vpop.xlane.xlu0 %1406
    %v1408 = vsel %vm650, %v1014, -inf
    %1409 = vmax.xlane.f32.xlu0 %v1408
    %v1410 = vpop.xlane.xlu0 %1409
    %v1411 = vsel %vm650, %v1060, -inf
    %1412 = vmax.xlane.f32.xlu0 %v1411
    %v1413 = vpop.xlane.xlu0 %1412
    %v1414 = vsel %vm650, %v1106, -inf
    %1415 = vmax.xlane.f32.xlu0 %v1414
    %v1416 = vpop.xlane.xlu0 %1415
    %v1417 = vsel %vm650, %v1152, -inf
    %1418 = vmax.xlane.f32.xlu0 %v1417
    %v1419 = vpop.xlane.xlu0 %1418
    %v1420 = vsel %vm650, %v1198, -inf
    %1421 = vmax.xlane.f32.xlu0 %v1420
    %v1422 = vpop.xlane.xlu0 %1421
    %v1423 = vsel %vm650, %v1244, -inf
    %1424 = vmax.xlane.f32.xlu0 %v1423
    %v1425 = vpop.xlane.xlu0 %1424
    %v1426 = vsel %vm650, %v1290, -inf
    %1427 = vmax.xlane.f32.xlu0 %v1426
    %v1428 = vpop.xlane.xlu0 %1427
    %v1429 = vsel %vm650, %v1336, -inf
    %1430 = vmax.xlane.f32.xlu0 %v1429
    %v1431 = vpop.xlane.xlu0 %1430
    %v1432 = vsel %vm650, %v1382, -inf
    %1433 = vmax.xlane.f32.xlu0 %v1432
    %v1434 = vpop.xlane.xlu0 %1433
    %v1435 = vsub.f32 %v692, %v1389
    %v1436 = vsub.f32 %v738, %v1392
    %v1437 = vsub.f32 %v784, %v1395
    %v1438 = vsub.f32 %v830, %v1398
    %v1439 = vsub.f32 %v876, %v1401
    %v1440 = vsub.f32 %v922, %v1404
    %v1441 = vsub.f32 %v968, %v1407
    %v1442 = vsub.f32 %v1014, %v1410
    %v1443 = vsub.f32 %v1060, %v1413
    %v1444 = vsub.f32 %v1106, %v1416
    %v1445 = vsub.f32 %v1152, %v1419
    %v1446 = vsub.f32 %v1198, %v1422
    %v1447 = vsub.f32 %v1244, %v1425
    %v1448 = vsub.f32 %v1290, %v1428
    %v1449 = vsub.f32 %v1336, %v1431
    %v1450 = vsub.f32 %v1382, %v1434
    %v1451 = vmul.f32 %v1435, 1.442695
    %v1452 = vpow.pop %v1451
    %v1453 = vmul.f32 %v1436, 1.442695
    %v1454 = vpow.pop %v1453
    %v1455 = vmul.f32 %v1437, 1.442695
    %v1456 = vpow.pop %v1455
    %v1457 = vmul.f32 %v1438, 1.442695
    %v1458 = vpow.pop %v1457
    %v1459 = vmul.f32 %v1439, 1.442695
    %v1460 = vpow.pop %v1459
    %v1461 = vmul.f32 %v1440, 1.442695
    %v1462 = vpow.pop %v1461
    %v1463 = vmul.f32 %v1441, 1.442695
    %v1464 = vpow.pop %v1463
    %v1465 = vmul.f32 %v1442, 1.442695
    %v1466 = vpow.pop %v1465
    %v1467 = vmul.f32 %v1443, 1.442695
    %v1468 = vpow.pop %v1467
    %v1469 = vmul.f32 %v1444, 1.442695
    %v1470 = vpow.pop %v1469
    %v1471 = vmul.f32 %v1445, 1.442695
    %v1472 = vpow.pop %v1471
    %v1473 = vmul.f32 %v1446, 1.442695
    %v1474 = vpow.pop %v1473
    %v1475 = vmul.f32 %v1447, 1.442695
    %v1476 = vpow.pop %v1475
    %v1477 = vmul.f32 %v1448, 1.442695
    %v1478 = vpow.pop %v1477
    %v1479 = vmul.f32 %v1449, 1.442695
    %v1480 = vpow.pop %v1479
    %v1481 = vmul.f32 %v1450, 1.442695
    %v1482 = vpow.pop %v1481
    %v1483 = vsel %vm650, %v1452, 0.0
    %1484 = vadd.xlane.f32.xlu0 %v1483
    %v1485 = vpop.xlane.xlu0 %1484
    %v1486 = vsel %vm650, %v1454, 0.0
    %1487 = vadd.xlane.f32.xlu0 %v1486
    %v1488 = vpop.xlane.xlu0 %1487
    %v1489 = vsel %vm650, %v1456, 0.0
    %1490 = vadd.xlane.f32.xlu0 %v1489
    %v1491 = vpop.xlane.xlu0 %1490
    %v1492 = vsel %vm650, %v1458, 0.0
    %1493 = vadd.xlane.f32.xlu0 %v1492
    %v1494 = vpop.xlane.xlu0 %1493
    %v1495 = vsel %vm650, %v1460, 0.0
    %1496 = vadd.xlane.f32.xlu0 %v1495
    %v1497 = vpop.xlane.xlu0 %1496
    %v1498 = vsel %vm650, %v1462, 0.0
    %1499 = vadd.xlane.f32.xlu0 %v1498
    %v1500 = vpop.xlane.xlu0 %1499
    %v1501 = vsel %vm650, %v1464, 0.0
    %1502 = vadd.xlane.f32.xlu0 %v1501
    %v1503 = vpop.xlane.xlu0 %1502
    %v1504 = vsel %vm650, %v1466, 0.0
    %1505 = vadd.xlane.f32.xlu0 %v1504
    %v1506 = vpop.xlane.xlu0 %1505
    %v1507 = vsel %vm650, %v1468, 0.0
    %1508 = vadd.xlane.f32.xlu0 %v1507
    %v1509 = vpop.xlane.xlu0 %1508
    %v1510 = vsel %vm650, %v1470, 0.0
    %1511 = vadd.xlane.f32.xlu0 %v1510
    %v1512 = vpop.xlane.xlu0 %1511
    %v1513 = vsel %vm650, %v1472, 0.0
    %1514 = vadd.xlane.f32.xlu0 %v1513
    %v1515 = vpop.xlane.xlu0 %1514
    %v1516 = vsel %vm650, %v1474, 0.0
    %1517 = vadd.xlane.f32.xlu0 %v1516
    %v1518 = vpop.xlane.xlu0 %1517
    %v1519 = vsel %vm650, %v1476, 0.0
    %1520 = vadd.xlane.f32.xlu0 %v1519
    %v1521 = vpop.xlane.xlu0 %1520
    %v1522 = vsel %vm650, %v1478, 0.0
    %1523 = vadd.xlane.f32.xlu0 %v1522
    %v1524 = vpop.xlane.xlu0 %1523
    %v1525 = vsel %vm650, %v1480, 0.0
    %1526 = vadd.xlane.f32.xlu0 %v1525
    %v1527 = vpop.xlane.xlu0 %1526
    %v1528 = vsel %vm650, %v1482, 0.0
    %1529 = vadd.xlane.f32.xlu0 %v1528
    %v1530 = vpop.xlane.xlu0 %1529
    %v1531 = vrcp.pop %v1485
    %v1532 = vmul.f32 %v1452, %v1531
    %v1533 = vrcp.pop %v1488
    %v1534 = vmul.f32 %v1454, %v1533
    %v1535 = vrcp.pop %v1491
    %v1536 = vmul.f32 %v1456, %v1535
    %v1537 = vrcp.pop %v1494
    %v1538 = vmul.f32 %v1458, %v1537
    %v1539 = vrcp.pop %v1497
    %v1540 = vmul.f32 %v1460, %v1539
    %v1541 = vrcp.pop %v1500
    %v1542 = vmul.f32 %v1462, %v1541
    %v1543 = vrcp.pop %v1503
    %v1544 = vmul.f32 %v1464, %v1543
    %v1545 = vrcp.pop %v1506
    %v1546 = vmul.f32 %v1466, %v1545
    %v1547 = vrcp.pop %v1509
    %v1548 = vmul.f32 %v1468, %v1547
    %v1549 = vrcp.pop %v1512
    %v1550 = vmul.f32 %v1470, %v1549
    %v1551 = vrcp.pop %v1515
    %v1552 = vmul.f32 %v1472, %v1551
    %v1553 = vrcp.pop %v1518
    %v1554 = vmul.f32 %v1474, %v1553
    %v1555 = vrcp.pop %v1521
    %v1556 = vmul.f32 %v1476, %v1555
    %v1557 = vrcp.pop %v1524
    %v1558 = vmul.f32 %v1478, %v1557
    %v1559 = vrcp.pop %v1527
    %v1560 = vmul.f32 %v1480, %v1559
    %v1561 = vrcp.pop %v1530
    %v1562 = vmul.f32 %v1482, %v1561
    %v1563 = vpack.c.bf16 %v1532, %v1532
    %v1564 = vpack.c.bf16 %v1534, %v1534
    %v1565 = vpack.c.bf16 %v1536, %v1536
    %v1566 = vpack.c.bf16 %v1538, %v1538
    %v1567 = vpack.c.bf16 %v1540, %v1540
    %v1568 = vpack.c.bf16 %v1542, %v1542
    %v1569 = vpack.c.bf16 %v1544, %v1544
    %v1570 = vpack.c.bf16 %v1546, %v1546
    %v1571 = vpack.c.bf16 %v1548, %v1548
    %v1572 = vpack.c.bf16 %v1550, %v1550
    %v1573 = vpack.c.bf16 %v1552, %v1552
    %v1574 = vpack.c.bf16 %v1554, %v1554
    %v1575 = vpack.c.bf16 %v1556, %v1556
    %v1576 = vpack.c.bf16 %v1558, %v1558
    %v1577 = vpack.c.bf16 %v1560, %v1560
    %v1578 = vpack.c.bf16 %v1562, %v1562
    %vm1579 = vcmask 60416
    %1580 = vst.msk [vmem:[#allocation24] sm:$0xf] %vm1579, %v1563
    %1581 = vst.msk [vmem:[#allocation24 + $0x4] sm:$0xf] %vm1579, %v1564
    %1582 = vst.msk [vmem:[#allocation24 + $0x8] sm:$0xf] %vm1579, %v1565
    %1583 = vst.msk [vmem:[#allocation24 + $0xc] sm:$0xf] %vm1579, %v1566
    %1584 = vst.msk [vmem:[#allocation24 + $0x10] sm:$0xf] %vm1579, %v1567
    %1585 = vst.msk [vmem:[#allocation24 + $0x14] sm:$0xf] %vm1579, %v1568
    %1586 = vst.msk [vmem:[#allocation24 + $0x18] sm:$0xf] %vm1579, %v1569
    %1587 = vst.msk [vmem:[#allocation24 + $0x1c] sm:$0xf] %vm1579, %v1570
    %1588 = vst.msk [vmem:[#allocation24 + $0x20] sm:$0xf] %vm1579, %v1571
    %1589 = vst.msk [vmem:[#allocation24 + $0x24] sm:$0xf] %vm1579, %v1572
    %1590 = vst.msk [vmem:[#allocation24 + $0x28] sm:$0xf] %vm1579, %v1573
    %1591 = vst.msk [vmem:[#allocation24 + $0x2c] sm:$0xf] %vm1579, %v1574
    %1592 = vst.msk [vmem:[#allocation24 + $0x30] sm:$0xf] %vm1579, %v1575
    %1593 = vst.msk [vmem:[#allocation24 + $0x34] sm:$0xf] %vm1579, %v1576
    %1594 = vst.msk [vmem:[#allocation24 + $0x38] sm:$0xf] %vm1579, %v1577
    %1595 = vst.msk [vmem:[#allocation24 + $0x3c] sm:$0xf] %vm1579, %v1578
    %v1597 = vsel %vm650, %v1563, 0
    %vm1599 = vcmask 1043456
    %v1601 = vsel %vm1599, %v634, 0
    %1603 = vmatprep.subr.bf16.mxu0 0
    %1604 = vmatpush1.bf16.msra.mxu0 %v1601
    %1605 = vmatprep.subr.bf16.mxu0 0
    %1606 = vmatpush1.bf16.msra.mxu0 0
    %1607 = vmatprep.subr.bf16.mxu0 0
    %1608 = vmatpush1.bf16.msra.mxu0 0
    %1609 = vmatprep.subr.bf16.mxu0 0
    %1610 = vmatpush1.bf16.msra.mxu0 0
    %1611 = vmatprep.subr.bf16.mxu0 0
    %1612 = vmatpush1.bf16.msra.mxu0 0
    %1613 = vmatprep.subr.bf16.mxu0 0
    %1614 = vmatpush1.bf16.msra.mxu0 0
    %1615 = vmatprep.subr.bf16.mxu0 0
    %1616 = vmatpush1.bf16.msra.mxu0 0
    %1617 = vmatprep.subr.bf16.mxu0 0
    %1618 = vmatpush1.bf16.msra.mxu0 0
    %1619 = vmatprep.subr.bf16.mxu0 0
    %1620 = vmatpush1.bf16.msra.mxu0 0
    %1621 = vmatprep.subr.bf16.mxu0 0
    %1622 = vmatpush1.bf16.msra.mxu0 0
    %1623 = vmatprep.subr.bf16.mxu0 0
    %1624 = vmatpush1.bf16.msra.mxu0 0
    %1625 = vmatprep.subr.bf16.mxu0 0
    %1626 = vmatpush1.bf16.msra.mxu0 0
    %1627 = vmatprep.subr.bf16.mxu0 0
    %1628 = vmatpush1.bf16.msra.mxu0 0
    %1629 = vmatprep.subr.bf16.mxu0 0
    %1630 = vmatpush1.bf16.msra.mxu0 0
    %1631 = vmatprep.subr.bf16.mxu0 0
    %1632 = vmatpush1.bf16.msra.mxu0 0
    %1633 = vmatprep.subr.bf16.mxu0 0
    %1634 = vmatpush1.bf16.msra.mxu0 0
    %1635 = vmatprep.mubr.bf16.mxu0 0
    %1636 = vmatmul.mubr.bf16.gmra.mrb[0].mxu0 %v1597
    %v1637 = vpop.f32.mrb[0].mxu0
    %v1638 = vadd.f32 0.0, %v1637
    %v1639 = vpop.f32.mrb[0].mxu0
    %v1640 = vpop.f32.mrb[0].mxu0
    %v1641 = vpop.f32.mrb[0].mxu0
    %1642 = vdwg.mxu0
    %v1644 = vsel %vm650, %v1564, 0
    %v1647 = vsel %vm1599, %v635, 0
    %1649 = vmatprep.subr.bf16.mxu0 0
    %1650 = vmatpush1.bf16.msra.mxu0 %v1647
    %1651 = vmatprep.subr.bf16.mxu0 0
    %1652 = vmatpush1.bf16.msra.mxu0 0
    %1653 = vmatprep.subr.bf16.mxu0 0
    %1654 = vmatpush1.bf16.msra.mxu0 0
    %1655 = vmatprep.subr.bf16.mxu0 0
    %1656 = vmatpush1.bf16.msra.mxu0 0
    %1657 = vmatprep.subr.bf16.mxu0 0
    %1658 = vmatpush1.bf16.msra.mxu0 0
    %1659 = vmatprep.subr.bf16.mxu0 0
    %1660 = vmatpush1.bf16.msra.mxu0 0
    %1661 = vmatprep.subr.bf16.mxu0 0
    %1662 = vmatpush1.bf16.msra.mxu0 0
    %1663 = vmatprep.subr.bf16.mxu0 0
    %1664 = vmatpush1.bf16.msra.mxu0 0
    %1665 = vmatprep.subr.bf16.mxu0 0
    %1666 = vmatpush1.bf16.msra.mxu0 0
    %1667 = vmatprep.subr.bf16.mxu0 0
    %1668 = vmatpush1.bf16.msra.mxu0 0
    %1669 = vmatprep.subr.bf16.mxu0 0
    %1670 = vmatpush1.bf16.msra.mxu0 0
    %1671 = vmatprep.subr.bf16.mxu0 0
    %1672 = vmatpush1.bf16.msra.mxu0 0
    %1673 = vmatprep.subr.bf16.mxu0 0
    %1674 = vmatpush1.bf16.msra.mxu0 0
    %1675 = vmatprep.subr.bf16.mxu0 0
    %1676 = vmatpush1.bf16.msra.mxu0 0
    %1677 = vmatprep.subr.bf16.mxu0 0
    %1678 = vmatpush1.bf16.msra.mxu0 0
    %1679 = vmatprep.subr.bf16.mxu0 0
    %1680 = vmatpush1.bf16.msra.mxu0 0
    %1681 = vmatprep.mubr.bf16.mxu0 0
    %1682 = vmatmul.mubr.bf16.gmra.mrb[0].mxu0 %v1644
    %v1683 = vpop.f32.mrb[0].mxu0
    %v1684 = vadd.f32 0.0, %v1683
    %v1685 = vpop.f32.mrb[0].mxu0
    %v1686 = vpop.f32.mrb[0].mxu0
    %v1687 = vpop.f32.mrb[0].mxu0
    %1688 = vdwg.mxu0
    %v1690 = vsel %vm650, %v1565, 0
    %v1693 = vsel %vm1599, %v636, 0
    %1695 = vmatprep.subr.bf16.mxu0 0
    %1696 = vmatpush1.bf16.msra.mxu0 %v1693
    %1697 = vmatprep.subr.bf16.mxu0 0
    %1698 = vmatpush1.bf16.msra.mxu0 0
    %1699 = vmatprep.subr.bf16.mxu0 0
    %1700 = vmatpush1.bf16.msra.mxu0 0
    %1701 = vmatprep.subr.bf16.mxu0 0
    %1702 = vmatpush1.bf16.msra.mxu0 0
    %1703 = vmatprep.subr.bf16.mxu0 0
    %1704 = vmatpush1.bf16.msra.mxu0 0
    %1705 = vmatprep.subr.bf16.mxu0 0
    %1706 = vmatpush1.bf16.msra.mxu0 0
    %1707 = vmatprep.subr.bf16.mxu0 0
    %1708 = vmatpush1.bf16.msra.mxu0 0
    %1709 = vmatprep.subr.bf16.mxu0 0
    %1710 = vmatpush1.bf16.msra.mxu0 0
    %1711 = vmatprep.subr.bf16.mxu0 0
    %1712 = vmatpush1.bf16.msra.mxu0 0
    %1713 = vmatprep.subr.bf16.mxu0 0
    %1714 = vmatpush1.bf16.msra.mxu0 0
    %1715 = vmatprep.subr.bf16.mxu0 0
    %1716 = vmatpush1.bf16.msra.mxu0 0
    %1717 = vmatprep.subr.bf16.mxu0 0
    %1718 = vmatpush1.bf16.msra.mxu0 0
    %1719 = vmatprep.subr.bf16.mxu0 0
    %1720 = vmatpush1.bf16.msra.mxu0 0
    %1721 = vmatprep.subr.bf16.mxu0 0
    %1722 = vmatpush1.bf16.msra.mxu0 0
    %1723 = vmatprep.subr.bf16.mxu0 0
    %1724 = vmatpush1.bf16.msra.mxu0 0
    %1725 = vmatprep.subr.bf16.mxu0 0
    %1726 = vmatpush1.bf16.msra.mxu0 0
    %1727 = vmatprep.mubr.bf16.mxu0 0
    %1728 = vmatmul.mubr.bf16.gmra.mrb[0].mxu0 %v1690
    %v1729 = vpop.f32.mrb[0].mxu0
    %v1730 = vadd.f32 0.0, %v1729
    %v1731 = vpop.f32.mrb[0].mxu0
    %v1732 = vpop.f32.mrb[0].mxu0
    %v1733 = vpop.f32.mrb[0].mxu0
    %1734 = vdwg.mxu0
    %v1736 = vsel %vm650, %v1566, 0
    %v1739 = vsel %vm1599, %v637, 0
    %1741 = vmatprep.subr.bf16.mxu0 0
    %1742 = vmatpush1.bf16.msra.mxu0 %v1739
    %1743 = vmatprep.subr.bf16.mxu0 0
    %1744 = vmatpush1.bf16.msra.mxu0 0
    %1745 = vmatprep.subr.bf16.mxu0 0
    %1746 = vmatpush1.bf16.msra.mxu0 0
    %1747 = vmatprep.subr.bf16.mxu0 0
    %1748 = vmatpush1.bf16.msra.mxu0 0
    %1749 = vmatprep.subr.bf16.mxu0 0
    %1750 = vmatpush1.bf16.msra.mxu0 0
    %1751 = vmatprep.subr.bf16.mxu0 0
    %1752 = vmatpush1.bf16.msra.mxu0 0
    %1753 = vmatprep.subr.bf16.mxu0 0
    %1754 = vmatpush1.bf16.msra.mxu0 0
    %1755 = vmatprep.subr.bf16.mxu0 0
    %1756 = vmatpush1.bf16.msra.mxu0 0
    %1757 = vmatprep.subr.bf16.mxu0 0
    %1758 = vmatpush1.bf16.msra.mxu0 0
    %1759 = vmatprep.subr.bf16.mxu0 0
    %1760 = vmatpush1.bf16.msra.mxu0 0
    %1761 = vmatprep.subr.bf16.mxu0 0
    %1762 = vmatpush1.bf16.msra.mxu0 0
    %1763 = vmatprep.subr.bf16.mxu0 0
    %1764 = vmatpush1.bf16.msra.mxu0 0
    %1765 = vmatprep.subr.bf16.mxu0 0
    %1766 = vmatpush1.bf16.msra.mxu0 0
    %1767 = vmatprep.subr.bf16.mxu0 0
    %1768 = vmatpush1.bf16.msra.mxu0 0
    %1769 = vmatprep.subr.bf16.mxu0 0
    %1770 = vmatpush1.bf16.msra.mxu0 0
    %1771 = vmatprep.subr.bf16.mxu0 0
    %1772 = vmatpush1.bf16.msra.mxu0 0
    %1773 = vmatprep.mubr.bf16.mxu0 0
    %1774 = vmatmul.mubr.bf16.gmra.mrb[0].mxu0 %v1736
    %v1775 = vpop.f32.mrb[0].mxu0
    %v1776 = vadd.f32 0.0, %v1775
    %v1777 = vpop.f32.mrb[0].mxu0
    %v1778 = vpop.f32.mrb[0].mxu0
    %v1779 = vpop.f32.mrb[0].mxu0
    %1780 = vdwg.mxu0
    %v1782 = vsel %vm650, %v1567, 0
    %v1785 = vsel %vm1599, %v638, 0
    %1787 = vmatprep.subr.bf16.mxu0 0
    %1788 = vmatpush1.bf16.msra.mxu0 %v1785
    %1789 = vmatprep.subr.bf16.mxu0 0
    %1790 = vmatpush1.bf16.msra.mxu0 0
    %1791 = vmatprep.subr.bf16.mxu0 0
    %1792 = vmatpush1.bf16.msra.mxu0 0
    %1793 = vmatprep.subr.bf16.mxu0 0
    %1794 = vmatpush1.bf16.msra.mxu0 0
    %1795 = vmatprep.subr.bf16.mxu0 0
    %1796 = vmatpush1.bf16.msra.mxu0 0
    %1797 = vmatprep.subr.bf16.mxu0 0
    %1798 = vmatpush1.bf16.msra.mxu0 0
    %1799 = vmatprep.subr.bf16.mxu0 0
    %1800 = vmatpush1.bf16.msra.mxu0 0
    %1801 = vmatprep.subr.bf16.mxu0 0
    %1802 = vmatpush1.bf16.msra.mxu0 0
    %1803 = vmatprep.subr.bf16.mxu0 0
    %1804 = vmatpush1.bf16.msra.mxu0 0
    %1805 = vmatprep.subr.bf16.mxu0 0
    %1806 = vmatpush1.bf16.msra.mxu0 0
    %1807 = vmatprep.subr.bf16.mxu0 0
    %1808 = vmatpush1.bf16.msra.mxu0 0
    %1809 = vmatprep.subr.bf16.mxu0 0
    %1810 = vmatpush1.bf16.msra.mxu0 0
    %1811 = vmatprep.subr.bf16.mxu0 0
    %1812 = vmatpush1.bf16.msra.mxu0 0
    %1813 = vmatprep.subr.bf16.mxu0 0
    %1814 = vmatpush1.bf16.msra.mxu0 0
    %1815 = vmatprep.subr.bf16.mxu0 0
    %1816 = vmatpush1.bf16.msra.mxu0 0
    %1817 = vmatprep.subr.bf16.mxu0 0
    %1818 = vmatpush1.bf16.msra.mxu0 0
    %1819 = vmatprep.mubr.bf16.mxu0 0
    %1820 = vmatmul.mubr.bf16.gmra.mrb[0].mxu0 %v1782
    %v1821 = vpop.f32.mrb[0].mxu0
    %v1822 = vadd.f32 0.0, %v1821
    %v1823 = vpop.f32.mrb[0].mxu0
    %v1824 = vpop.f32.mrb[0].mxu0
    %v1825 = vpop.f32.mrb[0].mxu0
    %1826 = vdwg.mxu0
    %v1828 = vsel %vm650, %v1568, 0
    %v1831 = vsel %vm1599, %v639, 0
    %1833 = vmatprep.subr.bf16.mxu0 0
    %1834 = vmatpush1.bf16.msra.mxu0 %v1831
    %1835 = vmatprep.subr.bf16.mxu0 0
    %1836 = vmatpush1.bf16.msra.mxu0 0
    %1837 = vmatprep.subr.bf16.mxu0 0
    %1838 = vmatpush1.bf16.msra.mxu0 0
    %1839 = vmatprep.subr.bf16.mxu0 0
    %1840 = vmatpush1.bf16.msra.mxu0 0
    %1841 = vmatprep.subr.bf16.mxu0 0
    %1842 = vmatpush1.bf16.msra.mxu0 0
    %1843 = vmatprep.subr.bf16.mxu0 0
    %1844 = vmatpush1.bf16.msra.mxu0 0
    %1845 = vmatprep.subr.bf16.mxu0 0
    %1846 = vmatpush1.bf16.msra.mxu0 0
    %1847 = vmatprep.subr.bf16.mxu0 0
    %1848 = vmatpush1.bf16.msra.mxu0 0
    %1849 = vmatprep.subr.bf16.mxu0 0
    %1850 = vmatpush1.bf16.msra.mxu0 0
    %1851 = vmatprep.subr.bf16.mxu0 0
    %1852 = vmatpush1.bf16.msra.mxu0 0
    %1853 = vmatprep.subr.bf16.mxu0 0
    %1854 = vmatpush1.bf16.msra.mxu0 0
    %1855 = vmatprep.subr.bf16.mxu0 0
    %1856 = vmatpush1.bf16.msra.mxu0 0
    %1857 = vmatprep.subr.bf16.mxu0 0
    %1858 = vmatpush1.bf16.msra.mxu0 0
    %1859 = vmatprep.subr.bf16.mxu0 0
    %1860 = vmatpush1.bf16.msra.mxu0 0
    %1861 = vmatprep.subr.bf16.mxu0 0
    %1862 = vmatpush1.bf16.msra.mxu0 0
    %1863 = vmatprep.subr.bf16.mxu0 0
    %1864 = vmatpush1.bf16.msra.mxu0 0
    %1865 = vmatprep.mubr.bf16.mxu0 0
    %1866 = vmatmul.mubr.bf16.gmra.mrb[0].mxu0 %v1828
    %v1867 = vpop.f32.mrb[0].mxu0
    %v1868 = vadd.f32 0.0, %v1867
    %v1869 = vpop.f32.mrb[0].mxu0
    %v1870 = vpop.f32.mrb[0].mxu0
    %v1871 = vpop.f32.mrb[0].mxu0
    %1872 = vdwg.mxu0
    %v1874 = vsel %vm650, %v1569, 0
    %v1877 = vsel %vm1599, %v640, 0
    %1879 = vmatprep.subr.bf16.mxu0 0
    %1880 = vmatpush1.bf16.msra.mxu0 %v1877
    %1881 = vmatprep.subr.bf16.mxu0 0
    %1882 = vmatpush1.bf16.msra.mxu0 0
    %1883 = vmatprep.subr.bf16.mxu0 0
    %1884 = vmatpush1.bf16.msra.mxu0 0
    %1885 = vmatprep.subr.bf16.mxu0 0
    %1886 = vmatpush1.bf16.msra.mxu0 0
    %1887 = vmatprep.subr.bf16.mxu0 0
    %1888 = vmatpush1.bf16.msra.mxu0 0
    %1889 = vmatprep.subr.bf16.mxu0 0
    %1890 = vmatpush1.bf16.msra.mxu0 0
    %1891 = vmatprep.subr.bf16.mxu0 0
    %1892 = vmatpush1.bf16.msra.mxu0 0
    %1893 = vmatprep.subr.bf16.mxu0 0
    %1894 = vmatpush1.bf16.msra.mxu0 0
    %1895 = vmatprep.subr.bf16.mxu0 0
    %1896 = vmatpush1.bf16.msra.mxu0 0
    %1897 = vmatprep.subr.bf16.mxu0 0
    %1898 = vmatpush1.bf16.msra.mxu0 0
    %1899 = vmatprep.subr.bf16.mxu0 0
    %1900 = vmatpush1.bf16.msra.mxu0 0
    %1901 = vmatprep.subr.bf16.mxu0 0
    %1902 = vmatpush1.bf16.msra.mxu0 0
    %1903 = vmatprep.subr.bf16.mxu0 0
    %1904 = vmatpush1.bf16.msra.mxu0 0
    %1905 = vmatprep.subr.bf16.mxu0 0
    %1906 = vmatpush1.bf16.msra.mxu0 0
    %1907 = vmatprep.subr.bf16.mxu0 0
    %1908 = vmatpush1.bf16.msra.mxu0 0
    %1909 = vmatprep.subr.bf16.mxu0 0
    %1910 = vmatpush1.bf16.msra.mxu0 0
    %1911 = vmatprep.mubr.bf16.mxu0 0
    %1912 = vmatmul.mubr.bf16.gmra.mrb[0].mxu0 %v1874
    %v1913 = vpop.f32.mrb[0].mxu0
    %v1914 = vadd.f32 0.0, %v1913
    %v1915 = vpop.f32.mrb[0].mxu0
    %v1916 = vpop.f32.mrb[0].mxu0
    %v1917 = vpop.f32.mrb[0].mxu0
    %1918 = vdwg.mxu0
    %v1920 = vsel %vm650, %v1570, 0
    %v1923 = vsel %vm1599, %v641, 0
    %1925 = vmatprep.subr.bf16.mxu0 0
    %1926 = vmatpush1.bf16.msra.mxu0 %v1923
    %1927 = vmatprep.subr.bf16.mxu0 0
    %1928 = vmatpush1.bf16.msra.mxu0 0
    %1929 = vmatprep.subr.bf16.mxu0 0
    %1930 = vmatpush1.bf16.msra.mxu0 0
    %1931 = vmatprep.subr.bf16.mxu0 0
    %1932 = vmatpush1.bf16.msra.mxu0 0
    %1933 = vmatprep.subr.bf16.mxu0 0
    %1934 = vmatpush1.bf16.msra.mxu0 0
    %1935 = vmatprep.subr.bf16.mxu0 0
    %1936 = vmatpush1.bf16.msra.mxu0 0
    %1937 = vmatprep.subr.bf16.mxu0 0
    %1938 = vmatpush1.bf16.msra.mxu0 0
    %1939 = vmatprep.subr.bf16.mxu0 0
    %1940 = vmatpush1.bf16.msra.mxu0 0
    %1941 = vmatprep.subr.bf16.mxu0 0
    %1942 = vmatpush1.bf16.msra.mxu0 0
    %1943 = vmatprep.subr.bf16.mxu0 0
    %1944 = vmatpush1.bf16.msra.mxu0 0
    %1945 = vmatprep.subr.bf16.mxu0 0
    %1946 = vmatpush1.bf16.msra.mxu0 0
    %1947 = vmatprep.subr.bf16.mxu0 0
    %1948 = vmatpush1.bf16.msra.mxu0 0
    %1949 = vmatprep.subr.bf16.mxu0 0
    %1950 = vmatpush1.bf16.msra.mxu0 0
    %1951 = vmatprep.subr.bf16.mxu0 0
    %1952 = vmatpush1.bf16.msra.mxu0 0
    %1953 = vmatprep.subr.bf16.mxu0 0
    %1954 = vmatpush1.bf16.msra.mxu0 0
    %1955 = vmatprep.subr.bf16.mxu0 0
    %1956 = vmatpush1.bf16.msra.mxu0 0
    %1957 = vmatprep.mubr.bf16.mxu0 0
    %1958 = vmatmul.mubr.bf16.gmra.mrb[0].mxu0 %v1920
    %v1959 = vpop.f32.mrb[0].mxu0
    %v1960 = vadd.f32 0.0, %v1959
    %v1961 = vpop.f32.mrb[0].mxu0
    %v1962 = vpop.f32.mrb[0].mxu0
    %v1963 = vpop.f32.mrb[0].mxu0
    %1964 = vdwg.mxu0
    %v1966 = vsel %vm650, %v1571, 0
    %v1969 = vsel %vm1599, %v642, 0
    %1971 = vmatprep.subr.bf16.mxu0 0
    %1972 = vmatpush1.bf16.msra.mxu0 %v1969
    %1973 = vmatprep.subr.bf16.mxu0 0
    %1974 = vmatpush1.bf16.msra.mxu0 0
    %1975 = vmatprep.subr.bf16.mxu0 0
    %1976 = vmatpush1.bf16.msra.mxu0 0
    %1977 = vmatprep.subr.bf16.mxu0 0
    %1978 = vmatpush1.bf16.msra.mxu0 0
    %1979 = vmatprep.subr.bf16.mxu0 0
    %1980 = vmatpush1.bf16.msra.mxu0 0
    %1981 = vmatprep.subr.bf16.mxu0 0
    %1982 = vmatpush1.bf16.msra.mxu0 0
    %1983 = vmatprep.subr.bf16.mxu0 0
    %1984 = vmatpush1.bf16.msra.mxu0 0
    %1985 = vmatprep.subr.bf16.mxu0 0
    %1986 = vmatpush1.bf16.msra.mxu0 0
    %1987 = vmatprep.subr.bf16.mxu0 0
    %1988 = vmatpush1.bf16.msra.mxu0 0
    %1989 = vmatprep.subr.bf16.mxu0 0
    %1990 = vmatpush1.bf16.msra.mxu0 0
    %1991 = vmatprep.subr.bf16.mxu0 0
    %1992 = vmatpush1.bf16.msra.mxu0 0
    %1993 = vmatprep.subr.bf16.mxu0 0
    %1994 = vmatpush1.bf16.msra.mxu0 0
    %1995 = vmatprep.subr.bf16.mxu0 0
    %1996 = vmatpush1.bf16.msra.mxu0 0
    %1997 = vmatprep.subr.bf16.mxu0 0
    %1998 = vmatpush1.bf16.msra.mxu0 0
    %1999 = vmatprep.subr.bf16.mxu0 0
    %2000 = vmatpush1.bf16.msra.mxu0 0
    %2001 = vmatprep.subr.bf16.mxu0 0
    %2002 = vmatpush1.bf16.msra.mxu0 0
    %2003 = vmatprep.mubr.bf16.mxu0 0
    %2004 = vmatmul.mubr.bf16.gmra.mrb[0].mxu0 %v1966
    %v2005 = vpop.f32.mrb[0].mxu0
    %v2006 = vadd.f32 0.0, %v2005
    %v2007 = vpop.f32.mrb[0].mxu0
    %v2008 = vpop.f32.mrb[0].mxu0
    %v2009 = vpop.f32.mrb[0].mxu0
    %2010 = vdwg.mxu0
    %v2012 = vsel %vm650, %v1572, 0
    %v2015 = vsel %vm1599, %v643, 0
    %2017 = vmatprep.subr.bf16.mxu0 0
    %2018 = vmatpush1.bf16.msra.mxu0 %v2015
    %2019 = vmatprep.subr.bf16.mxu0 0
    %2020 = vmatpush1.bf16.msra.mxu0 0
    %2021 = vmatprep.subr.bf16.mxu0 0
    %2022 = vmatpush1.bf16.msra.mxu0 0
    %2023 = vmatprep.subr.bf16.mxu0 0
    %2024 = vmatpush1.bf16.msra.mxu0 0
    %2025 = vmatprep.subr.bf16.mxu0 0
    %2026 = vmatpush1.bf16.msra.mxu0 0
    %2027 = vmatprep.subr.bf16.mxu0 0
    %2028 = vmatpush1.bf16.msra.mxu0 0
    %2029 = vmatprep.subr.bf16.mxu0 0
    %2030 = vmatpush1.bf16.msra.mxu0 0
    %2031 = vmatprep.subr.bf16.mxu0 0
    %2032 = vmatpush1.bf16.msra.mxu0 0
    %2033 = vmatprep.subr.bf16.mxu0 0
    %2034 = vmatpush1.bf16.msra.mxu0 0
    %2035 = vmatprep.subr.bf16.mxu0 0
    %2036 = vmatpush1.bf16.msra.mxu0 0
    %2037 = vmatprep.subr.bf16.mxu0 0
    %2038 = vmatpush1.bf16.msra.mxu0 0
    %2039 = vmatprep.subr.bf16.mxu0 0
    %2040 = vmatpush1.bf16.msra.mxu0 0
    %2041 = vmatprep.subr.bf16.mxu0 0
    %2042 = vmatpush1.bf16.msra.mxu0 0
    %2043 = vmatprep.subr.bf16.mxu0 0
    %2044 = vmatpush1.bf16.msra.mxu0 0
    %2045 = vmatprep.subr.bf16.mxu0 0
    %2046 = vmatpush1.bf16.msra.mxu0 0
    %2047 = vmatprep.subr.bf16.mxu0 0
    %2048 = vmatpush1.bf16.msra.mxu0 0
    %2049 = vmatprep.mubr.bf16.mxu0 0
    %2050 = vmatmul.mubr.bf16.gmra.mrb[0].mxu0 %v2012
    %v2051 = vpop.f32.mrb[0].mxu0
    %v2052 = vadd.f32 0.0, %v2051
    %v2053 = vpop.f32.mrb[0].mxu0
    %v2054 = vpop.f32.mrb[0].mxu0
    %v2055 = vpop.f32.mrb[0].mxu0
    %2056 = vdwg.mxu0
    %v2058 = vsel %vm650, %v1573, 0
    %v2061 = vsel %vm1599, %v644, 0
    %2063 = vmatprep.subr.bf16.mxu0 0
    %2064 = vmatpush1.bf16.msra.mxu0 %v2061
    %2065 = vmatprep.subr.bf16.mxu0 0
    %2066 = vmatpush1.bf16.msra.mxu0 0
    %2067 = vmatprep.subr.bf16.mxu0 0
    %2068 = vmatpush1.bf16.msra.mxu0 0
    %2069 = vmatprep.subr.bf16.mxu0 0
    %2070 = vmatpush1.bf16.msra.mxu0 0
    %2071 = vmatprep.subr.bf16.mxu0 0
    %2072 = vmatpush1.bf16.msra.mxu0 0
    %2073 = vmatprep.subr.bf16.mxu0 0
    %2074 = vmatpush1.bf16.msra.mxu0 0
    %2075 = vmatprep.subr.bf16.mxu0 0
    %2076 = vmatpush1.bf16.msra.mxu0 0
    %2077 = vmatprep.subr.bf16.mxu0 0
    %2078 = vmatpush1.bf16.msra.mxu0 0
    %2079 = vmatprep.subr.bf16.mxu0 0
    %2080 = vmatpush1.bf16.msra.mxu0 0
    %2081 = vmatprep.subr.bf16.mxu0 0
    %2082 = vmatpush1.bf16.msra.mxu0 0
    %2083 = vmatprep.subr.bf16.mxu0 0
    %2084 = vmatpush1.bf16.msra.mxu0 0
    %2085 = vmatprep.subr.bf16.mxu0 0
    %2086 = vmatpush1.bf16.msra.mxu0 0
    %2087 = vmatprep.subr.bf16.mxu0 0
    %2088 = vmatpush1.bf16.msra.mxu0 0
    %2089 = vmatprep.subr.bf16.mxu0 0
    %2090 = vmatpush1.bf16.msra.mxu0 0
    %2091 = vmatprep.subr.bf16.mxu0 0
    %2092 = vmatpush1.bf16.msra.mxu0 0
    %2093 = vmatprep.subr.bf16.mxu0 0
    %2094 = vmatpush1.bf16.msra.mxu0 0
    %2095 = vmatprep.mubr.bf16.mxu0 0
    %2096 = vmatmul.mubr.bf16.gmra.mrb[0].mxu0 %v2058
    %v2097 = vpop.f32.mrb[0].mxu0
    %v2098 = vadd.f32 0.0, %v2097
    %v2099 = vpop.f32.mrb[0].mxu0
    %v2100 = vpop.f32.mrb[0].mxu0
    %v2101 = vpop.f32.mrb[0].mxu0
    %2102 = vdwg.mxu0
    %v2104 = vsel %vm650, %v1574, 0
    %v2107 = vsel %vm1599, %v645, 0
    %2109 = vmatprep.subr.bf16.mxu0 0
    %2110 = vmatpush1.bf16.msra.mxu0 %v2107
    %2111 = vmatprep.subr.bf16.mxu0 0
    %2112 = vmatpush1.bf16.msra.mxu0 0
    %2113 = vmatprep.subr.bf16.mxu0 0
    %2114 = vmatpush1.bf16.msra.mxu0 0
    %2115 = vmatprep.subr.bf16.mxu0 0
    %2116 = vmatpush1.bf16.msra.mxu0 0
    %2117 = vmatprep.subr.bf16.mxu0 0
    %2118 = vmatpush1.bf16.msra.mxu0 0
    %2119 = vmatprep.subr.bf16.mxu0 0
    %2120 = vmatpush1.bf16.msra.mxu0 0
    %2121 = vmatprep.subr.bf16.mxu0 0
    %2122 = vmatpush1.bf16.msra.mxu0 0
    %2123 = vmatprep.subr.bf16.mxu0 0
    %2124 = vmatpush1.bf16.msra.mxu0 0
    %2125 = vmatprep.subr.bf16.mxu0 0
    %2126 = vmatpush1.bf16.msra.mxu0 0
    %2127 = vmatprep.subr.bf16.mxu0 0
    %2128 = vmatpush1.bf16.msra.mxu0 0
    %2129 = vmatprep.subr.bf16.mxu0 0
    %2130 = vmatpush1.bf16.msra.mxu0 0
    %2131 = vmatprep.subr.bf16.mxu0 0
    %2132 = vmatpush1.bf16.msra.mxu0 0
    %2133 = vmatprep.subr.bf16.mxu0 0
    %2134 = vmatpush1.bf16.msra.mxu0 0
    %2135 = vmatprep.subr.bf16.mxu0 0
    %2136 = vmatpush1.bf16.msra.mxu0 0
    %2137 = vmatprep.subr.bf16.mxu0 0
    %2138 = vmatpush1.bf16.msra.mxu0 0
    %2139 = vmatprep.subr.bf16.mxu0 0
    %2140 = vmatpush1.bf16.msra.mxu0 0
    %2141 = vmatprep.mubr.bf16.mxu0 0
    %2142 = vmatmul.mubr.bf16.gmra.mrb[0].mxu0 %v2104
    %v2143 = vpop.f32.mrb[0].mxu0
    %v2144 = vadd.f32 0.0, %v2143
    %v2145 = vpop.f32.mrb[0].mxu0
    %v2146 = vpop.f32.mrb[0].mxu0
    %v2147 = vpop.f32.mrb[0].mxu0
    %2148 = vdwg.mxu0
    %v2150 = vsel %vm650, %v1575, 0
    %v2153 = vsel %vm1599, %v646, 0
    %2155 = vmatprep.subr.bf16.mxu0 0
    %2156 = vmatpush1.bf16.msra.mxu0 %v2153
    %2157 = vmatprep.subr.bf16.mxu0 0
    %2158 = vmatpush1.bf16.msra.mxu0 0
    %2159 = vmatprep.subr.bf16.mxu0 0
    %2160 = vmatpush1.bf16.msra.mxu0 0
    %2161 = vmatprep.subr.bf16.mxu0 0
    %2162 = vmatpush1.bf16.msra.mxu0 0
    %2163 = vmatprep.subr.bf16.mxu0 0
    %2164 = vmatpush1.bf16.msra.mxu0 0
    %2165 = vmatprep.subr.bf16.mxu0 0
    %2166 = vmatpush1.bf16.msra.mxu0 0
    %2167 = vmatprep.subr.bf16.mxu0 0
    %2168 = vmatpush1.bf16.msra.mxu0 0
    %2169 = vmatprep.subr.bf16.mxu0 0
    %2170 = vmatpush1.bf16.msra.mxu0 0
    %2171 = vmatprep.subr.bf16.mxu0 0
    %2172 = vmatpush1.bf16.msra.mxu0 0
    %2173 = vmatprep.subr.bf16.mxu0 0
    %2174 = vmatpush1.bf16.msra.mxu0 0
    %2175 = vmatprep.subr.bf16.mxu0 0
    %2176 = vmatpush1.bf16.msra.mxu0 0
    %2177 = vmatprep.subr.bf16.mxu0 0
    %2178 = vmatpush1.bf16.msra.mxu0 0
    %2179 = vmatprep.subr.bf16.mxu0 0
    %2180 = vmatpush1.bf16.msra.mxu0 0
    %2181 = vmatprep.subr.bf16.mxu0 0
    %2182 = vmatpush1.bf16.msra.mxu0 0
    %2183 = vmatprep.subr.bf16.mxu0 0
    %2184 = vmatpush1.bf16.msra.mxu0 0
    %2185 = vmatprep.subr.bf16.mxu0 0
    %2186 = vmatpush1.bf16.msra.mxu0 0
    %2187 = vmatprep.mubr.bf16.mxu0 0
    %2188 = vmatmul.mubr.bf16.gmra.mrb[0].mxu0 %v2150
    %v2189 = vpop.f32.mrb[0].mxu0
    %v2190 = vadd.f32 0.0, %v2189
    %v2191 = vpop.f32.mrb[0].mxu0
    %v2192 = vpop.f32.mrb[0].mxu0
    %v2193 = vpop.f32.mrb[0].mxu0
    %2194 = vdwg.mxu0
    %v2196 = vsel %vm650, %v1576, 0
    %v2199 = vsel %vm1599, %v647, 0
    %2201 = vmatprep.subr.bf16.mxu0 0
    %2202 = vmatpush1.bf16.msra.mxu0 %v2199
    %2203 = vmatprep.subr.bf16.mxu0 0
    %2204 = vmatpush1.bf16.msra.mxu0 0
    %2205 = vmatprep.subr.bf16.mxu0 0
    %2206 = vmatpush1.bf16.msra.mxu0 0
    %2207 = vmatprep.subr.bf16.mxu0 0
    %2208 = vmatpush1.bf16.msra.mxu0 0
    %2209 = vmatprep.subr.bf16.mxu0 0
    %2210 = vmatpush1.bf16.msra.mxu0 0
    %2211 = vmatprep.subr.bf16.mxu0 0
    %2212 = vmatpush1.bf16.msra.mxu0 0
    %2213 = vmatprep.subr.bf16.mxu0 0
    %2214 = vmatpush1.bf16.msra.mxu0 0
    %2215 = vmatprep.subr.bf16.mxu0 0
    %2216 = vmatpush1.bf16.msra.mxu0 0
    %2217 = vmatprep.subr.bf16.mxu0 0
    %2218 = vmatpush1.bf16.msra.mxu0 0
    %2219 = vmatprep.subr.bf16.mxu0 0
    %2220 = vmatpush1.bf16.msra.mxu0 0
    %2221 = vmatprep.subr.bf16.mxu0 0
    %2222 = vmatpush1.bf16.msra.mxu0 0
    %2223 = vmatprep.subr.bf16.mxu0 0
    %2224 = vmatpush1.bf16.msra.mxu0 0
    %2225 = vmatprep.subr.bf16.mxu0 0
    %2226 = vmatpush1.bf16.msra.mxu0 0
    %2227 = vmatprep.subr.bf16.mxu0 0
    %2228 = vmatpush1.bf16.msra.mxu0 0
    %2229 = vmatprep.subr.bf16.mxu0 0
    %2230 = vmatpush1.bf16.msra.mxu0 0
    %2231 = vmatprep.subr.bf16.mxu0 0
    %2232 = vmatpush1.bf16.msra.mxu0 0
    %2233 = vmatprep.mubr.bf16.mxu0 0
    %2234 = vmatmul.mubr.bf16.gmra.mrb[0].mxu0 %v2196
    %v2235 = vpop.f32.mrb[0].mxu0
    %v2236 = vadd.f32 0.0, %v2235
    %v2237 = vpop.f32.mrb[0].mxu0
    %v2238 = vpop.f32.mrb[0].mxu0
    %v2239 = vpop.f32.mrb[0].mxu0
    %2240 = vdwg.mxu0
    %v2242 = vsel %vm650, %v1577, 0
    %v2245 = vsel %vm1599, %v648, 0
    %2247 = vmatprep.subr.bf16.mxu0 0
    %2248 = vmatpush1.bf16.msra.mxu0 %v2245
    %2249 = vmatprep.subr.bf16.mxu0 0
    %2250 = vmatpush1.bf16.msra.mxu0 0
    %2251 = vmatprep.subr.bf16.mxu0 0
    %2252 = vmatpush1.bf16.msra.mxu0 0
    %2253 = vmatprep.subr.bf16.mxu0 0
    %2254 = vmatpush1.bf16.msra.mxu0 0
    %2255 = vmatprep.subr.bf16.mxu0 0
    %2256 = vmatpush1.bf16.msra.mxu0 0
    %2257 = vmatprep.subr.bf16.mxu0 0
    %2258 = vmatpush1.bf16.msra.mxu0 0
    %2259 = vmatprep.subr.bf16.mxu0 0
    %2260 = vmatpush1.bf16.msra.mxu0 0
    %2261 = vmatprep.subr.bf16.mxu0 0
    %2262 = vmatpush1.bf16.msra.mxu0 0
    %2263 = vmatprep.subr.bf16.mxu0 0
    %2264 = vmatpush1.bf16.msra.mxu0 0
    %2265 = vmatprep.subr.bf16.mxu0 0
    %2266 = vmatpush1.bf16.msra.mxu0 0
    %2267 = vmatprep.subr.bf16.mxu0 0
    %2268 = vmatpush1.bf16.msra.mxu0 0
    %2269 = vmatprep.subr.bf16.mxu0 0
    %2270 = vmatpush1.bf16.msra.mxu0 0
    %2271 = vmatprep.subr.bf16.mxu0 0
    %2272 = vmatpush1.bf16.msra.mxu0 0
    %2273 = vmatprep.subr.bf16.mxu0 0
    %2274 = vmatpush1.bf16.msra.mxu0 0
    %2275 = vmatprep.subr.bf16.mxu0 0
    %2276 = vmatpush1.bf16.msra.mxu0 0
    %2277 = vmatprep.subr.bf16.mxu0 0
    %2278 = vmatpush1.bf16.msra.mxu0 0
    %2279 = vmatprep.mubr.bf16.mxu0 0
    %2280 = vmatmul.mubr.bf16.gmra.mrb[0].mxu0 %v2242
    %v2281 = vpop.f32.mrb[0].mxu0
    %v2282 = vadd.f32 0.0, %v2281
    %v2283 = vpop.f32.mrb[0].mxu0
    %v2284 = vpop.f32.mrb[0].mxu0
    %v2285 = vpop.f32.mrb[0].mxu0
    %2286 = vdwg.mxu0
    %v2288 = vsel %vm650, %v1578, 0
    %v2291 = vsel %vm1599, %v649, 0
    %2293 = vmatprep.subr.bf16.mxu0 0
    %2294 = vmatpush1.bf16.msra.mxu0 %v2291
    %2295 = vmatprep.subr.bf16.mxu0 0
    %2296 = vmatpush1.bf16.msra.mxu0 0
    %2297 = vmatprep.subr.bf16.mxu0 0
    %2298 = vmatpush1.bf16.msra.mxu0 0
    %2299 = vmatprep.subr.bf16.mxu0 0
    %2300 = vmatpush1.bf16.msra.mxu0 0
    %2301 = vmatprep.subr.bf16.mxu0 0
    %2302 = vmatpush1.bf16.msra.mxu0 0
    %2303 = vmatprep.subr.bf16.mxu0 0
    %2304 = vmatpush1.bf16.msra.mxu0 0
    %2305 = vmatprep.subr.bf16.mxu0 0
    %2306 = vmatpush1.bf16.msra.mxu0 0
    %2307 = vmatprep.subr.bf16.mxu0 0
    %2308 = vmatpush1.bf16.msra.mxu0 0
    %2309 = vmatprep.subr.bf16.mxu0 0
    %2310 = vmatpush1.bf16.msra.mxu0 0
    %2311 = vmatprep.subr.bf16.mxu0 0
    %2312 = vmatpush1.bf16.msra.mxu0 0
    %2313 = vmatprep.subr.bf16.mxu0 0
    %2314 = vmatpush1.bf16.msra.mxu0 0
    %2315 = vmatprep.subr.bf16.mxu0 0
    %2316 = vmatpush1.bf16.msra.mxu0 0
    %2317 = vmatprep.subr.bf16.mxu0 0
    %2318 = vmatpush1.bf16.msra.mxu0 0
    %2319 = vmatprep.subr.bf16.mxu0 0
    %2320 = vmatpush1.bf16.msra.mxu0 0
    %2321 = vmatprep.subr.bf16.mxu0 0
    %2322 = vmatpush1.bf16.msra.mxu0 0
    %2323 = vmatprep.subr.bf16.mxu0 0
    %2324 = vmatpush1.bf16.msra.mxu0 0
    %2325 = vmatprep.mubr.bf16.mxu0 0
    %2326 = vmatmul.mubr.bf16.gmra.mrb[0].mxu0 %v2288
    %v2327 = vpop.f32.mrb[0].mxu0
    %v2328 = vadd.f32 0.0, %v2327
    %v2329 = vpop.f32.mrb[0].mxu0
    %v2330 = vpop.f32.mrb[0].mxu0
    %v2331 = vpop.f32.mrb[0].mxu0
    %2332 = vdwg.mxu0
    %2337 = vrot.lane.b32.xlu0 %v1684, 8
    %v2338 = vpop.permute.xlu0 %2337
    %2339 = vrot.lane.b32.xlu0 %v1868, 8
    %v2340 = vpop.permute.xlu0 %2339
    %2341 = vrot.lane.b32.xlu0 %v2052, 8
    %v2342 = vpop.permute.xlu0 %2341
    %2343 = vrot.lane.b32.xlu0 %v2236, 8
    %v2344 = vpop.permute.xlu0 %2343
    %2353 = vrot.lane.b32.xlu0 %v1730, 16
    %v2354 = vpop.permute.xlu0 %2353
    %2355 = vrot.lane.b32.xlu0 %v1914, 16
    %v2356 = vpop.permute.xlu0 %2355
    %2357 = vrot.lane.b32.xlu0 %v2098, 16
    %v2358 = vpop.permute.xlu0 %2357
    %2359 = vrot.lane.b32.xlu0 %v2282, 16
    %v2360 = vpop.permute.xlu0 %2359
    %2369 = vrot.lane.b32.xlu0 %v1776, 24
    %v2370 = vpop.permute.xlu0 %2369
    %2371 = vrot.lane.b32.xlu0 %v1960, 24
    %v2372 = vpop.permute.xlu0 %2371
    %2373 = vrot.lane.b32.xlu0 %v2144, 24
    %v2374 = vpop.permute.xlu0 %2373
    %2375 = vrot.lane.b32.xlu0 %v2328, 24
    %v2376 = vpop.permute.xlu0 %2375
    %v2381 = vsel %vm650, %v1638, %v2338
    %v2382 = vsel %vm650, %v1822, %v2340
    %v2383 = vsel %vm650, %v2006, %v2342
    %v2384 = vsel %vm650, %v2190, %v2344
    %vm2385 = vcmask 130048
    %v2386 = vsel %vm2385, %v2381, %v2354
    %v2387 = vsel %vm2385, %v2382, %v2356
    %v2388 = vsel %vm2385, %v2383, %v2358
    %v2389 = vsel %vm2385, %v2384, %v2360
    %vm2390 = vcmask 195584
    %v2391 = vsel %vm2390, %v2386, %v2370
    %v2392 = vsel %vm2390, %v2387, %v2372
    %v2393 = vsel %vm2390, %v2388, %v2374
    %v2394 = vsel %vm2390, %v2389, %v2376
    %v2395 = vpack.c.bf16 %v2392, %v2391
    %v2396 = vpack.c.bf16 %v2394, %v2393
    %v2397 = vld [vmem:[#allocation17] sm:$0xf]
    %v2398 = vld [vmem:[#allocation17 + $0x4] sm:$0xf]
    %v2399 = vld [vmem:[#allocation17 + $0x8] sm:$0xf]
    %v2400 = vld [vmem:[#allocation17 + $0xc] sm:$0xf]
    %v2401 = vld [vmem:[#allocation19] sm:$0x1]
    %v2403 = vlaneseq
    %v2404 = vshrl.u32 %v2403, 7
    %v2405 = vsub.s32 0, %v2404
    %v2406 = vrot.slane %v2401, %v2405
    %v2412 = vunpack.c.l.b16 %v2397
    %v2413 = vunpack.c.l.b16 %v2398
    %v2414 = vunpack.c.l.b16 %v2399
    %v2415 = vunpack.c.l.b16 %v2400
    %v2416 = vpack.c.b16 %v2413, %v2412
    %v2417 = vpack.c.b16 %v2415, %v2414
    %v2421 = vsel %vm250, %v2395, 0
    %v2424 = vsel %vm250, %v2396, 0
    %2426 = vmatprep.subr.bf16.mxu0 0
    %2427 = vmatpush1.bf16.msra.mxu0 %v2416
    %2428 = vmatprep.subr.bf16.mxu0 0
    %2429 = vmatpush1.bf16.msra.mxu0 %v2417
    %2430 = vmatprep.subr.bf16.mxu0 0
    %2431 = vmatpush1.bf16.msra.mxu0 0
    %2432 = vmatprep.subr.bf16.mxu0 0
    %2433 = vmatpush1.bf16.msra.mxu0 0
    %2434 = vmatprep.subr.bf16.mxu0 0
    %2435 = vmatpush1.bf16.msra.mxu0 0
    %2436 = vmatprep.subr.bf16.mxu0 0
    %2437 = vmatpush1.bf16.msra.mxu0 0
    %2438 = vmatprep.subr.bf16.mxu0 0
    %2439 = vmatpush1.bf16.msra.mxu0 0
    %2440 = vmatprep.subr.bf16.mxu0 0
    %2441 = vmatpush1.bf16.msra.mxu0 0
    %2442 = vmatprep.subr.bf16.mxu0 0
    %2443 = vmatpush1.bf16.msra.mxu0 0
    %2444 = vmatprep.subr.bf16.mxu0 0
    %2445 = vmatpush1.bf16.msra.mxu0 0
    %2446 = vmatprep.subr.bf16.mxu0 0
    %2447 = vmatpush1.bf16.msra.mxu0 0
    %2448 = vmatprep.subr.bf16.mxu0 0
    %2449 = vmatpush1.bf16.msra.mxu0 0
    %2450 = vmatprep.subr.bf16.mxu0 0
    %2451 = vmatpush1.bf16.msra.mxu0 0
    %2452 = vmatprep.subr.bf16.mxu0 0
    %2453 = vmatpush1.bf16.msra.mxu0 0
    %2454 = vmatprep.subr.bf16.mxu0 0
    %2455 = vmatpush1.bf16.msra.mxu0 0
    %2456 = vmatprep.subr.bf16.mxu0 0
    %2457 = vmatpush1.bf16.msra.mxu0 0
    %2458 = vmatprep.mubr.bf16.mxu0 0
    %2459 = vmatmul.mubr.bf16.gmra.mrb[0].mxu0 %v2421
    %v2460 = vpop.f32.mrb[0].mxu0
    %v2461 = vadd.f32 %v2406, %v2460
    %v2462 = vpop.f32.mrb[0].mxu0
    %v2463 = vpop.f32.mrb[0].mxu0
    %v2464 = vadd.f32 %v2406, %v2463
    %v2465 = vpop.f32.mrb[0].mxu0
    %2466 = vmatprep.mubr.bf16.mxu0 0
    %2467 = vmatmul.mubr.bf16.gmra.mrb[0].mxu0 %v2424
    %v2468 = vpop.f32.mrb[0].mxu0
    %v2469 = vadd.f32 %v2406, %v2468
    %v2470 = vpop.f32.mrb[0].mxu0
    %v2471 = vpop.f32.mrb[0].mxu0
    %v2472 = vadd.f32 %v2406, %v2471
    %v2473 = vpop.f32.mrb[0].mxu0
    %2474 = vdwg.mxu0
    %v2475 = vadd.f32 %v213, %v2461
    %v2476 = vadd.f32 %v214, %v2464
    %v2477 = vadd.f32 %v215, %v2469
    %v2478 = vadd.f32 %v216, %v2472
    %v2479 = vsel %vm250, %v2475, 0.0
    %2480 = vadd.xlane.f32.xlu0 %v2479
    %v2481 = vpop.xlane.xlu0 %2480
    %v2482 = vsel %vm250, %v2476, 0.0
    %2483 = vadd.xlane.f32.xlu0 %v2482
    %v2484 = vpop.xlane.xlu0 %2483
    %v2485 = vsel %vm250, %v2477, 0.0
    %2486 = vadd.xlane.f32.xlu0 %v2485
    %v2487 = vpop.xlane.xlu0 %2486
    %v2488 = vsel %vm250, %v2478, 0.0
    %2489 = vadd.xlane.f32.xlu0 %v2488
    %v2490 = vpop.xlane.xlu0 %2489
    %v2491 = vrcp.pop 32.0
    %v2492 = vmul.f32 %v2481, %v2491
    %v2493 = vmul.f32 %v2484, %v2491
    %v2494 = vmul.f32 %v2487, %v2491
    %v2495 = vmul.f32 %v2490, %v2491
    %v2496 = vsub.f32 %v2475, %v2492
    %v2497 = vsub.f32 %v2476, %v2493
    %v2498 = vsub.f32 %v2477, %v2494
    %v2499 = vsub.f32 %v2478, %v2495
    %v2500 = vmul.f32 %v2496, %v2496
    %v2501 = vmul.f32 %v2497, %v2497
    %v2502 = vmul.f32 %v2498, %v2498
    %v2503 = vmul.f32 %v2499, %v2499
    %v2504 = vsel %vm250, %v2500, 0.0
    %2505 = vadd.xlane.f32.xlu0 %v2504
    %v2506 = vpop.xlane.xlu0 %2505
    %v2507 = vsel %vm250, %v2501, 0.0
    %2508 = vadd.xlane.f32.xlu0 %v2507
    %v2509 = vpop.xlane.xlu0 %2508
    %v2510 = vsel %vm250, %v2502, 0.0
    %2511 = vadd.xlane.f32.xlu0 %v2510
    %v2512 = vpop.xlane.xlu0 %2511
    %v2513 = vsel %vm250, %v2503, 0.0
    %2514 = vadd.xlane.f32.xlu0 %v2513
    %v2515 = vpop.xlane.xlu0 %2514
    %v2516 = vmul.f32 %v2506, %v2491
    %v2517 = vmul.f32 %v2509, %v2491
    %v2518 = vmul.f32 %v2512, %v2491
    %v2519 = vmul.f32 %v2515, %v2491
    %v2520 = vadd.f32 %v2516, 1e-05
    %v2521 = vadd.f32 %v2517, 1e-05
    %v2522 = vadd.f32 %v2518, 1e-05
    %v2523 = vadd.f32 %v2519, 1e-05
    %v2524 = vrsqrt.pop %v2520
    %v2525 = vrsqrt.pop %v2521
    %v2526 = vrsqrt.pop %v2522
    %v2527 = vrsqrt.pop %v2523
    %v2528 = vmul.f32 %v2496, %v2524
    %v2529 = vmul.f32 %v2497, %v2525
    %v2530 = vmul.f32 %v2498, %v2526
    %v2531 = vmul.f32 %v2499, %v2527
    %v2532 = vld [vmem:[#allocation20] sm:$0x1]
    %v2534 = vlaneseq
    %v2535 = vshrl.u32 %v2534, 7
    %v2536 = vsub.s32 0, %v2535
    %v2537 = vrot.slane %v2532, %v2536
    %v2539 = vmul.f32 %v2528, %v2537
    %v2540 = vmul.f32 %v2529, %v2537
    %v2541 = vmul.f32 %v2530, %v2537
    %v2542 = vmul.f32 %v2531, %v2537
    %v2543 = vld [vmem:[#allocation22] sm:$0x1]
    %v2545 = vlaneseq
    %v2546 = vshrl.u32 %v2545, 7
    %v2547 = vsub.s32 0, %v2546
    %v2548 = vrot.slane %v2543, %v2547
    %v2550 = vadd.f32 %v2539, %v2548
    %v2551 = vadd.f32 %v2540, %v2548
    %v2552 = vadd.f32 %v2541, %v2548
    %v2553 = vadd.f32 %v2542, %v2548
    %2554 = vst.msk [vmem:[#allocation23] sm:$0xff] %vm250, %v2550
    %2555 = vst.msk [vmem:[#allocation23 + $0x8] sm:$0xff] %vm250, %v2551
    %2556 = vst.msk [vmem:[#allocation23 + $0x10] sm:$0xff] %vm250, %v2552
    %2557 = vst.msk [vmem:[#allocation23 + $0x18] sm:$0xff] %vm250, %v2553
    // Predicated region
    $region106: #{tpu_custom_call.1} parent=1 // pred_check
      _
    $region107: #{tpu_custom_call.1} parent=1 // pred_check_branch
      %2559 = sbr.rel (0) target = $region109
    $region108: #{tpu_custom_call.1} parent=1 // pred_region
      %s2561 = ssub.s32 512, 512
      %2562 = vsyncadd [#allocation4], %s2561
      %s2563 = sshll.u32 [#allocation23], 4
      %s2564 = int_to_ptr.vmem [resolvable:$true] %s2563
      %2569 = dma.vmem_to_hbm [thread:$0]  %s2564, 512, %s13, [#allocation4], 128, 128, 8
    $region109: #{tpu_custom_call.1} parent=1 // pred_fallthru
      _
    // Predicated region
    $region110: #{tpu_custom_call.1} parent=1 // pred_check
      _
    $region111: #{tpu_custom_call.1} parent=1 // pred_check_branch
      %2571 = sbr.rel (0) target = $region113
    $region112: #{tpu_custom_call.1} parent=1 // pred_region
      %s2573 = ssub.s32 1024, 1024
      %2574 = vsyncadd [#allocation25], %s2573
      %s2575 = sshll.u32 [#allocation24], 4
      %s2576 = int_to_ptr.vmem [resolvable:$true] %s2575
      %2581 = dma.vmem_to_hbm [thread:$0]  %s2576, 1024, %s14, [#allocation25], 64, 64, 4
    $region113: #{tpu_custom_call.1} parent=1 // pred_fallthru
      _
    // Predicated region
    $region114: #{tpu_custom_call.1} parent=1 // pred_check
      _
    $region115: #{tpu_custom_call.1} parent=1 // pred_check_branch
      %2583 = sbr.rel (0) target = $region117
    $region116: #{tpu_custom_call.1} parent=1 // pred_region
      %2584 = dma.done [#allocation4], 512
    $region117: #{tpu_custom_call.1} parent=1 // pred_fallthru
      _
    // Predicated region
    $region118: #{tpu_custom_call.1} parent=1 // pred_check
      _
    $region119: #{tpu_custom_call.1} parent=1 // pred_check_branch
      %2586 = sbr.rel (0) target = $region121
    $region120: #{tpu_custom_call.1} parent=1 // pred_region
      %2587 = dma.done [#allocation25], 1024
    $region121: #{tpu_custom_call.1} parent=1 // pred_fallthru
      _
    %2588 = vsyncpa [#allocation3], 1
    %2589 = vsyncpa [#allocation6], 1
    %2590 = vsyncpa [#allocation9], 1
    %2591 = vsyncpa [#allocation12], 1
    %2592 = vsyncpa [#allocation15], 1
    %2593 = vsyncpa [#allocation18], 1
    %2594 = vsyncpa [#allocation21], 1
    %2595 = vsyncpa [#allocation4], 1
    %2596 = vsyncpa [#allocation25], 1

</llo_original>
